<compile_context>
chip_gen: v5e
topology: v5e:2x2
jax: 0.10.0
libtpu: 0.0.40
codegen_flags: <defaults>
</compile_context>

<pallas_src>
import jax
import jax.numpy as jnp
from jax.experimental import pallas as pl
from jax.experimental.pallas import tpu as pltpu


# --------------------------------------------------------------------------
# Small helpers
# --------------------------------------------------------------------------
def _round_up(x, m):
    return ((x + m - 1) // m) * m


def _cdiv(a, b):
    return -(-a // b)


def _default_batch_block():
    # 512-row blocks on 128-MiB-VMEM chips (v5e/v6e), 256 on v7x (64 MiB).
    try:
        cap = pltpu.get_tpu_info().vmem_capacity_bytes
        return 512 if cap >= (96 << 20) else 256
    except Exception:
        return 256


# --------------------------------------------------------------------------
# Kernel
# --------------------------------------------------------------------------
def _hybrid_kernel(a_ref, v_ref, wa1_ref, wv1_ref, w2_ref, bias_ref,
                   out_ref, h_ref):
    hidden = wa1_ref.shape[1]          # fused hidden width (512)
    c_pad = out_ref.shape[-1]          # lane-padded class width (>= 128)
    w_dtype = w2_ref.dtype

    b1a = bias_ref[0:1, :hidden]       # f32 bias rows
    b1v = bias_ref[1:2, :hidden]
    b_out = bias_ref[2:3, :c_pad]

    # Layer 1 (mean-pool + Linear + BN folded into the weights) + ReLU.
    # bf16 operands, f32 accumulation on the MXU.
    h_a = jnp.maximum(
        jnp.dot(a_ref[...], wa1_ref[...], preferred_element_type=jnp.float32)
        + b1a, 0.0)
    h_v = jnp.maximum(
        jnp.dot(v_ref[...], wv1_ref[...], preferred_element_type=jnp.float32)
        + b1v, 0.0)

    # Pack both modalities into one (bb, 2*hidden) slab so layer 2 is a single
    # K=1024 matmul (predictor heads + embed@output-layer + /3 folded offline).
    h_ref[:, :hidden] = h_a.astype(w_dtype)
    h_ref[:, hidden:] = h_v.astype(w_dtype)

    out = jnp.dot(h_ref[...], w2_ref[...],
                  preferred_element_type=jnp.float32) + b_out
    out_ref[...] = out.astype(out_ref.dtype)


# --------------------------------------------------------------------------
# Wrapper
# --------------------------------------------------------------------------
def hybrid_baseline_forward(audio_feat, video_feat, fused, *, batch_block=None):
    """audio_feat: (B, Ta, A), video_feat: (B, Tv, V). Returns (B, num_classes)."""
    B, Ta, A = audio_feat.shape
    _, Tv, V = video_feat.shape
    num_classes = fused["num_classes"]
    c_pad = fused["w2"].shape[-1]
    hidden2 = fused["wa1"].shape[1]
    compute_dtype = fused["wa1"].dtype

    if batch_block is None:
        batch_block = _default_batch_block()

    # Temporal pooling: folded into the matmul K dim when the T-tiled W1 is
    # small, otherwise done here as a cheap XLA reduce (keeps W1 at (D, 512)).
    a_in = (audio_feat.reshape(B, Ta * A) if fused["fold_time_audio"]
            else audio_feat.mean(axis=1))
    v_in = (video_feat.reshape(B, Tv * V) if fused["fold_time_video"]
            else video_feat.mean(axis=1))
    a_in = a_in.astype(compute_dtype)   # bf16 stream from HBM
    v_in = v_in.astype(compute_dtype)
    ka, kv = a_in.shape[1], v_in.shape[1]
    assert ka == fused["wa1"].shape[0] and kv == fused["wv1"].shape[0]

    # Grid shaping: at least 2 steps whenever the batch allows it (megacore
    # sharding on v7x + pipelining); pad to a whole number of blocks so an
    # awkward remainder never collapses the pipeline into one giant block.
    b_pad8 = _round_up(B, 8)
    if b_pad8 >= 16:
        bb = min(batch_block, _round_up(_cdiv(b_pad8, 2), 8))
    else:
        bb = b_pad8
    num_blocks = _cdiv(b_pad8, bb)
    b_total = num_blocks * bb
    if b_total != B:
        a_in = jnp.pad(a_in, ((0, b_total - B), (0, 0)))
        v_in = jnp.pad(v_in, ((0, b_total - B), (0, 0)))

    # Explicit scoped-VMEM budget (double-buffered activations + output,
    # single-buffered weights, scratch) with headroom.
    act_bytes = jnp.dtype(compute_dtype).itemsize
    w_elems = fused["wa1"].size + fused["wv1"].size + fused["w2"].size
    vmem_need = (2 * bb * (ka + kv) * act_bytes
                 + w_elems * act_bytes
                 + fused["bias"].size * 4
                 + 2 * bb * c_pad * 4
                 + bb * 2 * hidden2 * act_bytes)
    vmem_limit = int(min(max(vmem_need + (4 << 20), 16 << 20), 100 << 20))

    flops = 2 * b_total * ((ka + kv) * hidden2 + 2 * hidden2 * c_pad)
    bytes_accessed = int(b_total * (ka + kv) * act_bytes
                         + w_elems * act_bytes
                         + fused["bias"].size * 4
                         + b_total * c_pad * 4)

    def const_spec(arr):
        # Constant index_map across the grid -> single-buffer (no 2nd copy).
        nd = arr.ndim
        return pl.BlockSpec(arr.shape, lambda i, _nd=nd: (0,) * _nd,
                            pipeline_mode=pl.Buffered(1))

    out = pl.pallas_call(
        _hybrid_kernel,
        out_shape=jax.ShapeDtypeStruct((b_total, c_pad), jnp.float32),
        grid=(num_blocks,),
        in_specs=[
            pl.BlockSpec((bb, ka), lambda i: (i, 0)),
            pl.BlockSpec((bb, kv), lambda i: (i, 0)),
            const_spec(fused["wa1"]),
            const_spec(fused["wv1"]),
            const_spec(fused["w2"]),
            const_spec(fused["bias"]),
        ],
        out_specs=pl.BlockSpec((bb, c_pad), lambda i: (i, 0)),
        scratch_shapes=[pltpu.VMEM((bb, 2 * hidden2), compute_dtype)],
        compiler_params=pltpu.CompilerParams(
            dimension_semantics=("parallel",),
            vmem_limit_bytes=vmem_limit),
        cost_estimate=pl.CostEstimate(flops=flops, transcendentals=0,
                                      bytes_accessed=bytes_accessed),
    )(a_in, v_in, fused["wa1"], fused["wv1"], fused["w2"], fused["bias"])

    return out[:B, :num_classes]


# --------------------------------------------------------------------------
# Parameter construction (PyTorch-layout raw params) and offline fusion
# --------------------------------------------------------------------------
def make_raw_params(key, audio_emb_dim, video_emb_dim, num_classes,
                    hidden=256, embed=128):
    def branch(k, in_dim, out_dim):
        k = jax.random.split(k, 8)
        return dict(
            w1=jax.random.normal(k[0], (in_dim, hidden), jnp.float32) * 0.05,
            b1=jax.random.normal(k[1], (hidden,), jnp.float32) * 0.05,
            gamma=1.0 + 0.1 * jax.random.normal(k[2], (hidden,), jnp.float32),
            beta=0.1 * jax.random.normal(k[3], (hidden,), jnp.float32),
            mean=0.1 * jax.random.normal(k[4], (hidden,), jnp.float32),
            var=jnp.abs(jax.random.normal(k[5], (hidden,), jnp.float32)) + 0.5,
            w2=jax.random.normal(k[6], (hidden, out_dim), jnp.float32) * 0.05,
            b2=jax.random.normal(k[7], (out_dim,), jnp.float32) * 0.05,
        )

    ks = jax.random.split(key, 6)
    return dict(
        audio_predictor=branch(ks[0], audio_emb_dim, num_classes),
        video_predictor=branch(ks[1], video_emb_dim, num_classes),
        audio_embed=branch(ks[2], audio_emb_dim, embed),
        video_embed=branch(ks[3], video_emb_dim, embed),
        wo=jax.random.normal(ks[4], (2 * embed, num_classes), jnp.float32) * 0.05,
        bo=jax.random.normal(ks[5], (num_classes,), jnp.float32) * 0.05,
    )


def fuse_params(raw, t_audio, t_video, num_classes, eps=1e-5,
                dtype=jnp.bfloat16, max_tiled_w1_bytes=4 << 20):
    """Fold BN/bias/mean-pool/output-layer//3 into 3 weight mats + 1 f32 bias slab."""
    def fold_bn(br):
        scale = br["gamma"] / jnp.sqrt(br["var"] + eps)
        shift = br["beta"] - br["mean"] * scale
        return br["w1"] * scale[None, :], br["b1"] * scale + shift

    w1pa, b1pa = fold_bn(raw["audio_predictor"])
    w1ea, b1ea = fold_bn(raw["audio_embed"])
    w1pv, b1pv = fold_bn(raw["video_predictor"])
    w1ev, b1ev = fold_bn(raw["video_embed"])

    # Fuse predictor + embed first layers per modality -> (D, 512).
    wa1 = jnp.concatenate([w1pa, w1ea], axis=1)
    ba1 = jnp.concatenate([b1pa, b1ea], axis=0)
    wv1 = jnp.concatenate([w1pv, w1ev], axis=1)
    bv1 = jnp.concatenate([b1pv, b1ev], axis=0)
    hidden2 = ba1.shape[0]

    # Fold the temporal mean into K only when the T-tiled weight stays small;
    # otherwise the wrapper does the mean and W1 stays (D, 512).
    itemsize = jnp.dtype(dtype).itemsize
    fold_a = t_audio * wa1.shape[0] * hidden2 * itemsize <= max_tiled_w1_bytes
    fold_v = t_video * wv1.shape[0] * hidden2 * itemsize <= max_tiled_w1_bytes
    if fold_a:
        wa1 = jnp.tile(wa1, (t_audio, 1)) / t_audio
    if fold_v:
        wv1 = jnp.tile(wv1, (t_video, 1)) / t_video

    # Fused second layers: [predictor W2 ; embed W2 @ output-half], with /3,
    # concatenated across modalities into one (2*hidden2, C) matrix.
    embed = raw["wo"].shape[0] // 2
    wo_a, wo_v = raw["wo"][:embed], raw["wo"][embed:]
    wa2 = jnp.concatenate(
        [raw["audio_predictor"]["w2"], raw["audio_embed"]["w2"] @ wo_a],
        axis=0) / 3.0
    wv2 = jnp.concatenate(
        [raw["video_predictor"]["w2"], raw["video_embed"]["w2"] @ wo_v],
        axis=0) / 3.0
    b_out = (raw["audio_predictor"]["b2"] + raw["video_predictor"]["b2"]
             + raw["audio_embed"]["b2"] @ wo_a
             + raw["video_embed"]["b2"] @ wo_v
             + raw["bo"]) / 3.0

    # Lane-dense output padding.
    c_pad = _round_up(num_classes, 128)
    w2 = jnp.concatenate([wa2, wv2], axis=0)
    w2 = jnp.pad(w2, ((0, 0), (0, c_pad - num_classes)))
    b_out = jnp.pad(b_out, (0, c_pad - num_classes))

    # Pack every bias into one f32 (8, slab_w) slab (rows 0/1/2 used).
    slab_w = max(hidden2, c_pad)
    bias = jnp.zeros((8, slab_w), jnp.float32)
    bias = bias.at[0, :hidden2].set(ba1)
    bias = bias.at[1, :hidden2].set(bv1)
    bias = bias.at[2, :c_pad].set(b_out)

    return dict(
        wa1=wa1.astype(dtype), wv1=wv1.astype(dtype), w2=w2.astype(dtype),
        bias=bias, num_classes=num_classes,
        fold_time_audio=bool(fold_a), fold_time_video=bool(fold_v),
    )


# --------------------------------------------------------------------------
# Pure-JAX reference mirroring the PyTorch forward (eval mode)
# --------------------------------------------------------------------------
def reference_forward(audio_feat, video_feat, raw, eps=1e-5):
    def branch(x, p):
        h = x @ p["w1"] + p["b1"]
        h = (h - p["mean"]) / jnp.sqrt(p["var"] + eps) * p["gamma"] + p["beta"]
        h = jnp.maximum(h, 0.0)                 # Dropout = identity in eval
        return h @ p["w2"] + p["b2"]

    a_emb = audio_feat.mean(axis=1)
    v_emb = video_feat.mean(axis=1)
    a_pred = branch(a_emb, raw["audio_predictor"])
    v_pred = branch(v_emb, raw["video_predictor"])
    a_e = branch(a_emb, raw["audio_embed"])
    v_e = branch(v_emb, raw["video_embed"])
    fused = jnp.concatenate([a_e, v_e], axis=1)
    f_pred = fused @ raw["wo"] + raw["bo"]
    return (a_pred + v_pred + f_pred) / 3.0


if __name__ == "__main__":
    B, T_audio, T_video = 20, 8, 8        # exercises multi-block grid + padding
    audio_emb_dim, video_emb_dim, num_classes = 64, 128, 16

    key = jax.random.PRNGKey(0)
    k_a, k_v, k_p = jax.random.split(key, 3)
    audio_feat = jax.random.normal(k_a, (B, T_audio, audio_emb_dim), jnp.float32)
    video_feat = jax.random.normal(k_v, (B, T_video, video_emb_dim), jnp.float32)

    raw = make_raw_params(k_p, audio_emb_dim, video_emb_dim, num_classes)
    fused = fuse_params(raw, T_audio, T_video, num_classes, dtype=jnp.bfloat16)

    # jit the whole forward so the bf16 casts / reshapes fuse with the kernel.
    fwd = jax.jit(lambda a, v: hybrid_baseline_forward(a, v, fused))
    out = jax.block_until_ready(fwd(audio_feat, video_feat))

    ref = reference_forward(audio_feat, video_feat, raw)
    assert out.shape == (B, num_classes)
    # bf16 weights/activations (f32 accumulation): loosened tolerance.
    assert jnp.allclose(out, ref, atol=3e-2, rtol=3e-2), (
        "mismatch vs reference: max abs err "
        f"{float(jnp.max(jnp.abs(out - ref)))}")

    print("KERNEL_OK")
</pallas_src>

<mosaic_0001>
module attributes {stable_mosaic.version = 11 : i64} {
  func.func @_hybrid_kernel(%arg0: i32, %arg1: memref<16x512xbf16, #tpu.memory_space<vmem>>, %arg2: memref<16x1024xbf16, #tpu.memory_space<vmem>>, %arg3: memref<512x512xbf16, #tpu.memory_space<vmem>>, %arg4: memref<1024x512xbf16, #tpu.memory_space<vmem>>, %arg5: memref<1024x128xbf16, #tpu.memory_space<vmem>>, %arg6: memref<8x512xf32, #tpu.memory_space<vmem>>, %arg7: memref<16x128xf32, #tpu.memory_space<vmem>>, %arg8: memref<16x1024xbf16, #tpu.memory_space<vmem>>) attributes {dimension_semantics = [#tpu.dimension_semantics<parallel>], iteration_bounds = array<i64: 2>, scalar_prefetch = 0 : i64, scratch_operands = 1 : i64, tpu.core_type = #tpu.core_type<tc>, window_params = [{transform_indices = @transform_0, window_bounds = array<i64: 16, 512>}, {transform_indices = @transform_1, window_bounds = array<i64: 16, 1024>}, {pipeline_mode = #tpu.pipeline_mode<synchronous>, transform_indices = @transform_2, window_bounds = array<i64: 512, 512>}, {pipeline_mode = #tpu.pipeline_mode<synchronous>, transform_indices = @transform_3, window_bounds = array<i64: 1024, 512>}, {pipeline_mode = #tpu.pipeline_mode<synchronous>, transform_indices = @transform_4, window_bounds = array<i64: 1024, 128>}, {pipeline_mode = #tpu.pipeline_mode<synchronous>, transform_indices = @transform_5, window_bounds = array<i64: 8, 512>}, {transform_indices = @transform_6, window_bounds = array<i64: 16, 128>}]} {
    %c0 = arith.constant 0 : index
    %c0_0 = arith.constant 0 : index
    %0 = vector.load %arg6[%c0, %c0_0] : memref<8x512xf32, #tpu.memory_space<vmem>>, vector<1x512xf32>
    %c1 = arith.constant 1 : index
    %c0_1 = arith.constant 0 : index
    %1 = vector.load %arg6[%c1, %c0_1] : memref<8x512xf32, #tpu.memory_space<vmem>>, vector<1x512xf32>
    %c2 = arith.constant 2 : index
    %c0_2 = arith.constant 0 : index
    %2 = vector.load %arg6[%c2, %c0_2] : memref<8x512xf32, #tpu.memory_space<vmem>>, vector<1x128xf32>
    %c0_3 = arith.constant 0 : index
    %c0_4 = arith.constant 0 : index
    %3 = vector.load %arg1[%c0_3, %c0_4] : memref<16x512xbf16, #tpu.memory_space<vmem>>, vector<16x512xbf16>
    %c0_5 = arith.constant 0 : index
    %c0_6 = arith.constant 0 : index
    %4 = vector.load %arg3[%c0_5, %c0_6] : memref<512x512xbf16, #tpu.memory_space<vmem>>, vector<512x512xbf16>
    %cst = arith.constant dense<0.000000e+00> : vector<16x512xf32>
    %5 = tpu.matmul %3, %4, %cst {dimension_numbers = #tpu.dot_dimension_numbers<[1], [0], [0], [1], [0, 0, 1, 1], [], []>} : vector<16x512xbf16>, vector<512x512xbf16>, vector<16x512xf32> -> vector<16x512xf32>
    %6 = vector.broadcast %0 : vector<1x512xf32> to vector<16x512xf32>
    %7 = arith.addf %5, %6 : vector<16x512xf32>
    %cst_7 = arith.constant 0.000000e+00 : f32
    %8 = vector.broadcast %cst_7 : f32 to vector<16x512xf32>
    %9 = arith.maximumf %7, %8 : vector<16x512xf32>
    %c0_8 = arith.constant 0 : index
    %c0_9 = arith.constant 0 : index
    %10 = vector.load %arg2[%c0_8, %c0_9] : memref<16x1024xbf16, #tpu.memory_space<vmem>>, vector<16x1024xbf16>
    %c0_10 = arith.constant 0 : index
    %c0_11 = arith.constant 0 : index
    %11 = vector.load %arg4[%c0_10, %c0_11] : memref<1024x512xbf16, #tpu.memory_space<vmem>>, vector<1024x512xbf16>
    %cst_12 = arith.constant dense<0.000000e+00> : vector<16x512xf32>
    %12 = tpu.matmul %10, %11, %cst_12 {dimension_numbers = #tpu.dot_dimension_numbers<[1], [0], [0], [1], [0, 0, 1, 1], [], []>} : vector<16x1024xbf16>, vector<1024x512xbf16>, vector<16x512xf32> -> vector<16x512xf32>
    %13 = vector.broadcast %1 : vector<1x512xf32> to vector<16x512xf32>
    %14 = arith.addf %12, %13 : vector<16x512xf32>
    %cst_13 = arith.constant 0.000000e+00 : f32
    %15 = vector.broadcast %cst_13 : f32 to vector<16x512xf32>
    %16 = arith.maximumf %14, %15 : vector<16x512xf32>
    %17 = arith.truncf %9 : vector<16x512xf32> to vector<16x512xbf16>
    %c0_14 = arith.constant 0 : index
    %c0_15 = arith.constant 0 : index
    %18 = vector.load %arg8[%c0_14, %c0_15] : memref<16x1024xbf16, #tpu.memory_space<vmem>>, vector<16x512xbf16>
    tpu.vector_store %arg8[%c0_14, %c0_15], %17 {strides = array<i32>} : memref<16x1024xbf16, #tpu.memory_space<vmem>>, vector<16x512xbf16>,
    %19 = arith.truncf %16 : vector<16x512xf32> to vector<16x512xbf16>
    %c0_16 = arith.constant 0 : index
    %c512 = arith.constant 512 : index
    %20 = vector.load %arg8[%c0_16, %c512] : memref<16x1024xbf16, #tpu.memory_space<vmem>>, vector<16x512xbf16>
    tpu.vector_store %arg8[%c0_16, %c512], %19 {strides = array<i32>} : memref<16x1024xbf16, #tpu.memory_space<vmem>>, vector<16x512xbf16>,
    %c0_17 = arith.constant 0 : index
    %c0_18 = arith.constant 0 : index
    %21 = vector.load %arg8[%c0_17, %c0_18] : memref<16x1024xbf16, #tpu.memory_space<vmem>>, vector<16x1024xbf16>
    %c0_19 = arith.constant 0 : index
    %c0_20 = arith.constant 0 : index
    %22 = vector.load %arg5[%c0_19, %c0_20] : memref<1024x128xbf16, #tpu.memory_space<vmem>>, vector<1024x128xbf16>
    %cst_21 = arith.constant dense<0.000000e+00> : vector<16x128xf32>
    %23 = tpu.matmul %21, %22, %cst_21 {dimension_numbers = #tpu.dot_dimension_numbers<[1], [0], [0], [1], [0, 0, 1, 1], [], []>} : vector<16x1024xbf16>, vector<1024x128xbf16>, vector<16x128xf32> -> vector<16x128xf32>
    %24 = vector.broadcast %2 : vector<1x128xf32> to vector<16x128xf32>
    %25 = arith.addf %23, %24 : vector<16x128xf32>
    %c0_22 = arith.constant 0 : index
    %c0_23 = arith.constant 0 : index
    %26 = vector.load %arg7[%c0_22, %c0_23] : memref<16x128xf32, #tpu.memory_space<vmem>>, vector<16x128xf32>
    tpu.vector_store %arg7[%c0_22, %c0_23], %25 {strides = array<i32>} : memref<16x128xf32, #tpu.memory_space<vmem>>, vector<16x128xf32>,
    return
  }
  func.func @transform_0(%arg0: i32) -> (i32, i32) {
    %c0_i32 = arith.constant 0 : i32
    %c0_i32_0 = arith.constant 0 : i32
    return %arg0, %c0_i32 : i32, i32
  }
  func.func @transform_1(%arg0: i32) -> (i32, i32) {
    %c0_i32 = arith.constant 0 : i32
    %c0_i32_0 = arith.constant 0 : i32
    return %arg0, %c0_i32 : i32, i32
  }
  func.func @transform_2(%arg0: i32) -> (i32, i32) {
    %c0_i32 = arith.constant 0 : i32
    %c0_i32_0 = arith.constant 0 : i32
    %c0_i32_1 = arith.constant 0 : i32
    return %c0_i32, %c0_i32_0 : i32, i32
  }
  func.func @transform_3(%arg0: i32) -> (i32, i32) {
    %c0_i32 = arith.constant 0 : i32
    %c0_i32_0 = arith.constant 0 : i32
    %c0_i32_1 = arith.constant 0 : i32
    return %c0_i32, %c0_i32_0 : i32, i32
  }
  func.func @transform_4(%arg0: i32) -> (i32, i32) {
    %c0_i32 = arith.constant 0 : i32
    %c0_i32_0 = arith.constant 0 : i32
    %c0_i32_1 = arith.constant 0 : i32
    return %c0_i32, %c0_i32_0 : i32, i32
  }
  func.func @transform_5(%arg0: i32) -> (i32, i32) {
    %c0_i32 = arith.constant 0 : i32
    %c0_i32_0 = arith.constant 0 : i32
    %c0_i32_1 = arith.constant 0 : i32
    return %c0_i32, %c0_i32_0 : i32, i32
  }
  func.func @transform_6(%arg0: i32) -> (i32, i32) {
    %c0_i32 = arith.constant 0 : i32
    %c0_i32_0 = arith.constant 0 : i32
    return %arg0, %c0_i32 : i32, i32
  }
}

</mosaic_0001>

<llo_original>
// kernel: _lambda_.1
$region0: #{_lambda_.1}
  #allocation0 [shape = 'u32[]', space=smem, size = 0x4, offset = 0x4, fixed_abs, tag = 'smem constant byte address 0x4 - core index']
  #allocation1 [shape = 'u32[72,128]{1,0:T(1,128)}', space=vmem, size = 0x9000, scoped, tag = 'internal scratch']
  #allocation2 [shape = 'bf16[16,1024]{1,0:T(8,128)(2,1)}', space=vmem, size = 0x8000, scoped, tag = 'scratch operand']
  %s0 = inlined_call_operand.vmem [shape: bf16[32,512], index: 0, kind: input, shape index: {}]
  %s1 = inlined_call_operand.vmem [shape: bf16[32,1024], index: 1, kind: input, shape index: {}]
  %s2 = inlined_call_operand.vmem [shape: bf16[512,512], index: 2, kind: input, shape index: {}]
  %s3 = inlined_call_operand.hbm [shape: bf16[1024,512], index: 3, kind: input, shape index: {}]
  %s4 = inlined_call_operand.hbm [shape: bf16[1024,128], index: 4, kind: input, shape index: {}]
  %s5 = inlined_call_operand.vmem [shape: f32[8,512], index: 5, kind: input, shape index: {}]
  %s6 = inlined_call_operand.vmem [shape: f32[32,128], index: 6, kind: output, shape index: {}]
  %s7 = sld [smem:[#allocation0]]
  $region65: #{_lambda_.1} parent=0
    _
  %s9 = ssub.s32 1, %s7
  %s10 = scalar_select 0, %s9, %s7
  $region1: #{_lambda_.1} parent=0
    #allocation3 [shape = 'u8[1048576]{0}', space=vmem, size = 0x100000, scoped, tag = 'input window, operand 3, single buffered']
    #allocation4 [shape = 's32[2]{0}', space=sflag, size = 0x8, scoped, tag = 'scoped memory for _lambda_.1']
    #allocation5 [shape = 'u8[262144]{0}', space=vmem, size = 0x40000, scoped, tag = 'input window, operand 4, single buffered']
    #allocation6 [shape = 's32[1]{0}', space=sflag, size = 0x4, scoped, tag = 'scoped memory for _lambda_.1']
    %11 = vsyncpa [#allocation4], 0
    %12 = vsyncpa [#allocation6], 0
    loop: start=0, step=1, limit=4
    $region2: #{_lambda_.1} parent=1 // loop_pre_header
      _
    $region3: #{_lambda_.1} parent=1 // loop_header
      %s14 = sphi 0, %s18
      %p15 = scmp.ge.s32.totalorder %s14, 4
      %s24 = sphi 0, %s26
      %s27 = sphi 0, %s24
      %s28 = sphi 0, %s27
      %s44 = sphi 0, %s28
      %s50 = sphi 0, %s52
      %s53 = sphi 0, %s50
      %s54 = sphi 0, %s53
      %s70 = sphi 0, %s54
      %s74 = sphi 0, %s74
      %s76 = sphi 0, %s74
      %s77 = sphi 0, %s76
      %s91 = sphi 0, %s77
      %s95 = sphi 0, %s95
      %s97 = sphi 0, %s95
      %s98 = sphi 0, %s97
      %s112 = sphi 0, %s98
      %s116 = sphi 0, %s116
      %s118 = sphi 0, %s116
      %s119 = sphi 0, %s118
      %s133 = sphi 0, %s119
      %s137 = sphi 0, %s137
      %s139 = sphi 0, %s137
      %s140 = sphi 0, %s139
      %s154 = sphi 0, %s140
      %s160 = sphi 0, %s162
      %s163 = sphi 0, %s160
      %s164 = sphi 0, %s163
      %s180 = sphi 0, %s164
    $region4: #{_lambda_.1} parent=1 // loop_header_branch
      %17 = sbr.rel (%p15) target = $region8
    $region5: #{_lambda_.1} parent=1 // loop_body
      %s19 = ssub.s32 %s14, 1
      %s20 = ssub.s32 %s14, 2
      %s21 = sadd.s32 %s14, 1
      %s22 = ssub.s32 %s14, %s21
      %p23 = scmp.eq.s32.totalorder %s22, 0
      %s25 = sadd.s32 %s24, 1
      %s26 = scalar_select %p23, %s24, %s25
      %p29 = pneg %p23
      %p30 = scmp.eq.s32.totalorder %s14, 1
      %p31 = por %p29, %p30
      %p32 = scmp.ne.s32.totalorder %s24, %s27
      %p33 = scmp.eq.s32.totalorder %s14, 0
      %p34 = por %p32, %p33
      %p35 = scmp.ne.s32.totalorder %s24, %s27
      %p36 = scmp.eq.s32.totalorder %s19, 1
      %p37 = por %p35, %p36
      %p38 = scmp.ne.s32.totalorder %s27, %s28
      %p39 = scmp.eq.s32.totalorder %s19, 0
      %p40 = por %p38, %p39
      %p41 = scmp.ne.s32.totalorder %s27, %s28
      %p42 = scmp.eq.s32.totalorder %s20, 1
      %p43 = por %p41, %p42
      %p45 = scmp.ne.s32.totalorder %s28, %s44
      %p46 = scmp.eq.s32.totalorder %s20, 0
      %p47 = por %p45, %p46
      %s48 = ssub.s32 %s14, %s21
      %p49 = scmp.eq.s32.totalorder %s48, 0
      %s51 = sadd.s32 %s50, 1
      %s52 = scalar_select %p49, %s50, %s51
      %p55 = pneg %p49
      %p56 = scmp.eq.s32.totalorder %s14, 1
      %p57 = por %p55, %p56
      %p58 = scmp.ne.s32.totalorder %s50, %s53
      %p59 = scmp.eq.s32.totalorder %s14, 0
      %p60 = por %p58, %p59
      %p61 = scmp.ne.s32.totalorder %s50, %s53
      %p62 = scmp.eq.s32.totalorder %s19, 1
      %p63 = por %p61, %p62
      %p64 = scmp.ne.s32.totalorder %s53, %s54
      %p65 = scmp.eq.s32.totalorder %s19, 0
      %p66 = por %p64, %p65
      %p67 = scmp.ne.s32.totalorder %s53, %s54
      %p68 = scmp.eq.s32.totalorder %s20, 1
      %p69 = por %p67, %p68
      %p71 = scmp.ne.s32.totalorder %s54, %s70
      %p72 = scmp.eq.s32.totalorder %s20, 0
      %p73 = por %p71, %p72
      %s75 = sadd.s32 %s74, 1
      %p78 = scmp.eq.s32.totalorder %s14, 1
      %p79 = scmp.ne.s32.totalorder %s74, %s76
      %p80 = scmp.eq.s32.totalorder %s14, 0
      %p81 = por %p79, %p80
      %p82 = scmp.ne.s32.totalorder %s74, %s76
      %p83 = scmp.eq.s32.totalorder %s19, 1
      %p84 = por %p82, %p83
      %p85 = scmp.ne.s32.totalorder %s76, %s77
      %p86 = scmp.eq.s32.totalorder %s19, 0
      %p87 = por %p85, %p86
      %p88 = scmp.ne.s32.totalorder %s76, %s77
      %p89 = scmp.eq.s32.totalorder %s20, 1
      %p90 = por %p88, %p89
      %p92 = scmp.ne.s32.totalorder %s77, %s91
      %p93 = scmp.eq.s32.totalorder %s20, 0
      %p94 = por %p92, %p93
      %s96 = sadd.s32 %s95, 1
      %p99 = scmp.eq.s32.totalorder %s14, 1
      %p100 = scmp.ne.s32.totalorder %s95, %s97
      %p101 = scmp.eq.s32.totalorder %s14, 0
      %p102 = por %p100, %p101
      %p103 = scmp.ne.s32.totalorder %s95, %s97
      %p104 = scmp.eq.s32.totalorder %s19, 1
      %p105 = por %p103, %p104
      %p106 = scmp.ne.s32.totalorder %s97, %s98
      %p107 = scmp.eq.s32.totalorder %s19, 0
      %p108 = por %p106, %p107
      %p109 = scmp.ne.s32.totalorder %s97, %s98
      %p110 = scmp.eq.s32.totalorder %s20, 1
      %p111 = por %p109, %p110
      %p113 = scmp.ne.s32.totalorder %s98, %s112
      %p114 = scmp.eq.s32.totalorder %s20, 0
      %p115 = por %p113, %p114
      %s117 = sadd.s32 %s116, 1
      %p120 = scmp.eq.s32.totalorder %s14, 1
      %p121 = scmp.ne.s32.totalorder %s116, %s118
      %p122 = scmp.eq.s32.totalorder %s14, 0
      %p123 = por %p121, %p122
      %p124 = scmp.ne.s32.totalorder %s116, %s118
      %p125 = scmp.eq.s32.totalorder %s19, 1
      %p126 = por %p124, %p125
      %p127 = scmp.ne.s32.totalorder %s118, %s119
      %p128 = scmp.eq.s32.totalorder %s19, 0
      %p129 = por %p127, %p128
      %p130 = scmp.ne.s32.totalorder %s118, %s119
      %p131 = scmp.eq.s32.totalorder %s20, 1
      %p132 = por %p130, %p131
      %p134 = scmp.ne.s32.totalorder %s119, %s133
      %p135 = scmp.eq.s32.totalorder %s20, 0
      %p136 = por %p134, %p135
      %s138 = sadd.s32 %s137, 1
      %p141 = scmp.eq.s32.totalorder %s14, 1
      %p142 = scmp.ne.s32.totalorder %s137, %s139
      %p143 = scmp.eq.s32.totalorder %s14, 0
      %p144 = por %p142, %p143
      %p145 = scmp.ne.s32.totalorder %s137, %s139
      %p146 = scmp.eq.s32.totalorder %s19, 1
      %p147 = por %p145, %p146
      %p148 = scmp.ne.s32.totalorder %s139, %s140
      %p149 = scmp.eq.s32.totalorder %s19, 0
      %p150 = por %p148, %p149
      %p151 = scmp.ne.s32.totalorder %s139, %s140
      %p152 = scmp.eq.s32.totalorder %s20, 1
      %p153 = por %p151, %p152
      %p155 = scmp.ne.s32.totalorder %s140, %s154
      %p156 = scmp.eq.s32.totalorder %s20, 0
      %p157 = por %p155, %p156
      %s158 = ssub.s32 %s14, %s21
      %p159 = scmp.eq.s32.totalorder %s158, 0
      %s161 = sadd.s32 %s160, 1
      %s162 = scalar_select %p159, %s160, %s161
      %p165 = pneg %p159
      %p166 = scmp.eq.s32.totalorder %s14, 1
      %p167 = por %p165, %p166
      %p168 = scmp.ne.s32.totalorder %s160, %s163
      %p169 = scmp.eq.s32.totalorder %s14, 0
      %p170 = por %p168, %p169
      %p171 = scmp.ne.s32.totalorder %s160, %s163
      %p172 = scmp.eq.s32.totalorder %s19, 1
      %p173 = por %p171, %p172
      %p174 = scmp.ne.s32.totalorder %s163, %s164
      %p175 = scmp.eq.s32.totalorder %s19, 0
      %p176 = por %p174, %p175
      %p177 = scmp.ne.s32.totalorder %s163, %s164
      %p178 = scmp.eq.s32.totalorder %s20, 1
      %p179 = por %p177, %p178
      %p181 = scmp.ne.s32.totalorder %s164, %s180
      %p182 = scmp.eq.s32.totalorder %s20, 0
      %p183 = por %p181, %p182
      %p184 = scmp.le.s32.totalorder 1, %s14
      %p185 = scmp.lt.s32.totalorder %s14, 3
      %p186 = pnand %p184, %p185
      %p187 = pneg %p186
      // Predicated region
      $region9: #{_lambda_.1} parent=5 // pred_check
        _
      $region10: #{_lambda_.1} parent=5 // pred_check_branch
        %189 = sbr.rel (%p186) target = $region12
      $region11: #{_lambda_.1} parent=5 // pred_region
        %s190 = ssub.s32 %s14, 1
        // Predicated region
        $region13: #{_lambda_.1} parent=11 // pred_check
          %p191 = pneg %p87
        $region14: #{_lambda_.1} parent=11 // pred_check_branch
          %193 = sbr.rel (%p191) target = $region16
        $region15: #{_lambda_.1} parent=11 // pred_region
          _
        $region16: #{_lambda_.1} parent=11 // pred_fallthru
          _
        // Predicated region
        $region17: #{_lambda_.1} parent=11 // pred_check
          %p194 = pneg %p108
        $region18: #{_lambda_.1} parent=11 // pred_check_branch
          %196 = sbr.rel (%p194) target = $region20
        $region19: #{_lambda_.1} parent=11 // pred_region
          %198 = vsyncadd [#allocation4], 0
          %s199 = sshll.u32 %s3, 4
          %s200 = int_to_ptr.hbm [resolvable:$true] %s199
          %s201 = sshll.u32 [#allocation3], 4
          %s202 = int_to_ptr.vmem [resolvable:$true] %s201
          %207 = dma.hbm_to_vmem [thread:$0]  %s200, 32768, %s202, [#allocation4], 256, 256, 16
        $region20: #{_lambda_.1} parent=11 // pred_fallthru
          _
        // Predicated region
        $region21: #{_lambda_.1} parent=11 // pred_check
          %p208 = pneg %p129
        $region22: #{_lambda_.1} parent=11 // pred_check_branch
          %210 = sbr.rel (%p208) target = $region24
        $region23: #{_lambda_.1} parent=11 // pred_region
          %212 = vsyncadd [#allocation6], 0
          %s213 = sshll.u32 %s4, 4
          %s214 = int_to_ptr.hbm [resolvable:$true] %s213
          %s215 = sshll.u32 [#allocation5], 4
          %s216 = int_to_ptr.vmem [resolvable:$true] %s215
          %221 = dma.hbm_to_vmem [thread:$0]  %s214, 8192, %s216, [#allocation6], 64, 64, 4
        $region24: #{_lambda_.1} parent=11 // pred_fallthru
          _
        // Predicated region
        $region25: #{_lambda_.1} parent=11 // pred_check
          %p222 = pneg %p150
        $region26: #{_lambda_.1} parent=11 // pred_check_branch
          %224 = sbr.rel (%p222) target = $region28
        $region27: #{_lambda_.1} parent=11 // pred_region
          _
        $region28: #{_lambda_.1} parent=11 // pred_fallthru
          _
      $region12: #{_lambda_.1} parent=5 // pred_fallthru
        _
      %p225 = scmp.lt.s32.totalorder %s14, 2
      // Predicated region
      $region29: #{_lambda_.1} parent=5 // pred_check
        %p226 = pneg %p225
      $region30: #{_lambda_.1} parent=5 // pred_check_branch
        %228 = sbr.rel (%p226) target = $region32
      $region31: #{_lambda_.1} parent=5 // pred_region
        // Predicated region
        $region33: #{_lambda_.1} parent=31 // pred_check
          %p229 = pneg %p34
        $region34: #{_lambda_.1} parent=31 // pred_check_branch
          %231 = sbr.rel (%p229) target = $region36
        $region35: #{_lambda_.1} parent=31 // pred_region
          %s232 = smul.u32 2, %s14
          %p233 = scmp.lt.s32.totalorder %s232, 3
          %s234 = scalar_select %p233, %s232, 3
          %s235 = smul.addr %s234, 4
          %s236 = smul.addr %s235, 4
          %s237 = scalar_lea.vmem %s0, %s236
          %s238 = smul.u32 2, %s14
        $region36: #{_lambda_.1} parent=31 // pred_fallthru
          _
        // Predicated region
        $region37: #{_lambda_.1} parent=31 // pred_check
          %p239 = pneg %p60
        $region38: #{_lambda_.1} parent=31 // pred_check_branch
          %241 = sbr.rel (%p239) target = $region40
        $region39: #{_lambda_.1} parent=31 // pred_region
          %s242 = smul.u32 2, %s14
          %p243 = scmp.lt.s32.totalorder %s242, 3
          %s244 = scalar_select %p243, %s242, 3
          %s245 = smul.addr %s244, 8
          %s246 = smul.addr %s245, 4
          %s247 = scalar_lea.vmem %s1, %s246
          %s248 = smul.u32 2, %s14
        $region40: #{_lambda_.1} parent=31 // pred_fallthru
          _
      $region32: #{_lambda_.1} parent=5 // pred_fallthru
        _
      %p249 = scmp.le.s32.totalorder 1, %s14
      %p250 = scmp.lt.s32.totalorder %s14, 3
      %p251 = pnand %p249, %p250
      %p252 = pneg %p251
      // Predicated region
      $region41: #{_lambda_.1} parent=5 // pred_check
        _
      $region42: #{_lambda_.1} parent=5 // pred_check_branch
        %254 = sbr.rel (%p251) target = $region44
      $region43: #{_lambda_.1} parent=5 // pred_region
        %s255 = ssub.s32 %s14, 1
        // Predicated region
        $region45: #{_lambda_.1} parent=43 // pred_check
          %p256 = pneg %p108
        $region46: #{_lambda_.1} parent=43 // pred_check_branch
          %258 = sbr.rel (%p256) target = $region48
        $region47: #{_lambda_.1} parent=43 // pred_region
          %260 = dma.done [#allocation4], 32768
        $region48: #{_lambda_.1} parent=43 // pred_fallthru
          _
        // Predicated region
        $region49: #{_lambda_.1} parent=43 // pred_check
          %p261 = pneg %p129
        $region50: #{_lambda_.1} parent=43 // pred_check_branch
          %263 = sbr.rel (%p261) target = $region52
        $region51: #{_lambda_.1} parent=43 // pred_region
          %265 = dma.done [#allocation6], 8192
        $region52: #{_lambda_.1} parent=43 // pred_fallthru
          _
        %s266 = smul.u32 2, %s19
        %p267 = scmp.lt.s32.totalorder %s266, 3
        %s268 = scalar_select %p267, %s266, 3
        %s269 = smul.addr %s268, 4
        %s270 = smul.addr %s269, 4
        %s271 = scalar_lea.vmem %s0, %s270
        %p272 = pneg %p40
        %p273 = pneg %p37
        %s274 = smul.u32 2, %s19
        %p275 = scmp.lt.s32.totalorder %s274, 3
        %s276 = scalar_select %p275, %s274, 3
        %s277 = smul.addr %s276, 8
        %s278 = smul.addr %s277, 4
        %s279 = scalar_lea.vmem %s1, %s278
        %p280 = pneg %p66
        %p281 = pneg %p63
        %p282 = pneg %p87
        %p283 = pneg %p84
        %p284 = pneg %p108
        %p285 = pneg %p105
        %p286 = pneg %p129
        %p287 = pneg %p126
        %p288 = pneg %p150
        %p289 = pneg %p147
        %p290 = pneg %p176
        %p291 = pneg %p173
        %s292 = smul.u32 2, %s19
        %p293 = scmp.lt.s32.totalorder %s292, 3
        %s294 = scalar_select %p293, %s292, 3
        %s295 = smul.addr %s294, 8
        %s296 = scalar_lea.vmem %s6, %s295
        %s297 = smul.u32 2, %s19
        %p298 = scmp.lt.s32.totalorder %s297, 3
        %s299 = scalar_select %p298, %s297, 3
        %s300 = smul.addr %s299, 4
        %s301 = smul.addr %s300, 4
        %s302 = scalar_lea.vmem %s0, %s301
        %s303 = smul.u32 2, %s19
        %s304 = smul.u32 2, %s19
        %p305 = scmp.lt.s32.totalorder %s304, 3
        %s306 = scalar_select %p305, %s304, 3
        %s307 = smul.addr %s306, 8
        %s308 = smul.addr %s307, 4
        %s309 = scalar_lea.vmem %s1, %s308
        %s310 = smul.u32 2, %s19
        %s311 = smul.u32 2, %s19
        %p312 = scmp.lt.s32.totalorder %s311, 3
        %s313 = scalar_select %p312, %s311, 3
        %s314 = smul.addr %s313, 8
        %s315 = scalar_lea.vmem %s6, %s314
        %s316 = smul.u32 2, %s19
        %v317 = vld [vmem:[%s5] ss:$8 sm:$0xf]
        %s318 = scalar_lea.vmem %s5, 1
        %v319 = vld [vmem:[%s318] ss:$8 sm:$0xf]
        %v320 = vld [vmem:[%s5 + $0x2] ss:$0 sm:$0xff]
        %v321 = vld [vmem:[%s302] sm:$0xff]
        %v322 = vld [vmem:[%s302 + $0x8] sm:$0xff]
        %v323 = vld [vmem:[%s302 + $0x10] sm:$0xff]
        %v324 = vld [vmem:[%s302 + $0x18] sm:$0xff]
        %v325 = vld [vmem:[%s2] sm:$0xff]
        %v326 = vld [vmem:[%s2 + $0x8] sm:$0xff]
        %v327 = vld [vmem:[%s2 + $0x10] sm:$0xff]
        %v328 = vld [vmem:[%s2 + $0x18] sm:$0xff]
        %v329 = vld [vmem:[%s2 + $0x20] sm:$0xff]
        %v330 = vld [vmem:[%s2 + $0x28] sm:$0xff]
        %v331 = vld [vmem:[%s2 + $0x30] sm:$0xff]
        %v332 = vld [vmem:[%s2 + $0x38] sm:$0xff]
        %v333 = vld [vmem:[%s2 + $0x40] sm:$0xff]
        %v334 = vld [vmem:[%s2 + $0x48] sm:$0xff]
        %v335 = vld [vmem:[%s2 + $0x50] sm:$0xff]
        %v336 = vld [vmem:[%s2 + $0x58] sm:$0xff]
        %v337 = vld [vmem:[%s2 + $0x60] sm:$0xff]
        %v338 = vld [vmem:[%s2 + $0x68] sm:$0xff]
        %v339 = vld [vmem:[%s2 + $0x70] sm:$0xff]
        %v340 = vld [vmem:[%s2 + $0x78] sm:$0xff]
        %v341 = vld [vmem:[%s2 + $0x80] sm:$0xff]
        %v342 = vld [vmem:[%s2 + $0x88] sm:$0xff]
        %v343 = vld [vmem:[%s2 + $0x90] sm:$0xff]
        %v344 = vld [vmem:[%s2 + $0x98] sm:$0xff]
        %v345 = vld [vmem:[%s2 + $0xa0] sm:$0xff]
        %v346 = vld [vmem:[%s2 + $0xa8] sm:$0xff]
        %v347 = vld [vmem:[%s2 + $0xb0] sm:$0xff]
        %v348 = vld [vmem:[%s2 + $0xb8] sm:$0xff]
        %v349 = vld [vmem:[%s2 + $0xc0] sm:$0xff]
        %v350 = vld [vmem:[%s2 + $0xc8] sm:$0xff]
        %v351 = vld [vmem:[%s2 + $0xd0] sm:$0xff]
        %v352 = vld [vmem:[%s2 + $0xd8] sm:$0xff]
        %v353 = vld [vmem:[%s2 + $0xe0] sm:$0xff]
        %v354 = vld [vmem:[%s2 + $0xe8] sm:$0xff]
        %v355 = vld [vmem:[%s2 + $0xf0] sm:$0xff]
        %v356 = vld [vmem:[%s2 + $0xf8] sm:$0xff]
        %v357 = vld [vmem:[%s2 + $0x100] sm:$0xff]
        %v358 = vld [vmem:[%s2 + $0x108] sm:$0xff]
        %v359 = vld [vmem:[%s2 + $0x110] sm:$0xff]
        %v360 = vld [vmem:[%s2 + $0x118] sm:$0xff]
        %v361 = vld [vmem:[%s2 + $0x120] sm:$0xff]
        %v362 = vld [vmem:[%s2 + $0x128] sm:$0xff]
        %v363 = vld [vmem:[%s2 + $0x130] sm:$0xff]
        %v364 = vld [vmem:[%s2 + $0x138] sm:$0xff]
        %v365 = vld [vmem:[%s2 + $0x140] sm:$0xff]
        %v366 = vld [vmem:[%s2 + $0x148] sm:$0xff]
        %v367 = vld [vmem:[%s2 + $0x150] sm:$0xff]
        %v368 = vld [vmem:[%s2 + $0x158] sm:$0xff]
        %v369 = vld [vmem:[%s2 + $0x160] sm:$0xff]
        %v370 = vld [vmem:[%s2 + $0x168] sm:$0xff]
        %v371 = vld [vmem:[%s2 + $0x170] sm:$0xff]
        %v372 = vld [vmem:[%s2 + $0x178] sm:$0xff]
        %v373 = vld [vmem:[%s2 + $0x180] sm:$0xff]
        %v374 = vld [vmem:[%s2 + $0x188] sm:$0xff]
        %v375 = vld [vmem:[%s2 + $0x190] sm:$0xff]
        %v376 = vld [vmem:[%s2 + $0x198] sm:$0xff]
        %v377 = vld [vmem:[%s2 + $0x1a0] sm:$0xff]
        %v378 = vld [vmem:[%s2 + $0x1a8] sm:$0xff]
        %v379 = vld [vmem:[%s2 + $0x1b0] sm:$0xff]
        %v380 = vld [vmem:[%s2 + $0x1b8] sm:$0xff]
        %v381 = vld [vmem:[%s2 + $0x1c0] sm:$0xff]
        %v382 = vld [vmem:[%s2 + $0x1c8] sm:$0xff]
        %v383 = vld [vmem:[%s2 + $0x1d0] sm:$0xff]
        %v384 = vld [vmem:[%s2 + $0x1d8] sm:$0xff]
        %v385 = vld [vmem:[%s2 + $0x1e0] sm:$0xff]
        %v386 = vld [vmem:[%s2 + $0x1e8] sm:$0xff]
        %v387 = vld [vmem:[%s2 + $0x1f0] sm:$0xff]
        %v388 = vld [vmem:[%s2 + $0x1f8] sm:$0xff]
        %v389 = vld [vmem:[%s2 + $0x200] sm:$0xff]
        %v390 = vld [vmem:[%s2 + $0x208] sm:$0xff]
        %v391 = vld [vmem:[%s2 + $0x210] sm:$0xff]
        %v392 = vld [vmem:[%s2 + $0x218] sm:$0xff]
        %v393 = vld [vmem:[%s2 + $0x220] sm:$0xff]
        %v394 = vld [vmem:[%s2 + $0x228] sm:$0xff]
        %v395 = vld [vmem:[%s2 + $0x230] sm:$0xff]
        %v396 = vld [vmem:[%s2 + $0x238] sm:$0xff]
        %v397 = vld [vmem:[%s2 + $0x240] sm:$0xff]
        %v398 = vld [vmem:[%s2 + $0x248] sm:$0xff]
        %v399 = vld [vmem:[%s2 + $0x250] sm:$0xff]
        %v400 = vld [vmem:[%s2 + $0x258] sm:$0xff]
        %v401 = vld [vmem:[%s2 + $0x260] sm:$0xff]
        %v402 = vld [vmem:[%s2 + $0x268] sm:$0xff]
        %v403 = vld [vmem:[%s2 + $0x270] sm:$0xff]
        %v404 = vld [vmem:[%s2 + $0x278] sm:$0xff]
        %v405 = vld [vmem:[%s2 + $0x280] sm:$0xff]
        %v406 = vld [vmem:[%s2 + $0x288] sm:$0xff]
        %v407 = vld [vmem:[%s2 + $0x290] sm:$0xff]
        %v408 = vld [vmem:[%s2 + $0x298] sm:$0xff]
        %v409 = vld [vmem:[%s2 + $0x2a0] sm:$0xff]
        %v410 = vld [vmem:[%s2 + $0x2a8] sm:$0xff]
        %v411 = vld [vmem:[%s2 + $0x2b0] sm:$0xff]
        %v412 = vld [vmem:[%s2 + $0x2b8] sm:$0xff]
        %v413 = vld [vmem:[%s2 + $0x2c0] sm:$0xff]
        %v414 = vld [vmem:[%s2 + $0x2c8] sm:$0xff]
        %v415 = vld [vmem:[%s2 + $0x2d0] sm:$0xff]
        %v416 = vld [vmem:[%s2 + $0x2d8] sm:$0xff]
        %v417 = vld [vmem:[%s2 + $0x2e0] sm:$0xff]
        %v418 = vld [vmem:[%s2 + $0x2e8] sm:$0xff]
        %v419 = vld [vmem:[%s2 + $0x2f0] sm:$0xff]
        %v420 = vld [vmem:[%s2 + $0x2f8] sm:$0xff]
        %v421 = vld [vmem:[%s2 + $0x300] sm:$0xff]
        %v422 = vld [vmem:[%s2 + $0x308] sm:$0xff]
        %v423 = vld [vmem:[%s2 + $0x310] sm:$0xff]
        %v424 = vld [vmem:[%s2 + $0x318] sm:$0xff]
        %v425 = vld [vmem:[%s2 + $0x320] sm:$0xff]
        %v426 = vld [vmem:[%s2 + $0x328] sm:$0xff]
        %v427 = vld [vmem:[%s2 + $0x330] sm:$0xff]
        %v428 = vld [vmem:[%s2 + $0x338] sm:$0xff]
        %v429 = vld [vmem:[%s2 + $0x340] sm:$0xff]
        %v430 = vld [vmem:[%s2 + $0x348] sm:$0xff]
        %v431 = vld [vmem:[%s2 + $0x350] sm:$0xff]
        %v432 = vld [vmem:[%s2 + $0x358] sm:$0xff]
        %v433 = vld [vmem:[%s2 + $0x360] sm:$0xff]
        %v434 = vld [vmem:[%s2 + $0x368] sm:$0xff]
        %v435 = vld [vmem:[%s2 + $0x370] sm:$0xff]
        %v436 = vld [vmem:[%s2 + $0x378] sm:$0xff]
        %v437 = vld [vmem:[%s2 + $0x380] sm:$0xff]
        %v438 = vld [vmem:[%s2 + $0x388] sm:$0xff]
        %v439 = vld [vmem:[%s2 + $0x390] sm:$0xff]
        %v440 = vld [vmem:[%s2 + $0x398] sm:$0xff]
        %v441 = vld [vmem:[%s2 + $0x3a0] sm:$0xff]
        %v442 = vld [vmem:[%s2 + $0x3a8] sm:$0xff]
        %v443 = vld [vmem:[%s2 + $0x3b0] sm:$0xff]
        %v444 = vld [vmem:[%s2 + $0x3b8] sm:$0xff]
        %v445 = vld [vmem:[%s2 + $0x3c0] sm:$0xff]
        %v446 = vld [vmem:[%s2 + $0x3c8] sm:$0xff]
        %v447 = vld [vmem:[%s2 + $0x3d0] sm:$0xff]
        %v448 = vld [vmem:[%s2 + $0x3d8] sm:$0xff]
        %v449 = vld [vmem:[%s2 + $0x3e0] sm:$0xff]
        %v450 = vld [vmem:[%s2 + $0x3e8] sm:$0xff]
        %v451 = vld [vmem:[%s2 + $0x3f0] sm:$0xff]
        %v452 = vld [vmem:[%s2 + $0x3f8] sm:$0xff]
        %v454 = vperm.slane %v317, 0
        %v455 = vperm.slane %v317, 1
        %v456 = vperm.slane %v317, 2
        %v457 = vperm.slane %v317, 3
        %v466 = vunpack.c.l.b16 %v321
        %v467 = vunpack.c.h.b16 %v321
        %v468 = vunpack.c.l.b16 %v322
        %v469 = vunpack.c.h.b16 %v322
        %v470 = vunpack.c.l.b16 %v323
        %v471 = vunpack.c.h.b16 %v323
        %v472 = vunpack.c.l.b16 %v324
        %v473 = vunpack.c.h.b16 %v324
        %v474 = vpack.c.b16 %v470, %v466
        %v475 = vpack.c.b16 %v471, %v467
        %v476 = vpack.c.b16 %v472, %v468
        %v477 = vpack.c.b16 %v473, %v469
        %v610 = vunpack.c.l.b16 %v325
        %v611 = vunpack.c.h.b16 %v325
        %v612 = vunpack.c.l.b16 %v326
        %v613 = vunpack.c.h.b16 %v326
        %v614 = vunpack.c.l.b16 %v327
        %v615 = vunpack.c.h.b16 %v327
        %v616 = vunpack.c.l.b16 %v328
        %v617 = vunpack.c.h.b16 %v328
        %v618 = vunpack.c.l.b16 %v329
        %v619 = vunpack.c.h.b16 %v329
        %v620 = vunpack.c.l.b16 %v330
        %v621 = vunpack.c.h.b16 %v330
        %v622 = vunpack.c.l.b16 %v331
        %v623 = vunpack.c.h.b16 %v331
        %v624 = vunpack.c.l.b16 %v332
        %v625 = vunpack.c.h.b16 %v332
        %v626 = vunpack.c.l.b16 %v333
        %v627 = vunpack.c.h.b16 %v333
        %v628 = vunpack.c.l.b16 %v334
        %v629 = vunpack.c.h.b16 %v334
        %v630 = vunpack.c.l.b16 %v335
        %v631 = vunpack.c.h.b16 %v335
        %v632 = vunpack.c.l.b16 %v336
        %v633 = vunpack.c.h.b16 %v336
        %v634 = vunpack.c.l.b16 %v337
        %v635 = vunpack.c.h.b16 %v337
        %v636 = vunpack.c.l.b16 %v338
        %v637 = vunpack.c.h.b16 %v338
        %v638 = vunpack.c.l.b16 %v339
        %v639 = vunpack.c.h.b16 %v339
        %v640 = vunpack.c.l.b16 %v340
        %v641 = vunpack.c.h.b16 %v340
        %v642 = vunpack.c.l.b16 %v341
        %v643 = vunpack.c.h.b16 %v341
        %v644 = vunpack.c.l.b16 %v342
        %v645 = vunpack.c.h.b16 %v342
        %v646 = vunpack.c.l.b16 %v343
        %v647 = vunpack.c.h.b16 %v343
        %v648 = vunpack.c.l.b16 %v344
        %v649 = vunpack.c.h.b16 %v344
        %v650 = vunpack.c.l.b16 %v345
        %v651 = vunpack.c.h.b16 %v345
        %v652 = vunpack.c.l.b16 %v346
        %v653 = vunpack.c.h.b16 %v346
        %v654 = vunpack.c.l.b16 %v347
        %v655 = vunpack.c.h.b16 %v347
        %v656 = vunpack.c.l.b16 %v348
        %v657 = vunpack.c.h.b16 %v348
        %v658 = vunpack.c.l.b16 %v349
        %v659 = vunpack.c.h.b16 %v349
        %v660 = vunpack.c.l.b16 %v350
        %v661 = vunpack.c.h.b16 %v350
        %v662 = vunpack.c.l.b16 %v351
        %v663 = vunpack.c.h.b16 %v351
        %v664 = vunpack.c.l.b16 %v352
        %v665 = vunpack.c.h.b16 %v352
        %v666 = vunpack.c.l.b16 %v353
        %v667 = vunpack.c.h.b16 %v353
        %v668 = vunpack.c.l.b16 %v354
        %v669 = vunpack.c.h.b16 %v354
        %v670 = vunpack.c.l.b16 %v355
        %v671 = vunpack.c.h.b16 %v355
        %v672 = vunpack.c.l.b16 %v356
        %v673 = vunpack.c.h.b16 %v356
        %v674 = vunpack.c.l.b16 %v357
        %v675 = vunpack.c.h.b16 %v357
        %v676 = vunpack.c.l.b16 %v358
        %v677 = vunpack.c.h.b16 %v358
        %v678 = vunpack.c.l.b16 %v359
        %v679 = vunpack.c.h.b16 %v359
        %v680 = vunpack.c.l.b16 %v360
        %v681 = vunpack.c.h.b16 %v360
        %v682 = vunpack.c.l.b16 %v361
        %v683 = vunpack.c.h.b16 %v361
        %v684 = vunpack.c.l.b16 %v362
        %v685 = vunpack.c.h.b16 %v362
        %v686 = vunpack.c.l.b16 %v363
        %v687 = vunpack.c.h.b16 %v363
        %v688 = vunpack.c.l.b16 %v364
        %v689 = vunpack.c.h.b16 %v364
        %v690 = vunpack.c.l.b16 %v365
        %v691 = vunpack.c.h.b16 %v365
        %v692 = vunpack.c.l.b16 %v366
        %v693 = vunpack.c.h.b16 %v366
        %v694 = vunpack.c.l.b16 %v367
        %v695 = vunpack.c.h.b16 %v367
        %v696 = vunpack.c.l.b16 %v368
        %v697 = vunpack.c.h.b16 %v368
        %v698 = vunpack.c.l.b16 %v369
        %v699 = vunpack.c.h.b16 %v369
        %v700 = vunpack.c.l.b16 %v370
        %v701 = vunpack.c.h.b16 %v370
        %v702 = vunpack.c.l.b16 %v371
        %v703 = vunpack.c.h.b16 %v371
        %v704 = vunpack.c.l.b16 %v372
        %v705 = vunpack.c.h.b16 %v372
        %v706 = vunpack.c.l.b16 %v373
        %v707 = vunpack.c.h.b16 %v373
        %v708 = vunpack.c.l.b16 %v374
        %v709 = vunpack.c.h.b16 %v374
        %v710 = vunpack.c.l.b16 %v375
        %v711 = vunpack.c.h.b16 %v375
        %v712 = vunpack.c.l.b16 %v376
        %v713 = vunpack.c.h.b16 %v376
        %v714 = vunpack.c.l.b16 %v377
        %v715 = vunpack.c.h.b16 %v377
        %v716 = vunpack.c.l.b16 %v378
        %v717 = vunpack.c.h.b16 %v378
        %v718 = vunpack.c.l.b16 %v379
        %v719 = vunpack.c.h.b16 %v379
        %v720 = vunpack.c.l.b16 %v380
        %v721 = vunpack.c.h.b16 %v380
        %v722 = vunpack.c.l.b16 %v381
        %v723 = vunpack.c.h.b16 %v381
        %v724 = vunpack.c.l.b16 %v382
        %v725 = vunpack.c.h.b16 %v382
        %v726 = vunpack.c.l.b16 %v383
        %v727 = vunpack.c.h.b16 %v383
        %v728 = vunpack.c.l.b16 %v384
        %v729 = vunpack.c.h.b16 %v384
        %v730 = vunpack.c.l.b16 %v385
        %v731 = vunpack.c.h.b16 %v385
        %v732 = vunpack.c.l.b16 %v386
        %v733 = vunpack.c.h.b16 %v386
        %v734 = vunpack.c.l.b16 %v387
        %v735 = vunpack.c.h.b16 %v387
        %v736 = vunpack.c.l.b16 %v388
        %v737 = vunpack.c.h.b16 %v388
        %v738 = vunpack.c.l.b16 %v389
        %v739 = vunpack.c.h.b16 %v389
        %v740 = vunpack.c.l.b16 %v390
        %v741 = vunpack.c.h.b16 %v390
        %v742 = vunpack.c.l.b16 %v391
        %v743 = vunpack.c.h.b16 %v391
        %v744 = vunpack.c.l.b16 %v392
        %v745 = vunpack.c.h.b16 %v392
        %v746 = vunpack.c.l.b16 %v393
        %v747 = vunpack.c.h.b16 %v393
        %v748 = vunpack.c.l.b16 %v394
        %v749 = vunpack.c.h.b16 %v394
        %v750 = vunpack.c.l.b16 %v395
        %v751 = vunpack.c.h.b16 %v395
        %v752 = vunpack.c.l.b16 %v396
        %v753 = vunpack.c.h.b16 %v396
        %v754 = vunpack.c.l.b16 %v397
        %v755 = vunpack.c.h.b16 %v397
        %v756 = vunpack.c.l.b16 %v398
        %v757 = vunpack.c.h.b16 %v398
        %v758 = vunpack.c.l.b16 %v399
        %v759 = vunpack.c.h.b16 %v399
        %v760 = vunpack.c.l.b16 %v400
        %v761 = vunpack.c.h.b16 %v400
        %v762 = vunpack.c.l.b16 %v401
        %v763 = vunpack.c.h.b16 %v401
        %v764 = vunpack.c.l.b16 %v402
        %v765 = vunpack.c.h.b16 %v402
        %v766 = vunpack.c.l.b16 %v403
        %v767 = vunpack.c.h.b16 %v403
        %v768 = vunpack.c.l.b16 %v404
        %v769 = vunpack.c.h.b16 %v404
        %v770 = vunpack.c.l.b16 %v405
        %v771 = vunpack.c.h.b16 %v405
        %v772 = vunpack.c.l.b16 %v406
        %v773 = vunpack.c.h.b16 %v406
        %v774 = vunpack.c.l.b16 %v407
        %v775 = vunpack.c.h.b16 %v407
        %v776 = vunpack.c.l.b16 %v408
        %v777 = vunpack.c.h.b16 %v408
        %v778 = vunpack.c.l.b16 %v409
        %v779 = vunpack.c.h.b16 %v409
        %v780 = vunpack.c.l.b16 %v410
        %v781 = vunpack.c.h.b16 %v410
        %v782 = vunpack.c.l.b16 %v411
        %v783 = vunpack.c.h.b16 %v411
        %v784 = vunpack.c.l.b16 %v412
        %v785 = vunpack.c.h.b16 %v412
        %v786 = vunpack.c.l.b16 %v413
        %v787 = vunpack.c.h.b16 %v413
        %v788 = vunpack.c.l.b16 %v414
        %v789 = vunpack.c.h.b16 %v414
        %v790 = vunpack.c.l.b16 %v415
        %v791 = vunpack.c.h.b16 %v415
        %v792 = vunpack.c.l.b16 %v416
        %v793 = vunpack.c.h.b16 %v416
        %v794 = vunpack.c.l.b16 %v417
        %v795 = vunpack.c.h.b16 %v417
        %v796 = vunpack.c.l.b16 %v418
        %v797 = vunpack.c.h.b16 %v418
        %v798 = vunpack.c.l.b16 %v419
        %v799 = vunpack.c.h.b16 %v419
        %v800 = vunpack.c.l.b16 %v420
        %v801 = vunpack.c.h.b16 %v420
        %v802 = vunpack.c.l.b16 %v421
        %v803 = vunpack.c.h.b16 %v421
        %v804 = vunpack.c.l.b16 %v422
        %v805 = vunpack.c.h.b16 %v422
        %v806 = vunpack.c.l.b16 %v423
        %v807 = vunpack.c.h.b16 %v423
        %v808 = vunpack.c.l.b16 %v424
        %v809 = vunpack.c.h.b16 %v424
        %v810 = vunpack.c.l.b16 %v425
        %v811 = vunpack.c.h.b16 %v425
        %v812 = vunpack.c.l.b16 %v426
        %v813 = vunpack.c.h.b16 %v426
        %v814 = vunpack.c.l.b16 %v427
        %v815 = vunpack.c.h.b16 %v427
        %v816 = vunpack.c.l.b16 %v428
        %v817 = vunpack.c.h.b16 %v428
        %v818 = vunpack.c.l.b16 %v429
        %v819 = vunpack.c.h.b16 %v429
        %v820 = vunpack.c.l.b16 %v430
        %v821 = vunpack.c.h.b16 %v430
        %v822 = vunpack.c.l.b16 %v431
        %v823 = vunpack.c.h.b16 %v431
        %v824 = vunpack.c.l.b16 %v432
        %v825 = vunpack.c.h.b16 %v432
        %v826 = vunpack.c.l.b16 %v433
        %v827 = vunpack.c.h.b16 %v433
        %v828 = vunpack.c.l.b16 %v434
        %v829 = vunpack.c.h.b16 %v434
        %v830 = vunpack.c.l.b16 %v435
        %v831 = vunpack.c.h.b16 %v435
        %v832 = vunpack.c.l.b16 %v436
        %v833 = vunpack.c.h.b16 %v436
        %v834 = vunpack.c.l.b16 %v437
        %v835 = vunpack.c.h.b16 %v437
        %v836 = vunpack.c.l.b16 %v438
        %v837 = vunpack.c.h.b16 %v438
        %v838 = vunpack.c.l.b16 %v439
        %v839 = vunpack.c.h.b16 %v439
        %v840 = vunpack.c.l.b16 %v440
        %v841 = vunpack.c.h.b16 %v440
        %v842 = vunpack.c.l.b16 %v441
        %v843 = vunpack.c.h.b16 %v441
        %v844 = vunpack.c.l.b16 %v442
        %v845 = vunpack.c.h.b16 %v442
        %v846 = vunpack.c.l.b16 %v443
        %v847 = vunpack.c.h.b16 %v443
        %v848 = vunpack.c.l.b16 %v444
        %v849 = vunpack.c.h.b16 %v444
        %v850 = vunpack.c.l.b16 %v445
        %v851 = vunpack.c.h.b16 %v445
        %v852 = vunpack.c.l.b16 %v446
        %v853 = vunpack.c.h.b16 %v446
        %v854 = vunpack.c.l.b16 %v447
        %v855 = vunpack.c.h.b16 %v447
        %v856 = vunpack.c.l.b16 %v448
        %v857 = vunpack.c.h.b16 %v448
        %v858 = vunpack.c.l.b16 %v449
        %v859 = vunpack.c.h.b16 %v449
        %v860 = vunpack.c.l.b16 %v450
        %v861 = vunpack.c.h.b16 %v450
        %v862 = vunpack.c.l.b16 %v451
        %v863 = vunpack.c.h.b16 %v451
        %v864 = vunpack.c.l.b16 %v452
        %v865 = vunpack.c.h.b16 %v452
        %v866 = vpack.c.b16 %v614, %v610
        %v867 = vpack.c.b16 %v615, %v611
        %v868 = vpack.c.b16 %v616, %v612
        %v869 = vpack.c.b16 %v617, %v613
        %v870 = vpack.c.b16 %v622, %v618
        %v871 = vpack.c.b16 %v623, %v619
        %v872 = vpack.c.b16 %v624, %v620
        %v873 = vpack.c.b16 %v625, %v621
        %v874 = vpack.c.b16 %v630, %v626
        %v875 = vpack.c.b16 %v631, %v627
        %v876 = vpack.c.b16 %v632, %v628
        %v877 = vpack.c.b16 %v633, %v629
        %v878 = vpack.c.b16 %v638, %v634
        %v879 = vpack.c.b16 %v639, %v635
        %v880 = vpack.c.b16 %v640, %v636
        %v881 = vpack.c.b16 %v641, %v637
        %v882 = vpack.c.b16 %v646, %v642
        %v883 = vpack.c.b16 %v647, %v643
        %v884 = vpack.c.b16 %v648, %v644
        %v885 = vpack.c.b16 %v649, %v645
        %v886 = vpack.c.b16 %v654, %v650
        %v887 = vpack.c.b16 %v655, %v651
        %v888 = vpack.c.b16 %v656, %v652
        %v889 = vpack.c.b16 %v657, %v653
        %v890 = vpack.c.b16 %v662, %v658
        %v891 = vpack.c.b16 %v663, %v659
        %v892 = vpack.c.b16 %v664, %v660
        %v893 = vpack.c.b16 %v665, %v661
        %v894 = vpack.c.b16 %v670, %v666
        %v895 = vpack.c.b16 %v671, %v667
        %v896 = vpack.c.b16 %v672, %v668
        %v897 = vpack.c.b16 %v673, %v669
        %v898 = vpack.c.b16 %v678, %v674
        %v899 = vpack.c.b16 %v679, %v675
        %v900 = vpack.c.b16 %v680, %v676
        %v901 = vpack.c.b16 %v681, %v677
        %v902 = vpack.c.b16 %v686, %v682
        %v903 = vpack.c.b16 %v687, %v683
        %v904 = vpack.c.b16 %v688, %v684
        %v905 = vpack.c.b16 %v689, %v685
        %v906 = vpack.c.b16 %v694, %v690
        %v907 = vpack.c.b16 %v695, %v691
        %v908 = vpack.c.b16 %v696, %v692
        %v909 = vpack.c.b16 %v697, %v693
        %v910 = vpack.c.b16 %v702, %v698
        %v911 = vpack.c.b16 %v703, %v699
        %v912 = vpack.c.b16 %v704, %v700
        %v913 = vpack.c.b16 %v705, %v701
        %v914 = vpack.c.b16 %v710, %v706
        %v915 = vpack.c.b16 %v711, %v707
        %v916 = vpack.c.b16 %v712, %v708
        %v917 = vpack.c.b16 %v713, %v709
        %v918 = vpack.c.b16 %v718, %v714
        %v919 = vpack.c.b16 %v719, %v715
        %v920 = vpack.c.b16 %v720, %v716
        %v921 = vpack.c.b16 %v721, %v717
        %v922 = vpack.c.b16 %v726, %v722
        %v923 = vpack.c.b16 %v727, %v723
        %v924 = vpack.c.b16 %v728, %v724
        %v925 = vpack.c.b16 %v729, %v725
        %v926 = vpack.c.b16 %v734, %v730
        %v927 = vpack.c.b16 %v735, %v731
        %v928 = vpack.c.b16 %v736, %v732
        %v929 = vpack.c.b16 %v737, %v733
        %v930 = vpack.c.b16 %v742, %v738
        %v931 = vpack.c.b16 %v743, %v739
        %v932 = vpack.c.b16 %v744, %v740
        %v933 = vpack.c.b16 %v745, %v741
        %v934 = vpack.c.b16 %v750, %v746
        %v935 = vpack.c.b16 %v751, %v747
        %v936 = vpack.c.b16 %v752, %v748
        %v937 = vpack.c.b16 %v753, %v749
        %v938 = vpack.c.b16 %v758, %v754
        %v939 = vpack.c.b16 %v759, %v755
        %v940 = vpack.c.b16 %v760, %v756
        %v941 = vpack.c.b16 %v761, %v757
        %v942 = vpack.c.b16 %v766, %v762
        %v943 = vpack.c.b16 %v767, %v763
        %v944 = vpack.c.b16 %v768, %v764
        %v945 = vpack.c.b16 %v769, %v765
        %v946 = vpack.c.b16 %v774, %v770
        %v947 = vpack.c.b16 %v775, %v771
        %v948 = vpack.c.b16 %v776, %v772
        %v949 = vpack.c.b16 %v777, %v773
        %v950 = vpack.c.b16 %v782, %v778
        %v951 = vpack.c.b16 %v783, %v779
        %v952 = vpack.c.b16 %v784, %v780
        %v953 = vpack.c.b16 %v785, %v781
        %v954 = vpack.c.b16 %v790, %v786
        %v955 = vpack.c.b16 %v791, %v787
        %v956 = vpack.c.b16 %v792, %v788
        %v957 = vpack.c.b16 %v793, %v789
        %v958 = vpack.c.b16 %v798, %v794
        %v959 = vpack.c.b16 %v799, %v795
        %v960 = vpack.c.b16 %v800, %v796
        %v961 = vpack.c.b16 %v801, %v797
        %v962 = vpack.c.b16 %v806, %v802
        %v963 = vpack.c.b16 %v807, %v803
        %v964 = vpack.c.b16 %v808, %v804
        %v965 = vpack.c.b16 %v809, %v805
        %v966 = vpack.c.b16 %v814, %v810
        %v967 = vpack.c.b16 %v815, %v811
        %v968 = vpack.c.b16 %v816, %v812
        %v969 = vpack.c.b16 %v817, %v813
        %v970 = vpack.c.b16 %v822, %v818
        %v971 = vpack.c.b16 %v823, %v819
        %v972 = vpack.c.b16 %v824, %v820
        %v973 = vpack.c.b16 %v825, %v821
        %v974 = vpack.c.b16 %v830, %v826
        %v975 = vpack.c.b16 %v831, %v827
        %v976 = vpack.c.b16 %v832, %v828
        %v977 = vpack.c.b16 %v833, %v829
        %v978 = vpack.c.b16 %v838, %v834
        %v979 = vpack.c.b16 %v839, %v835
        %v980 = vpack.c.b16 %v840, %v836
        %v981 = vpack.c.b16 %v841, %v837
        %v982 = vpack.c.b16 %v846, %v842
        %v983 = vpack.c.b16 %v847, %v843
        %v984 = vpack.c.b16 %v848, %v844
        %v985 = vpack.c.b16 %v849, %v845
        %v986 = vpack.c.b16 %v854, %v850
        %v987 = vpack.c.b16 %v855, %v851
        %v988 = vpack.c.b16 %v856, %v852
        %v989 = vpack.c.b16 %v857, %v853
        %v990 = vpack.c.b16 %v862, %v858
        %v991 = vpack.c.b16 %v863, %v859
        %v992 = vpack.c.b16 %v864, %v860
        %v993 = vpack.c.b16 %v865, %v861
        %1122 = vmatpush.bf16.msra.mxu0 %v894
        %1123 = vmatpush.bf16.msra.mxu0 %v890
        %1124 = vmatpush.bf16.msra.mxu0 %v886
        %1125 = vmatpush.bf16.msra.mxu0 %v882
        %1126 = vmatpush.bf16.msra.mxu0 %v878
        %1127 = vmatpush.bf16.msra.mxu0 %v874
        %1128 = vmatpush.bf16.msra.mxu0 %v870
        %1129 = vmatpush.bf16.msra.mxu0 %v866
        %1130 = vmatmul.bf16.gmra.mxu0 %v474
        %v1131 = vpop.f32.mrf.mxu0
        %v1132 = vadd.f32 %v454, %v1131
        %v1133 = vpop.f32.mrf.mxu0
        %v1134 = vadd.f32 %v454, %v1133
        %1135 = vdwg.mxu0
        %1136 = vmatpush.bf16.msra.mxu0 %v926
        %1137 = vmatpush.bf16.msra.mxu0 %v922
        %1138 = vmatpush.bf16.msra.mxu0 %v918
        %1139 = vmatpush.bf16.msra.mxu0 %v914
        %1140 = vmatpush.bf16.msra.mxu0 %v910
        %1141 = vmatpush.bf16.msra.mxu0 %v906
        %1142 = vmatpush.bf16.msra.mxu0 %v902
        %1143 = vmatpush.bf16.msra.mxu0 %v898
        %1144 = vmatmul.bf16.gmra.mxu0 %v475
        %v1145 = vpop.f32.mrf.mxu0
        %v1146 = vadd.f32 %v1132, %v1145
        %v1147 = vpop.f32.mrf.mxu0
        %v1148 = vadd.f32 %v1134, %v1147
        %1149 = vdwg.mxu0
        %1150 = vmatpush.bf16.msra.mxu0 %v958
        %1151 = vmatpush.bf16.msra.mxu0 %v954
        %1152 = vmatpush.bf16.msra.mxu0 %v950
        %1153 = vmatpush.bf16.msra.mxu0 %v946
        %1154 = vmatpush.bf16.msra.mxu0 %v942
        %1155 = vmatpush.bf16.msra.mxu0 %v938
        %1156 = vmatpush.bf16.msra.mxu0 %v934
        %1157 = vmatpush.bf16.msra.mxu0 %v930
        %1158 = vmatmul.bf16.gmra.mxu0 %v476
        %v1159 = vpop.f32.mrf.mxu0
        %v1160 = vadd.f32 %v1146, %v1159
        %v1161 = vpop.f32.mrf.mxu0
        %v1162 = vadd.f32 %v1148, %v1161
        %1163 = vdwg.mxu0
        %1164 = vmatpush.bf16.msra.mxu0 %v990
        %1165 = vmatpush.bf16.msra.mxu0 %v986
        %1166 = vmatpush.bf16.msra.mxu0 %v982
        %1167 = vmatpush.bf16.msra.mxu0 %v978
        %1168 = vmatpush.bf16.msra.mxu0 %v974
        %1169 = vmatpush.bf16.msra.mxu0 %v970
        %1170 = vmatpush.bf16.msra.mxu0 %v966
        %1171 = vmatpush.bf16.msra.mxu0 %v962
        %1172 = vmatmul.bf16.gmra.mxu0 %v477
        %v1173 = vpop.f32.mrf.mxu0
        %v1174 = vadd.f32 %v1160, %v1173
        %v1175 = vpop.f32.mrf.mxu0
        %v1176 = vadd.f32 %v1162, %v1175
        %1177 = vdwg.mxu0
        %1178 = vmatpush.bf16.msra.mxu0 %v895
        %1179 = vmatpush.bf16.msra.mxu0 %v891
        %1180 = vmatpush.bf16.msra.mxu0 %v887
        %1181 = vmatpush.bf16.msra.mxu0 %v883
        %1182 = vmatpush.bf16.msra.mxu0 %v879
        %1183 = vmatpush.bf16.msra.mxu0 %v875
        %1184 = vmatpush.bf16.msra.mxu0 %v871
        %1185 = vmatpush.bf16.msra.mxu0 %v867
        %1186 = vmatmul.bf16.gmra.mxu0 %v474
        %v1187 = vpop.f32.mrf.mxu0
        %v1188 = vadd.f32 %v455, %v1187
        %v1189 = vpop.f32.mrf.mxu0
        %v1190 = vadd.f32 %v455, %v1189
        %1191 = vdwg.mxu0
        %1192 = vmatpush.bf16.msra.mxu0 %v927
        %1193 = vmatpush.bf16.msra.mxu0 %v923
        %1194 = vmatpush.bf16.msra.mxu0 %v919
        %1195 = vmatpush.bf16.msra.mxu0 %v915
        %1196 = vmatpush.bf16.msra.mxu0 %v911
        %1197 = vmatpush.bf16.msra.mxu0 %v907
        %1198 = vmatpush.bf16.msra.mxu0 %v903
        %1199 = vmatpush.bf16.msra.mxu0 %v899
        %1200 = vmatmul.bf16.gmra.mxu0 %v475
        %v1201 = vpop.f32.mrf.mxu0
        %v1202 = vadd.f32 %v1188, %v1201
        %v1203 = vpop.f32.mrf.mxu0
        %v1204 = vadd.f32 %v1190, %v1203
        %1205 = vdwg.mxu0
        %1206 = vmatpush.bf16.msra.mxu0 %v959
        %1207 = vmatpush.bf16.msra.mxu0 %v955
        %1208 = vmatpush.bf16.msra.mxu0 %v951
        %1209 = vmatpush.bf16.msra.mxu0 %v947
        %1210 = vmatpush.bf16.msra.mxu0 %v943
        %1211 = vmatpush.bf16.msra.mxu0 %v939
        %1212 = vmatpush.bf16.msra.mxu0 %v935
        %1213 = vmatpush.bf16.msra.mxu0 %v931
        %1214 = vmatmul.bf16.gmra.mxu0 %v476
        %v1215 = vpop.f32.mrf.mxu0
        %v1216 = vadd.f32 %v1202, %v1215
        %v1217 = vpop.f32.mrf.mxu0
        %v1218 = vadd.f32 %v1204, %v1217
        %1219 = vdwg.mxu0
        %1220 = vmatpush.bf16.msra.mxu0 %v991
        %1221 = vmatpush.bf16.msra.mxu0 %v987
        %1222 = vmatpush.bf16.msra.mxu0 %v983
        %1223 = vmatpush.bf16.msra.mxu0 %v979
        %1224 = vmatpush.bf16.msra.mxu0 %v975
        %1225 = vmatpush.bf16.msra.mxu0 %v971
        %1226 = vmatpush.bf16.msra.mxu0 %v967
        %1227 = vmatpush.bf16.msra.mxu0 %v963
        %1228 = vmatmul.bf16.gmra.mxu0 %v477
        %v1229 = vpop.f32.mrf.mxu0
        %v1230 = vadd.f32 %v1216, %v1229
        %v1231 = vpop.f32.mrf.mxu0
        %v1232 = vadd.f32 %v1218, %v1231
        %1233 = vdwg.mxu0
        %1234 = vmatpush.bf16.msra.mxu0 %v896
        %1235 = vmatpush.bf16.msra.mxu0 %v892
        %1236 = vmatpush.bf16.msra.mxu0 %v888
        %1237 = vmatpush.bf16.msra.mxu0 %v884
        %1238 = vmatpush.bf16.msra.mxu0 %v880
        %1239 = vmatpush.bf16.msra.mxu0 %v876
        %1240 = vmatpush.bf16.msra.mxu0 %v872
        %1241 = vmatpush.bf16.msra.mxu0 %v868
        %1242 = vmatmul.bf16.gmra.mxu0 %v474
        %v1243 = vpop.f32.mrf.mxu0
        %v1244 = vadd.f32 %v456, %v1243
        %v1245 = vpop.f32.mrf.mxu0
        %v1246 = vadd.f32 %v456, %v1245
        %1247 = vdwg.mxu0
        %1248 = vmatpush.bf16.msra.mxu0 %v928
        %1249 = vmatpush.bf16.msra.mxu0 %v924
        %1250 = vmatpush.bf16.msra.mxu0 %v920
        %1251 = vmatpush.bf16.msra.mxu0 %v916
        %1252 = vmatpush.bf16.msra.mxu0 %v912
        %1253 = vmatpush.bf16.msra.mxu0 %v908
        %1254 = vmatpush.bf16.msra.mxu0 %v904
        %1255 = vmatpush.bf16.msra.mxu0 %v900
        %1256 = vmatmul.bf16.gmra.mxu0 %v475
        %v1257 = vpop.f32.mrf.mxu0
        %v1258 = vadd.f32 %v1244, %v1257
        %v1259 = vpop.f32.mrf.mxu0
        %v1260 = vadd.f32 %v1246, %v1259
        %1261 = vdwg.mxu0
        %1262 = vmatpush.bf16.msra.mxu0 %v960
        %1263 = vmatpush.bf16.msra.mxu0 %v956
        %1264 = vmatpush.bf16.msra.mxu0 %v952
        %1265 = vmatpush.bf16.msra.mxu0 %v948
        %1266 = vmatpush.bf16.msra.mxu0 %v944
        %1267 = vmatpush.bf16.msra.mxu0 %v940
        %1268 = vmatpush.bf16.msra.mxu0 %v936
        %1269 = vmatpush.bf16.msra.mxu0 %v932
        %1270 = vmatmul.bf16.gmra.mxu0 %v476
        %v1271 = vpop.f32.mrf.mxu0
        %v1272 = vadd.f32 %v1258, %v1271
        %v1273 = vpop.f32.mrf.mxu0
        %v1274 = vadd.f32 %v1260, %v1273
        %1275 = vdwg.mxu0
        %1276 = vmatpush.bf16.msra.mxu0 %v992
        %1277 = vmatpush.bf16.msra.mxu0 %v988
        %1278 = vmatpush.bf16.msra.mxu0 %v984
        %1279 = vmatpush.bf16.msra.mxu0 %v980
        %1280 = vmatpush.bf16.msra.mxu0 %v976
        %1281 = vmatpush.bf16.msra.mxu0 %v972
        %1282 = vmatpush.bf16.msra.mxu0 %v968
        %1283 = vmatpush.bf16.msra.mxu0 %v964
        %1284 = vmatmul.bf16.gmra.mxu0 %v477
        %v1285 = vpop.f32.mrf.mxu0
        %v1286 = vadd.f32 %v1272, %v1285
        %v1287 = vpop.f32.mrf.mxu0
        %v1288 = vadd.f32 %v1274, %v1287
        %1289 = vdwg.mxu0
        %1290 = vmatpush.bf16.msra.mxu0 %v897
        %1291 = vmatpush.bf16.msra.mxu0 %v893
        %1292 = vmatpush.bf16.msra.mxu0 %v889
        %1293 = vmatpush.bf16.msra.mxu0 %v885
        %1294 = vmatpush.bf16.msra.mxu0 %v881
        %1295 = vmatpush.bf16.msra.mxu0 %v877
        %1296 = vmatpush.bf16.msra.mxu0 %v873
        %1297 = vmatpush.bf16.msra.mxu0 %v869
        %1298 = vmatmul.bf16.gmra.mxu0 %v474
        %v1299 = vpop.f32.mrf.mxu0
        %v1300 = vadd.f32 %v457, %v1299
        %v1301 = vpop.f32.mrf.mxu0
        %v1302 = vadd.f32 %v457, %v1301
        %1303 = vdwg.mxu0
        %1304 = vmatpush.bf16.msra.mxu0 %v929
        %1305 = vmatpush.bf16.msra.mxu0 %v925
        %1306 = vmatpush.bf16.msra.mxu0 %v921
        %1307 = vmatpush.bf16.msra.mxu0 %v917
        %1308 = vmatpush.bf16.msra.mxu0 %v913
        %1309 = vmatpush.bf16.msra.mxu0 %v909
        %1310 = vmatpush.bf16.msra.mxu0 %v905
        %1311 = vmatpush.bf16.msra.mxu0 %v901
        %1312 = vmatmul.bf16.gmra.mxu0 %v475
        %v1313 = vpop.f32.mrf.mxu0
        %v1314 = vadd.f32 %v1300, %v1313
        %v1315 = vpop.f32.mrf.mxu0
        %v1316 = vadd.f32 %v1302, %v1315
        %1317 = vdwg.mxu0
        %1318 = vmatpush.bf16.msra.mxu0 %v961
        %1319 = vmatpush.bf16.msra.mxu0 %v957
        %1320 = vmatpush.bf16.msra.mxu0 %v953
        %1321 = vmatpush.bf16.msra.mxu0 %v949
        %1322 = vmatpush.bf16.msra.mxu0 %v945
        %1323 = vmatpush.bf16.msra.mxu0 %v941
        %1324 = vmatpush.bf16.msra.mxu0 %v937
        %1325 = vmatpush.bf16.msra.mxu0 %v933
        %1326 = vmatmul.bf16.gmra.mxu0 %v476
        %v1327 = vpop.f32.mrf.mxu0
        %v1328 = vadd.f32 %v1314, %v1327
        %v1329 = vpop.f32.mrf.mxu0
        %v1330 = vadd.f32 %v1316, %v1329
        %1331 = vdwg.mxu0
        %1332 = vmatpush.bf16.msra.mxu0 %v993
        %1333 = vmatpush.bf16.msra.mxu0 %v989
        %1334 = vmatpush.bf16.msra.mxu0 %v985
        %1335 = vmatpush.bf16.msra.mxu0 %v981
        %1336 = vmatpush.bf16.msra.mxu0 %v977
        %1337 = vmatpush.bf16.msra.mxu0 %v973
        %1338 = vmatpush.bf16.msra.mxu0 %v969
        %1339 = vmatpush.bf16.msra.mxu0 %v965
        %1340 = vmatmul.bf16.gmra.mxu0 %v477
        %v1341 = vpop.f32.mrf.mxu0
        %v1342 = vadd.f32 %v1328, %v1341
        %v1343 = vpop.f32.mrf.mxu0
        %v1344 = vadd.f32 %v1330, %v1343
        %1345 = vdwg.mxu0
        %v1346 = vmax.f32 %v1174, 0.0
        %v1347 = vmax.f32 %v1230, 0.0
        %v1348 = vmax.f32 %v1286, 0.0
        %v1349 = vmax.f32 %v1342, 0.0
        %v1350 = vmax.f32 %v1176, 0.0
        %v1351 = vmax.f32 %v1232, 0.0
        %v1352 = vmax.f32 %v1288, 0.0
        %v1353 = vmax.f32 %v1344, 0.0
        %v1354 = vld [vmem:[%s309] sm:$0xff]
        %v1355 = vld [vmem:[%s309 + $0x8] sm:$0xff]
        %v1356 = vld [vmem:[%s309 + $0x10] sm:$0xff]
        %v1357 = vld [vmem:[%s309 + $0x18] sm:$0xff]
        %v1358 = vld [vmem:[%s309 + $0x20] sm:$0xff]
        %v1359 = vld [vmem:[%s309 + $0x28] sm:$0xff]
        %v1360 = vld [vmem:[%s309 + $0x30] sm:$0xff]
        %v1361 = vld [vmem:[%s309 + $0x38] sm:$0xff]
        %v1362 = vld [vmem:[#allocation3] sm:$0xff]
        %v1363 = vld [vmem:[#allocation3 + $0x8] sm:$0xff]
        %v1364 = vld [vmem:[#allocation3 + $0x10] sm:$0xff]
        %v1365 = vld [vmem:[#allocation3 + $0x18] sm:$0xff]
        %v1366 = vld [vmem:[#allocation3 + $0x20] sm:$0xff]
        %v1367 = vld [vmem:[#allocation3 + $0x28] sm:$0xff]
        %v1368 = vld [vmem:[#allocation3 + $0x30] sm:$0xff]
        %v1369 = vld [vmem:[#allocation3 + $0x38] sm:$0xff]
        %v1370 = vld [vmem:[#allocation3 + $0x40] sm:$0xff]
        %v1371 = vld [vmem:[#allocation3 + $0x48] sm:$0xff]
        %v1372 = vld [vmem:[#allocation3 + $0x50] sm:$0xff]
        %v1373 = vld [vmem:[#allocation3 + $0x58] sm:$0xff]
        %v1374 = vld [vmem:[#allocation3 + $0x60] sm:$0xff]
        %v1375 = vld [vmem:[#allocation3 + $0x68] sm:$0xff]
        %v1376 = vld [vmem:[#allocation3 + $0x70] sm:$0xff]
        %v1377 = vld [vmem:[#allocation3 + $0x78] sm:$0xff]
        %v1378 = vld [vmem:[#allocation3 + $0x80] sm:$0xff]
        %v1379 = vld [vmem:[#allocation3 + $0x88] sm:$0xff]
        %v1380 = vld [vmem:[#allocation3 + $0x90] sm:$0xff]
        %v1381 = vld [vmem:[#allocation3 + $0x98] sm:$0xff]
        %v1382 = vld [vmem:[#allocation3 + $0xa0] sm:$0xff]
        %v1383 = vld [vmem:[#allocation3 + $0xa8] sm:$0xff]
        %v1384 = vld [vmem:[#allocation3 + $0xb0] sm:$0xff]
        %v1385 = vld [vmem:[#allocation3 + $0xb8] sm:$0xff]
        %v1386 = vld [vmem:[#allocation3 + $0xc0] sm:$0xff]
        %v1387 = vld [vmem:[#allocation3 + $0xc8] sm:$0xff]
        %v1388 = vld [vmem:[#allocation3 + $0xd0] sm:$0xff]
        %v1389 = vld [vmem:[#allocation3 + $0xd8] sm:$0xff]
        %v1390 = vld [vmem:[#allocation3 + $0xe0] sm:$0xff]
        %v1391 = vld [vmem:[#allocation3 + $0xe8] sm:$0xff]
        %v1392 = vld [vmem:[#allocation3 + $0xf0] sm:$0xff]
        %v1393 = vld [vmem:[#allocation3 + $0xf8] sm:$0xff]
        %v1394 = vld [vmem:[#allocation3 + $0x100] sm:$0xff]
        %v1395 = vld [vmem:[#allocation3 + $0x108] sm:$0xff]
        %v1396 = vld [vmem:[#allocation3 + $0x110] sm:$0xff]
        %v1397 = vld [vmem:[#allocation3 + $0x118] sm:$0xff]
        %v1398 = vld [vmem:[#allocation3 + $0x120] sm:$0xff]
        %v1399 = vld [vmem:[#allocation3 + $0x128] sm:$0xff]
        %v1400 = vld [vmem:[#allocation3 + $0x130] sm:$0xff]
        %v1401 = vld [vmem:[#allocation3 + $0x138] sm:$0xff]
        %v1402 = vld [vmem:[#allocation3 + $0x140] sm:$0xff]
        %v1403 = vld [vmem:[#allocation3 + $0x148] sm:$0xff]
        %v1404 = vld [vmem:[#allocation3 + $0x150] sm:$0xff]
        %v1405 = vld [vmem:[#allocation3 + $0x158] sm:$0xff]
        %v1406 = vld [vmem:[#allocation3 + $0x160] sm:$0xff]
        %v1407 = vld [vmem:[#allocation3 + $0x168] sm:$0xff]
        %v1408 = vld [vmem:[#allocation3 + $0x170] sm:$0xff]
        %v1409 = vld [vmem:[#allocation3 + $0x178] sm:$0xff]
        %v1410 = vld [vmem:[#allocation3 + $0x180] sm:$0xff]
        %v1411 = vld [vmem:[#allocation3 + $0x188] sm:$0xff]
        %v1412 = vld [vmem:[#allocation3 + $0x190] sm:$0xff]
        %v1413 = vld [vmem:[#allocation3 + $0x198] sm:$0xff]
        %v1414 = vld [vmem:[#allocation3 + $0x1a0] sm:$0xff]
        %v1415 = vld [vmem:[#allocation3 + $0x1a8] sm:$0xff]
        %v1416 = vld [vmem:[#allocation3 + $0x1b0] sm:$0xff]
        %v1417 = vld [vmem:[#allocation3 + $0x1b8] sm:$0xff]
        %v1418 = vld [vmem:[#allocation3 + $0x1c0] sm:$0xff]
        %v1419 = vld [vmem:[#allocation3 + $0x1c8] sm:$0xff]
        %v1420 = vld [vmem:[#allocation3 + $0x1d0] sm:$0xff]
        %v1421 = vld [vmem:[#allocation3 + $0x1d8] sm:$0xff]
        %v1422 = vld [vmem:[#allocation3 + $0x1e0] sm:$0xff]
        %v1423 = vld [vmem:[#allocation3 + $0x1e8] sm:$0xff]
        %v1424 = vld [vmem:[#allocation3 + $0x1f0] sm:$0xff]
        %v1425 = vld [vmem:[#allocation3 + $0x1f8] sm:$0xff]
        %v1426 = vld [vmem:[#allocation3 + $0x200] sm:$0xff]
        %v1427 = vld [vmem:[#allocation3 + $0x208] sm:$0xff]
        %v1428 = vld [vmem:[#allocation3 + $0x210] sm:$0xff]
        %v1429 = vld [vmem:[#allocation3 + $0x218] sm:$0xff]
        %v1430 = vld [vmem:[#allocation3 + $0x220] sm:$0xff]
        %v1431 = vld [vmem:[#allocation3 + $0x228] sm:$0xff]
        %v1432 = vld [vmem:[#allocation3 + $0x230] sm:$0xff]
        %v1433 = vld [vmem:[#allocation3 + $0x238] sm:$0xff]
        %v1434 = vld [vmem:[#allocation3 + $0x240] sm:$0xff]
        %v1435 = vld [vmem:[#allocation3 + $0x248] sm:$0xff]
        %v1436 = vld [vmem:[#allocation3 + $0x250] sm:$0xff]
        %v1437 = vld [vmem:[#allocation3 + $0x258] sm:$0xff]
        %v1438 = vld [vmem:[#allocation3 + $0x260] sm:$0xff]
        %v1439 = vld [vmem:[#allocation3 + $0x268] sm:$0xff]
        %v1440 = vld [vmem:[#allocation3 + $0x270] sm:$0xff]
        %v1441 = vld [vmem:[#allocation3 + $0x278] sm:$0xff]
        %v1442 = vld [vmem:[#allocation3 + $0x280] sm:$0xff]
        %v1443 = vld [vmem:[#allocation3 + $0x288] sm:$0xff]
        %v1444 = vld [vmem:[#allocation3 + $0x290] sm:$0xff]
        %v1445 = vld [vmem:[#allocation3 + $0x298] sm:$0xff]
        %v1446 = vld [vmem:[#allocation3 + $0x2a0] sm:$0xff]
        %v1447 = vld [vmem:[#allocation3 + $0x2a8] sm:$0xff]
        %v1448 = vld [vmem:[#allocation3 + $0x2b0] sm:$0xff]
        %v1449 = vld [vmem:[#allocation3 + $0x2b8] sm:$0xff]
        %v1450 = vld [vmem:[#allocation3 + $0x2c0] sm:$0xff]
        %v1451 = vld [vmem:[#allocation3 + $0x2c8] sm:$0xff]
        %v1452 = vld [vmem:[#allocation3 + $0x2d0] sm:$0xff]
        %v1453 = vld [vmem:[#allocation3 + $0x2d8] sm:$0xff]
        %v1454 = vld [vmem:[#allocation3 + $0x2e0] sm:$0xff]
        %v1455 = vld [vmem:[#allocation3 + $0x2e8] sm:$0xff]
        %v1456 = vld [vmem:[#allocation3 + $0x2f0] sm:$0xff]
        %v1457 = vld [vmem:[#allocation3 + $0x2f8] sm:$0xff]
        %v1458 = vld [vmem:[#allocation3 + $0x300] sm:$0xff]
        %v1459 = vld [vmem:[#allocation3 + $0x308] sm:$0xff]
        %v1460 = vld [vmem:[#allocation3 + $0x310] sm:$0xff]
        %v1461 = vld [vmem:[#allocation3 + $0x318] sm:$0xff]
        %v1462 = vld [vmem:[#allocation3 + $0x320] sm:$0xff]
        %v1463 = vld [vmem:[#allocation3 + $0x328] sm:$0xff]
        %v1464 = vld [vmem:[#allocation3 + $0x330] sm:$0xff]
        %v1465 = vld [vmem:[#allocation3 + $0x338] sm:$0xff]
        %v1466 = vld [vmem:[#allocation3 + $0x340] sm:$0xff]
        %v1467 = vld [vmem:[#allocation3 + $0x348] sm:$0xff]
        %v1468 = vld [vmem:[#allocation3 + $0x350] sm:$0xff]
        %v1469 = vld [vmem:[#allocation3 + $0x358] sm:$0xff]
        %v1470 = vld [vmem:[#allocation3 + $0x360] sm:$0xff]
        %v1471 = vld [vmem:[#allocation3 + $0x368] sm:$0xff]
        %v1472 = vld [vmem:[#allocation3 + $0x370] sm:$0xff]
        %v1473 = vld [vmem:[#allocation3 + $0x378] sm:$0xff]
        %v1474 = vld [vmem:[#allocation3 + $0x380] sm:$0xff]
        %v1475 = vld [vmem:[#allocation3 + $0x388] sm:$0xff]
        %v1476 = vld [vmem:[#allocation3 + $0x390] sm:$0xff]
        %v1477 = vld [vmem:[#allocation3 + $0x398] sm:$0xff]
        %v1478 = vld [vmem:[#allocation3 + $0x3a0] sm:$0xff]
        %v1479 = vld [vmem:[#allocation3 + $0x3a8] sm:$0xff]
        %v1480 = vld [vmem:[#allocation3 + $0x3b0] sm:$0xff]
        %v1481 = vld [vmem:[#allocation3 + $0x3b8] sm:$0xff]
        %v1482 = vld [vmem:[#allocation3 + $0x3c0] sm:$0xff]
        %v1483 = vld [vmem:[#allocation3 + $0x3c8] sm:$0xff]
        %v1484 = vld [vmem:[#allocation3 + $0x3d0] sm:$0xff]
        %v1485 = vld [vmem:[#allocation3 + $0x3d8] sm:$0xff]
        %v1486 = vld [vmem:[#allocation3 + $0x3e0] sm:$0xff]
        %v1487 = vld [vmem:[#allocation3 + $0x3e8] sm:$0xff]
        %v1488 = vld [vmem:[#allocation3 + $0x3f0] sm:$0xff]
        %v1489 = vld [vmem:[#allocation3 + $0x3f8] sm:$0xff]
        %v1490 = vld [vmem:[#allocation3 + $0x400] sm:$0xff]
        %v1491 = vld [vmem:[#allocation3 + $0x408] sm:$0xff]
        %v1492 = vld [vmem:[#allocation3 + $0x410] sm:$0xff]
        %v1493 = vld [vmem:[#allocation3 + $0x418] sm:$0xff]
        %v1494 = vld [vmem:[#allocation3 + $0x420] sm:$0xff]
        %v1495 = vld [vmem:[#allocation3 + $0x428] sm:$0xff]
        %v1496 = vld [vmem:[#allocation3 + $0x430] sm:$0xff]
        %v1497 = vld [vmem:[#allocation3 + $0x438] sm:$0xff]
        %v1498 = vld [vmem:[#allocation3 + $0x440] sm:$0xff]
        %v1499 = vld [vmem:[#allocation3 + $0x448] sm:$0xff]
        %v1500 = vld [vmem:[#allocation3 + $0x450] sm:$0xff]
        %v1501 = vld [vmem:[#allocation3 + $0x458] sm:$0xff]
        %v1502 = vld [vmem:[#allocation3 + $0x460] sm:$0xff]
        %v1503 = vld [vmem:[#allocation3 + $0x468] sm:$0xff]
        %v1504 = vld [vmem:[#allocation3 + $0x470] sm:$0xff]
        %v1505 = vld [vmem:[#allocation3 + $0x478] sm:$0xff]
        %v1506 = vld [vmem:[#allocation3 + $0x480] sm:$0xff]
        %v1507 = vld [vmem:[#allocation3 + $0x488] sm:$0xff]
        %v1508 = vld [vmem:[#allocation3 + $0x490] sm:$0xff]
        %v1509 = vld [vmem:[#allocation3 + $0x498] sm:$0xff]
        %v1510 = vld [vmem:[#allocation3 + $0x4a0] sm:$0xff]
        %v1511 = vld [vmem:[#allocation3 + $0x4a8] sm:$0xff]
        %v1512 = vld [vmem:[#allocation3 + $0x4b0] sm:$0xff]
        %v1513 = vld [vmem:[#allocation3 + $0x4b8] sm:$0xff]
        %v1514 = vld [vmem:[#allocation3 + $0x4c0] sm:$0xff]
        %v1515 = vld [vmem:[#allocation3 + $0x4c8] sm:$0xff]
        %v1516 = vld [vmem:[#allocation3 + $0x4d0] sm:$0xff]
        %v1517 = vld [vmem:[#allocation3 + $0x4d8] sm:$0xff]
        %v1518 = vld [vmem:[#allocation3 + $0x4e0] sm:$0xff]
        %v1519 = vld [vmem:[#allocation3 + $0x4e8] sm:$0xff]
        %v1520 = vld [vmem:[#allocation3 + $0x4f0] sm:$0xff]
        %v1521 = vld [vmem:[#allocation3 + $0x4f8] sm:$0xff]
        %v1522 = vld [vmem:[#allocation3 + $0x500] sm:$0xff]
        %v1523 = vld [vmem:[#allocation3 + $0x508] sm:$0xff]
        %v1524 = vld [vmem:[#allocation3 + $0x510] sm:$0xff]
        %v1525 = vld [vmem:[#allocation3 + $0x518] sm:$0xff]
        %v1526 = vld [vmem:[#allocation3 + $0x520] sm:$0xff]
        %v1527 = vld [vmem:[#allocation3 + $0x528] sm:$0xff]
        %v1528 = vld [vmem:[#allocation3 + $0x530] sm:$0xff]
        %v1529 = vld [vmem:[#allocation3 + $0x538] sm:$0xff]
        %v1530 = vld [vmem:[#allocation3 + $0x540] sm:$0xff]
        %v1531 = vld [vmem:[#allocation3 + $0x548] sm:$0xff]
        %v1532 = vld [vmem:[#allocation3 + $0x550] sm:$0xff]
        %v1533 = vld [vmem:[#allocation3 + $0x558] sm:$0xff]
        %v1534 = vld [vmem:[#allocation3 + $0x560] sm:$0xff]
        %v1535 = vld [vmem:[#allocation3 + $0x568] sm:$0xff]
        %v1536 = vld [vmem:[#allocation3 + $0x570] sm:$0xff]
        %v1537 = vld [vmem:[#allocation3 + $0x578] sm:$0xff]
        %v1538 = vld [vmem:[#allocation3 + $0x580] sm:$0xff]
        %v1539 = vld [vmem:[#allocation3 + $0x588] sm:$0xff]
        %v1540 = vld [vmem:[#allocation3 + $0x590] sm:$0xff]
        %v1541 = vld [vmem:[#allocation3 + $0x598] sm:$0xff]
        %v1542 = vld [vmem:[#allocation3 + $0x5a0] sm:$0xff]
        %v1543 = vld [vmem:[#allocation3 + $0x5a8] sm:$0xff]
        %v1544 = vld [vmem:[#allocation3 + $0x5b0] sm:$0xff]
        %v1545 = vld [vmem:[#allocation3 + $0x5b8] sm:$0xff]
        %v1546 = vld [vmem:[#allocation3 + $0x5c0] sm:$0xff]
        %v1547 = vld [vmem:[#allocation3 + $0x5c8] sm:$0xff]
        %v1548 = vld [vmem:[#allocation3 + $0x5d0] sm:$0xff]
        %v1549 = vld [vmem:[#allocation3 + $0x5d8] sm:$0xff]
        %v1550 = vld [vmem:[#allocation3 + $0x5e0] sm:$0xff]
        %v1551 = vld [vmem:[#allocation3 + $0x5e8] sm:$0xff]
        %v1552 = vld [vmem:[#allocation3 + $0x5f0] sm:$0xff]
        %v1553 = vld [vmem:[#allocation3 + $0x5f8] sm:$0xff]
        %v1554 = vld [vmem:[#allocation3 + $0x600] sm:$0xff]
        %v1555 = vld [vmem:[#allocation3 + $0x608] sm:$0xff]
        %v1556 = vld [vmem:[#allocation3 + $0x610] sm:$0xff]
        %v1557 = vld [vmem:[#allocation3 + $0x618] sm:$0xff]
        %v1558 = vld [vmem:[#allocation3 + $0x620] sm:$0xff]
        %v1559 = vld [vmem:[#allocation3 + $0x628] sm:$0xff]
        %v1560 = vld [vmem:[#allocation3 + $0x630] sm:$0xff]
        %v1561 = vld [vmem:[#allocation3 + $0x638] sm:$0xff]
        %v1562 = vld [vmem:[#allocation3 + $0x640] sm:$0xff]
        %v1563 = vld [vmem:[#allocation3 + $0x648] sm:$0xff]
        %v1564 = vld [vmem:[#allocation3 + $0x650] sm:$0xff]
        %v1565 = vld [vmem:[#allocation3 + $0x658] sm:$0xff]
        %v1566 = vld [vmem:[#allocation3 + $0x660] sm:$0xff]
        %v1567 = vld [vmem:[#allocation3 + $0x668] sm:$0xff]
        %v1568 = vld [vmem:[#allocation3 + $0x670] sm:$0xff]
        %v1569 = vld [vmem:[#allocation3 + $0x678] sm:$0xff]
        %v1570 = vld [vmem:[#allocation3 + $0x680] sm:$0xff]
        %v1571 = vld [vmem:[#allocation3 + $0x688] sm:$0xff]
        %v1572 = vld [vmem:[#allocation3 + $0x690] sm:$0xff]
        %v1573 = vld [vmem:[#allocation3 + $0x698] sm:$0xff]
        %v1574 = vld [vmem:[#allocation3 + $0x6a0] sm:$0xff]
        %v1575 = vld [vmem:[#allocation3 + $0x6a8] sm:$0xff]
        %v1576 = vld [vmem:[#allocation3 + $0x6b0] sm:$0xff]
        %v1577 = vld [vmem:[#allocation3 + $0x6b8] sm:$0xff]
        %v1578 = vld [vmem:[#allocation3 + $0x6c0] sm:$0xff]
        %v1579 = vld [vmem:[#allocation3 + $0x6c8] sm:$0xff]
        %v1580 = vld [vmem:[#allocation3 + $0x6d0] sm:$0xff]
        %v1581 = vld [vmem:[#allocation3 + $0x6d8] sm:$0xff]
        %v1582 = vld [vmem:[#allocation3 + $0x6e0] sm:$0xff]
        %v1583 = vld [vmem:[#allocation3 + $0x6e8] sm:$0xff]
        %v1584 = vld [vmem:[#allocation3 + $0x6f0] sm:$0xff]
        %v1585 = vld [vmem:[#allocation3 + $0x6f8] sm:$0xff]
        %v1586 = vld [vmem:[#allocation3 + $0x700] sm:$0xff]
        %v1587 = vld [vmem:[#allocation3 + $0x708] sm:$0xff]
        %v1588 = vld [vmem:[#allocation3 + $0x710] sm:$0xff]
        %v1589 = vld [vmem:[#allocation3 + $0x718] sm:$0xff]
        %v1590 = vld [vmem:[#allocation3 + $0x720] sm:$0xff]
        %v1591 = vld [vmem:[#allocation3 + $0x728] sm:$0xff]
        %v1592 = vld [vmem:[#allocation3 + $0x730] sm:$0xff]
        %v1593 = vld [vmem:[#allocation3 + $0x738] sm:$0xff]
        %v1594 = vld [vmem:[#allocation3 + $0x740] sm:$0xff]
        %v1595 = vld [vmem:[#allocation3 + $0x748] sm:$0xff]
        %v1596 = vld [vmem:[#allocation3 + $0x750] sm:$0xff]
        %v1597 = vld [vmem:[#allocation3 + $0x758] sm:$0xff]
        %v1598 = vld [vmem:[#allocation3 + $0x760] sm:$0xff]
        %v1599 = vld [vmem:[#allocation3 + $0x768] sm:$0xff]
        %v1600 = vld [vmem:[#allocation3 + $0x770] sm:$0xff]
        %v1601 = vld [vmem:[#allocation3 + $0x778] sm:$0xff]
        %v1602 = vld [vmem:[#allocation3 + $0x780] sm:$0xff]
        %v1603 = vld [vmem:[#allocation3 + $0x788] sm:$0xff]
        %v1604 = vld [vmem:[#allocation3 + $0x790] sm:$0xff]
        %v1605 = vld [vmem:[#allocation3 + $0x798] sm:$0xff]
        %v1606 = vld [vmem:[#allocation3 + $0x7a0] sm:$0xff]
        %v1607 = vld [vmem:[#allocation3 + $0x7a8] sm:$0xff]
        %v1608 = vld [vmem:[#allocation3 + $0x7b0] sm:$0xff]
        %v1609 = vld [vmem:[#allocation3 + $0x7b8] sm:$0xff]
        %v1610 = vld [vmem:[#allocation3 + $0x7c0] sm:$0xff]
        %v1611 = vld [vmem:[#allocation3 + $0x7c8] sm:$0xff]
        %v1612 = vld [vmem:[#allocation3 + $0x7d0] sm:$0xff]
        %v1613 = vld [vmem:[#allocation3 + $0x7d8] sm:$0xff]
        %v1614 = vld [vmem:[#allocation3 + $0x7e0] sm:$0xff]
        %v1615 = vld [vmem:[#allocation3 + $0x7e8] sm:$0xff]
        %v1616 = vld [vmem:[#allocation3 + $0x7f0] sm:$0xff]
        %v1617 = vld [vmem:[#allocation3 + $0x7f8] sm:$0xff]
        %v1619 = vperm.slane %v319, 0
        %v1620 = vperm.slane %v319, 1
        %v1621 = vperm.slane %v319, 2
        %v1622 = vperm.slane %v319, 3
        %v1635 = vunpack.c.l.b16 %v1354
        %v1636 = vunpack.c.h.b16 %v1354
        %v1637 = vunpack.c.l.b16 %v1355
        %v1638 = vunpack.c.h.b16 %v1355
        %v1639 = vunpack.c.l.b16 %v1356
        %v1640 = vunpack.c.h.b16 %v1356
        %v1641 = vunpack.c.l.b16 %v1357
        %v1642 = vunpack.c.h.b16 %v1357
        %v1643 = vunpack.c.l.b16 %v1358
        %v1644 = vunpack.c.h.b16 %v1358
        %v1645 = vunpack.c.l.b16 %v1359
        %v1646 = vunpack.c.h.b16 %v1359
        %v1647 = vunpack.c.l.b16 %v1360
        %v1648 = vunpack.c.h.b16 %v1360
        %v1649 = vunpack.c.l.b16 %v1361
        %v1650 = vunpack.c.h.b16 %v1361
        %v1651 = vpack.c.b16 %v1643, %v1635
        %v1652 = vpack.c.b16 %v1644, %v1636
        %v1653 = vpack.c.b16 %v1645, %v1637
        %v1654 = vpack.c.b16 %v1646, %v1638
        %v1655 = vpack.c.b16 %v1647, %v1639
        %v1656 = vpack.c.b16 %v1648, %v1640
        %v1657 = vpack.c.b16 %v1649, %v1641
        %v1658 = vpack.c.b16 %v1650, %v1642
        %v1923 = vunpack.c.l.b16 %v1362
        %v1924 = vunpack.c.h.b16 %v1362
        %v1925 = vunpack.c.l.b16 %v1363
        %v1926 = vunpack.c.h.b16 %v1363
        %v1927 = vunpack.c.l.b16 %v1364
        %v1928 = vunpack.c.h.b16 %v1364
        %v1929 = vunpack.c.l.b16 %v1365
        %v1930 = vunpack.c.h.b16 %v1365
        %v1931 = vunpack.c.l.b16 %v1366
        %v1932 = vunpack.c.h.b16 %v1366
        %v1933 = vunpack.c.l.b16 %v1367
        %v1934 = vunpack.c.h.b16 %v1367
        %v1935 = vunpack.c.l.b16 %v1368
        %v1936 = vunpack.c.h.b16 %v1368
        %v1937 = vunpack.c.l.b16 %v1369
        %v1938 = vunpack.c.h.b16 %v1369
        %v1939 = vunpack.c.l.b16 %v1370
        %v1940 = vunpack.c.h.b16 %v1370
        %v1941 = vunpack.c.l.b16 %v1371
        %v1942 = vunpack.c.h.b16 %v1371
        %v1943 = vunpack.c.l.b16 %v1372
        %v1944 = vunpack.c.h.b16 %v1372
        %v1945 = vunpack.c.l.b16 %v1373
        %v1946 = vunpack.c.h.b16 %v1373
        %v1947 = vunpack.c.l.b16 %v1374
        %v1948 = vunpack.c.h.b16 %v1374
        %v1949 = vunpack.c.l.b16 %v1375
        %v1950 = vunpack.c.h.b16 %v1375
        %v1951 = vunpack.c.l.b16 %v1376
        %v1952 = vunpack.c.h.b16 %v1376
        %v1953 = vunpack.c.l.b16 %v1377
        %v1954 = vunpack.c.h.b16 %v1377
        %v1955 = vunpack.c.l.b16 %v1378
        %v1956 = vunpack.c.h.b16 %v1378
        %v1957 = vunpack.c.l.b16 %v1379
        %v1958 = vunpack.c.h.b16 %v1379
        %v1959 = vunpack.c.l.b16 %v1380
        %v1960 = vunpack.c.h.b16 %v1380
        %v1961 = vunpack.c.l.b16 %v1381
        %v1962 = vunpack.c.h.b16 %v1381
        %v1963 = vunpack.c.l.b16 %v1382
        %v1964 = vunpack.c.h.b16 %v1382
        %v1965 = vunpack.c.l.b16 %v1383
        %v1966 = vunpack.c.h.b16 %v1383
        %v1967 = vunpack.c.l.b16 %v1384
        %v1968 = vunpack.c.h.b16 %v1384
        %v1969 = vunpack.c.l.b16 %v1385
        %v1970 = vunpack.c.h.b16 %v1385
        %v1971 = vunpack.c.l.b16 %v1386
        %v1972 = vunpack.c.h.b16 %v1386
        %v1973 = vunpack.c.l.b16 %v1387
        %v1974 = vunpack.c.h.b16 %v1387
        %v1975 = vunpack.c.l.b16 %v1388
        %v1976 = vunpack.c.h.b16 %v1388
        %v1977 = vunpack.c.l.b16 %v1389
        %v1978 = vunpack.c.h.b16 %v1389
        %v1979 = vunpack.c.l.b16 %v1390
        %v1980 = vunpack.c.h.b16 %v1390
        %v1981 = vunpack.c.l.b16 %v1391
        %v1982 = vunpack.c.h.b16 %v1391
        %v1983 = vunpack.c.l.b16 %v1392
        %v1984 = vunpack.c.h.b16 %v1392
        %v1985 = vunpack.c.l.b16 %v1393
        %v1986 = vunpack.c.h.b16 %v1393
        %v1987 = vunpack.c.l.b16 %v1394
        %v1988 = vunpack.c.h.b16 %v1394
        %v1989 = vunpack.c.l.b16 %v1395
        %v1990 = vunpack.c.h.b16 %v1395
        %v1991 = vunpack.c.l.b16 %v1396
        %v1992 = vunpack.c.h.b16 %v1396
        %v1993 = vunpack.c.l.b16 %v1397
        %v1994 = vunpack.c.h.b16 %v1397
        %v1995 = vunpack.c.l.b16 %v1398
        %v1996 = vunpack.c.h.b16 %v1398
        %v1997 = vunpack.c.l.b16 %v1399
        %v1998 = vunpack.c.h.b16 %v1399
        %v1999 = vunpack.c.l.b16 %v1400
        %v2000 = vunpack.c.h.b16 %v1400
        %v2001 = vunpack.c.l.b16 %v1401
        %v2002 = vunpack.c.h.b16 %v1401
        %v2003 = vunpack.c.l.b16 %v1402
        %v2004 = vunpack.c.h.b16 %v1402
        %v2005 = vunpack.c.l.b16 %v1403
        %v2006 = vunpack.c.h.b16 %v1403
        %v2007 = vunpack.c.l.b16 %v1404
        %v2008 = vunpack.c.h.b16 %v1404
        %v2009 = vunpack.c.l.b16 %v1405
        %v2010 = vunpack.c.h.b16 %v1405
        %v2011 = vunpack.c.l.b16 %v1406
        %v2012 = vunpack.c.h.b16 %v1406
        %v2013 = vunpack.c.l.b16 %v1407
        %v2014 = vunpack.c.h.b16 %v1407
        %v2015 = vunpack.c.l.b16 %v1408
        %v2016 = vunpack.c.h.b16 %v1408
        %v2017 = vunpack.c.l.b16 %v1409
        %v2018 = vunpack.c.h.b16 %v1409
        %v2019 = vunpack.c.l.b16 %v1410
        %v2020 = vunpack.c.h.b16 %v1410
        %v2021 = vunpack.c.l.b16 %v1411
        %v2022 = vunpack.c.h.b16 %v1411
        %v2023 = vunpack.c.l.b16 %v1412
        %v2024 = vunpack.c.h.b16 %v1412
        %v2025 = vunpack.c.l.b16 %v1413
        %v2026 = vunpack.c.h.b16 %v1413
        %v2027 = vunpack.c.l.b16 %v1414
        %v2028 = vunpack.c.h.b16 %v1414
        %v2029 = vunpack.c.l.b16 %v1415
        %v2030 = vunpack.c.h.b16 %v1415
        %v2031 = vunpack.c.l.b16 %v1416
        %v2032 = vunpack.c.h.b16 %v1416
        %v2033 = vunpack.c.l.b16 %v1417
        %v2034 = vunpack.c.h.b16 %v1417
        %v2035 = vunpack.c.l.b16 %v1418
        %v2036 = vunpack.c.h.b16 %v1418
        %v2037 = vunpack.c.l.b16 %v1419
        %v2038 = vunpack.c.h.b16 %v1419
        %v2039 = vunpack.c.l.b16 %v1420
        %v2040 = vunpack.c.h.b16 %v1420
        %v2041 = vunpack.c.l.b16 %v1421
        %v2042 = vunpack.c.h.b16 %v1421
        %v2043 = vunpack.c.l.b16 %v1422
        %v2044 = vunpack.c.h.b16 %v1422
        %v2045 = vunpack.c.l.b16 %v1423
        %v2046 = vunpack.c.h.b16 %v1423
        %v2047 = vunpack.c.l.b16 %v1424
        %v2048 = vunpack.c.h.b16 %v1424
        %v2049 = vunpack.c.l.b16 %v1425
        %v2050 = vunpack.c.h.b16 %v1425
        %v2051 = vunpack.c.l.b16 %v1426
        %v2052 = vunpack.c.h.b16 %v1426
        %v2053 = vunpack.c.l.b16 %v1427
        %v2054 = vunpack.c.h.b16 %v1427
        %v2055 = vunpack.c.l.b16 %v1428
        %v2056 = vunpack.c.h.b16 %v1428
        %v2057 = vunpack.c.l.b16 %v1429
        %v2058 = vunpack.c.h.b16 %v1429
        %v2059 = vunpack.c.l.b16 %v1430
        %v2060 = vunpack.c.h.b16 %v1430
        %v2061 = vunpack.c.l.b16 %v1431
        %v2062 = vunpack.c.h.b16 %v1431
        %v2063 = vunpack.c.l.b16 %v1432
        %v2064 = vunpack.c.h.b16 %v1432
        %v2065 = vunpack.c.l.b16 %v1433
        %v2066 = vunpack.c.h.b16 %v1433
        %v2067 = vunpack.c.l.b16 %v1434
        %v2068 = vunpack.c.h.b16 %v1434
        %v2069 = vunpack.c.l.b16 %v1435
        %v2070 = vunpack.c.h.b16 %v1435
        %v2071 = vunpack.c.l.b16 %v1436
        %v2072 = vunpack.c.h.b16 %v1436
        %v2073 = vunpack.c.l.b16 %v1437
        %v2074 = vunpack.c.h.b16 %v1437
        %v2075 = vunpack.c.l.b16 %v1438
        %v2076 = vunpack.c.h.b16 %v1438
        %v2077 = vunpack.c.l.b16 %v1439
        %v2078 = vunpack.c.h.b16 %v1439
        %v2079 = vunpack.c.l.b16 %v1440
        %v2080 = vunpack.c.h.b16 %v1440
        %v2081 = vunpack.c.l.b16 %v1441
        %v2082 = vunpack.c.h.b16 %v1441
        %v2083 = vunpack.c.l.b16 %v1442
        %v2084 = vunpack.c.h.b16 %v1442
        %v2085 = vunpack.c.l.b16 %v1443
        %v2086 = vunpack.c.h.b16 %v1443
        %v2087 = vunpack.c.l.b16 %v1444
        %v2088 = vunpack.c.h.b16 %v1444
        %v2089 = vunpack.c.l.b16 %v1445
        %v2090 = vunpack.c.h.b16 %v1445
        %v2091 = vunpack.c.l.b16 %v1446
        %v2092 = vunpack.c.h.b16 %v1446
        %v2093 = vunpack.c.l.b16 %v1447
        %v2094 = vunpack.c.h.b16 %v1447
        %v2095 = vunpack.c.l.b16 %v1448
        %v2096 = vunpack.c.h.b16 %v1448
        %v2097 = vunpack.c.l.b16 %v1449
        %v2098 = vunpack.c.h.b16 %v1449
        %v2099 = vunpack.c.l.b16 %v1450
        %v2100 = vunpack.c.h.b16 %v1450
        %v2101 = vunpack.c.l.b16 %v1451
        %v2102 = vunpack.c.h.b16 %v1451
        %v2103 = vunpack.c.l.b16 %v1452
        %v2104 = vunpack.c.h.b16 %v1452
        %v2105 = vunpack.c.l.b16 %v1453
        %v2106 = vunpack.c.h.b16 %v1453
        %v2107 = vunpack.c.l.b16 %v1454
        %v2108 = vunpack.c.h.b16 %v1454
        %v2109 = vunpack.c.l.b16 %v1455
        %v2110 = vunpack.c.h.b16 %v1455
        %v2111 = vunpack.c.l.b16 %v1456
        %v2112 = vunpack.c.h.b16 %v1456
        %v2113 = vunpack.c.l.b16 %v1457
        %v2114 = vunpack.c.h.b16 %v1457
        %v2115 = vunpack.c.l.b16 %v1458
        %v2116 = vunpack.c.h.b16 %v1458
        %v2117 = vunpack.c.l.b16 %v1459
        %v2118 = vunpack.c.h.b16 %v1459
        %v2119 = vunpack.c.l.b16 %v1460
        %v2120 = vunpack.c.h.b16 %v1460
        %v2121 = vunpack.c.l.b16 %v1461
        %v2122 = vunpack.c.h.b16 %v1461
        %v2123 = vunpack.c.l.b16 %v1462
        %v2124 = vunpack.c.h.b16 %v1462
        %v2125 = vunpack.c.l.b16 %v1463
        %v2126 = vunpack.c.h.b16 %v1463
        %v2127 = vunpack.c.l.b16 %v1464
        %v2128 = vunpack.c.h.b16 %v1464
        %v2129 = vunpack.c.l.b16 %v1465
        %v2130 = vunpack.c.h.b16 %v1465
        %v2131 = vunpack.c.l.b16 %v1466
        %v2132 = vunpack.c.h.b16 %v1466
        %v2133 = vunpack.c.l.b16 %v1467
        %v2134 = vunpack.c.h.b16 %v1467
        %v2135 = vunpack.c.l.b16 %v1468
        %v2136 = vunpack.c.h.b16 %v1468
        %v2137 = vunpack.c.l.b16 %v1469
        %v2138 = vunpack.c.h.b16 %v1469
        %v2139 = vunpack.c.l.b16 %v1470
        %v2140 = vunpack.c.h.b16 %v1470
        %v2141 = vunpack.c.l.b16 %v1471
        %v2142 = vunpack.c.h.b16 %v1471
        %v2143 = vunpack.c.l.b16 %v1472
        %v2144 = vunpack.c.h.b16 %v1472
        %v2145 = vunpack.c.l.b16 %v1473
        %v2146 = vunpack.c.h.b16 %v1473
        %v2147 = vunpack.c.l.b16 %v1474
        %v2148 = vunpack.c.h.b16 %v1474
        %v2149 = vunpack.c.l.b16 %v1475
        %v2150 = vunpack.c.h.b16 %v1475
        %v2151 = vunpack.c.l.b16 %v1476
        %v2152 = vunpack.c.h.b16 %v1476
        %v2153 = vunpack.c.l.b16 %v1477
        %v2154 = vunpack.c.h.b16 %v1477
        %v2155 = vunpack.c.l.b16 %v1478
        %v2156 = vunpack.c.h.b16 %v1478
        %v2157 = vunpack.c.l.b16 %v1479
        %v2158 = vunpack.c.h.b16 %v1479
        %v2159 = vunpack.c.l.b16 %v1480
        %v2160 = vunpack.c.h.b16 %v1480
        %v2161 = vunpack.c.l.b16 %v1481
        %v2162 = vunpack.c.h.b16 %v1481
        %v2163 = vunpack.c.l.b16 %v1482
        %v2164 = vunpack.c.h.b16 %v1482
        %v2165 = vunpack.c.l.b16 %v1483
        %v2166 = vunpack.c.h.b16 %v1483
        %v2167 = vunpack.c.l.b16 %v1484
        %v2168 = vunpack.c.h.b16 %v1484
        %v2169 = vunpack.c.l.b16 %v1485
        %v2170 = vunpack.c.h.b16 %v1485
        %v2171 = vunpack.c.l.b16 %v1486
        %v2172 = vunpack.c.h.b16 %v1486
        %v2173 = vunpack.c.l.b16 %v1487
        %v2174 = vunpack.c.h.b16 %v1487
        %v2175 = vunpack.c.l.b16 %v1488
        %v2176 = vunpack.c.h.b16 %v1488
        %v2177 = vunpack.c.l.b16 %v1489
        %v2178 = vunpack.c.h.b16 %v1489
        %v2179 = vunpack.c.l.b16 %v1490
        %v2180 = vunpack.c.h.b16 %v1490
        %v2181 = vunpack.c.l.b16 %v1491
        %v2182 = vunpack.c.h.b16 %v1491
        %v2183 = vunpack.c.l.b16 %v1492
        %v2184 = vunpack.c.h.b16 %v1492
        %v2185 = vunpack.c.l.b16 %v1493
        %v2186 = vunpack.c.h.b16 %v1493
        %v2187 = vunpack.c.l.b16 %v1494
        %v2188 = vunpack.c.h.b16 %v1494
        %v2189 = vunpack.c.l.b16 %v1495
        %v2190 = vunpack.c.h.b16 %v1495
        %v2191 = vunpack.c.l.b16 %v1496
        %v2192 = vunpack.c.h.b16 %v1496
        %v2193 = vunpack.c.l.b16 %v1497
        %v2194 = vunpack.c.h.b16 %v1497
        %v2195 = vunpack.c.l.b16 %v1498
        %v2196 = vunpack.c.h.b16 %v1498
        %v2197 = vunpack.c.l.b16 %v1499
        %v2198 = vunpack.c.h.b16 %v1499
        %v2199 = vunpack.c.l.b16 %v1500
        %v2200 = vunpack.c.h.b16 %v1500
        %v2201 = vunpack.c.l.b16 %v1501
        %v2202 = vunpack.c.h.b16 %v1501
        %v2203 = vunpack.c.l.b16 %v1502
        %v2204 = vunpack.c.h.b16 %v1502
        %v2205 = vunpack.c.l.b16 %v1503
        %v2206 = vunpack.c.h.b16 %v1503
        %v2207 = vunpack.c.l.b16 %v1504
        %v2208 = vunpack.c.h.b16 %v1504
        %v2209 = vunpack.c.l.b16 %v1505
        %v2210 = vunpack.c.h.b16 %v1505
        %v2211 = vunpack.c.l.b16 %v1506
        %v2212 = vunpack.c.h.b16 %v1506
        %v2213 = vunpack.c.l.b16 %v1507
        %v2214 = vunpack.c.h.b16 %v1507
        %v2215 = vunpack.c.l.b16 %v1508
        %v2216 = vunpack.c.h.b16 %v1508
        %v2217 = vunpack.c.l.b16 %v1509
        %v2218 = vunpack.c.h.b16 %v1509
        %v2219 = vunpack.c.l.b16 %v1510
        %v2220 = vunpack.c.h.b16 %v1510
        %v2221 = vunpack.c.l.b16 %v1511
        %v2222 = vunpack.c.h.b16 %v1511
        %v2223 = vunpack.c.l.b16 %v1512
        %v2224 = vunpack.c.h.b16 %v1512
        %v2225 = vunpack.c.l.b16 %v1513
        %v2226 = vunpack.c.h.b16 %v1513
        %v2227 = vunpack.c.l.b16 %v1514
        %v2228 = vunpack.c.h.b16 %v1514
        %v2229 = vunpack.c.l.b16 %v1515
        %v2230 = vunpack.c.h.b16 %v1515
        %v2231 = vunpack.c.l.b16 %v1516
        %v2232 = vunpack.c.h.b16 %v1516
        %v2233 = vunpack.c.l.b16 %v1517
        %v2234 = vunpack.c.h.b16 %v1517
        %v2235 = vunpack.c.l.b16 %v1518
        %v2236 = vunpack.c.h.b16 %v1518
        %v2237 = vunpack.c.l.b16 %v1519
        %v2238 = vunpack.c.h.b16 %v1519
        %v2239 = vunpack.c.l.b16 %v1520
        %v2240 = vunpack.c.h.b16 %v1520
        %v2241 = vunpack.c.l.b16 %v1521
        %v2242 = vunpack.c.h.b16 %v1521
        %v2243 = vunpack.c.l.b16 %v1522
        %v2244 = vunpack.c.h.b16 %v1522
        %v2245 = vunpack.c.l.b16 %v1523
        %v2246 = vunpack.c.h.b16 %v1523
        %v2247 = vunpack.c.l.b16 %v1524
        %v2248 = vunpack.c.h.b16 %v1524
        %v2249 = vunpack.c.l.b16 %v1525
        %v2250 = vunpack.c.h.b16 %v1525
        %v2251 = vunpack.c.l.b16 %v1526
        %v2252 = vunpack.c.h.b16 %v1526
        %v2253 = vunpack.c.l.b16 %v1527
        %v2254 = vunpack.c.h.b16 %v1527
        %v2255 = vunpack.c.l.b16 %v1528
        %v2256 = vunpack.c.h.b16 %v1528
        %v2257 = vunpack.c.l.b16 %v1529
        %v2258 = vunpack.c.h.b16 %v1529
        %v2259 = vunpack.c.l.b16 %v1530
        %v2260 = vunpack.c.h.b16 %v1530
        %v2261 = vunpack.c.l.b16 %v1531
        %v2262 = vunpack.c.h.b16 %v1531
        %v2263 = vunpack.c.l.b16 %v1532
        %v2264 = vunpack.c.h.b16 %v1532
        %v2265 = vunpack.c.l.b16 %v1533
        %v2266 = vunpack.c.h.b16 %v1533
        %v2267 = vunpack.c.l.b16 %v1534
        %v2268 = vunpack.c.h.b16 %v1534
        %v2269 = vunpack.c.l.b16 %v1535
        %v2270 = vunpack.c.h.b16 %v1535
        %v2271 = vunpack.c.l.b16 %v1536
        %v2272 = vunpack.c.h.b16 %v1536
        %v2273 = vunpack.c.l.b16 %v1537
        %v2274 = vunpack.c.h.b16 %v1537
        %v2275 = vunpack.c.l.b16 %v1538
        %v2276 = vunpack.c.h.b16 %v1538
        %v2277 = vunpack.c.l.b16 %v1539
        %v2278 = vunpack.c.h.b16 %v1539
        %v2279 = vunpack.c.l.b16 %v1540
        %v2280 = vunpack.c.h.b16 %v1540
        %v2281 = vunpack.c.l.b16 %v1541
        %v2282 = vunpack.c.h.b16 %v1541
        %v2283 = vunpack.c.l.b16 %v1542
        %v2284 = vunpack.c.h.b16 %v1542
        %v2285 = vunpack.c.l.b16 %v1543
        %v2286 = vunpack.c.h.b16 %v1543
        %v2287 = vunpack.c.l.b16 %v1544
        %v2288 = vunpack.c.h.b16 %v1544
        %v2289 = vunpack.c.l.b16 %v1545
        %v2290 = vunpack.c.h.b16 %v1545
        %v2291 = vunpack.c.l.b16 %v1546
        %v2292 = vunpack.c.h.b16 %v1546
        %v2293 = vunpack.c.l.b16 %v1547
        %v2294 = vunpack.c.h.b16 %v1547
        %v2295 = vunpack.c.l.b16 %v1548
        %v2296 = vunpack.c.h.b16 %v1548
        %v2297 = vunpack.c.l.b16 %v1549
        %v2298 = vunpack.c.h.b16 %v1549
        %v2299 = vunpack.c.l.b16 %v1550
        %v2300 = vunpack.c.h.b16 %v1550
        %v2301 = vunpack.c.l.b16 %v1551
        %v2302 = vunpack.c.h.b16 %v1551
        %v2303 = vunpack.c.l.b16 %v1552
        %v2304 = vunpack.c.h.b16 %v1552
        %v2305 = vunpack.c.l.b16 %v1553
        %v2306 = vunpack.c.h.b16 %v1553
        %v2307 = vunpack.c.l.b16 %v1554
        %v2308 = vunpack.c.h.b16 %v1554
        %v2309 = vunpack.c.l.b16 %v1555
        %v2310 = vunpack.c.h.b16 %v1555
        %v2311 = vunpack.c.l.b16 %v1556
        %v2312 = vunpack.c.h.b16 %v1556
        %v2313 = vunpack.c.l.b16 %v1557
        %v2314 = vunpack.c.h.b16 %v1557
        %v2315 = vunpack.c.l.b16 %v1558
        %v2316 = vunpack.c.h.b16 %v1558
        %v2317 = vunpack.c.l.b16 %v1559
        %v2318 = vunpack.c.h.b16 %v1559
        %v2319 = vunpack.c.l.b16 %v1560
        %v2320 = vunpack.c.h.b16 %v1560
        %v2321 = vunpack.c.l.b16 %v1561
        %v2322 = vunpack.c.h.b16 %v1561
        %v2323 = vunpack.c.l.b16 %v1562
        %v2324 = vunpack.c.h.b16 %v1562
        %v2325 = vunpack.c.l.b16 %v1563
        %v2326 = vunpack.c.h.b16 %v1563
        %v2327 = vunpack.c.l.b16 %v1564
        %v2328 = vunpack.c.h.b16 %v1564
        %v2329 = vunpack.c.l.b16 %v1565
        %v2330 = vunpack.c.h.b16 %v1565
        %v2331 = vunpack.c.l.b16 %v1566
        %v2332 = vunpack.c.h.b16 %v1566
        %v2333 = vunpack.c.l.b16 %v1567
        %v2334 = vunpack.c.h.b16 %v1567
        %v2335 = vunpack.c.l.b16 %v1568
        %v2336 = vunpack.c.h.b16 %v1568
        %v2337 = vunpack.c.l.b16 %v1569
        %v2338 = vunpack.c.h.b16 %v1569
        %v2339 = vunpack.c.l.b16 %v1570
        %v2340 = vunpack.c.h.b16 %v1570
        %v2341 = vunpack.c.l.b16 %v1571
        %v2342 = vunpack.c.h.b16 %v1571
        %v2343 = vunpack.c.l.b16 %v1572
        %v2344 = vunpack.c.h.b16 %v1572
        %v2345 = vunpack.c.l.b16 %v1573
        %v2346 = vunpack.c.h.b16 %v1573
        %v2347 = vunpack.c.l.b16 %v1574
        %v2348 = vunpack.c.h.b16 %v1574
        %v2349 = vunpack.c.l.b16 %v1575
        %v2350 = vunpack.c.h.b16 %v1575
        %v2351 = vunpack.c.l.b16 %v1576
        %v2352 = vunpack.c.h.b16 %v1576
        %v2353 = vunpack.c.l.b16 %v1577
        %v2354 = vunpack.c.h.b16 %v1577
        %v2355 = vunpack.c.l.b16 %v1578
        %v2356 = vunpack.c.h.b16 %v1578
        %v2357 = vunpack.c.l.b16 %v1579
        %v2358 = vunpack.c.h.b16 %v1579
        %v2359 = vunpack.c.l.b16 %v1580
        %v2360 = vunpack.c.h.b16 %v1580
        %v2361 = vunpack.c.l.b16 %v1581
        %v2362 = vunpack.c.h.b16 %v1581
        %v2363 = vunpack.c.l.b16 %v1582
        %v2364 = vunpack.c.h.b16 %v1582
        %v2365 = vunpack.c.l.b16 %v1583
        %v2366 = vunpack.c.h.b16 %v1583
        %v2367 = vunpack.c.l.b16 %v1584
        %v2368 = vunpack.c.h.b16 %v1584
        %v2369 = vunpack.c.l.b16 %v1585
        %v2370 = vunpack.c.h.b16 %v1585
        %v2371 = vunpack.c.l.b16 %v1586
        %v2372 = vunpack.c.h.b16 %v1586
        %v2373 = vunpack.c.l.b16 %v1587
        %v2374 = vunpack.c.h.b16 %v1587
        %v2375 = vunpack.c.l.b16 %v1588
        %v2376 = vunpack.c.h.b16 %v1588
        %v2377 = vunpack.c.l.b16 %v1589
        %v2378 = vunpack.c.h.b16 %v1589
        %v2379 = vunpack.c.l.b16 %v1590
        %v2380 = vunpack.c.h.b16 %v1590
        %v2381 = vunpack.c.l.b16 %v1591
        %v2382 = vunpack.c.h.b16 %v1591
        %v2383 = vunpack.c.l.b16 %v1592
        %v2384 = vunpack.c.h.b16 %v1592
        %v2385 = vunpack.c.l.b16 %v1593
        %v2386 = vunpack.c.h.b16 %v1593
        %v2387 = vunpack.c.l.b16 %v1594
        %v2388 = vunpack.c.h.b16 %v1594
        %v2389 = vunpack.c.l.b16 %v1595
        %v2390 = vunpack.c.h.b16 %v1595
        %v2391 = vunpack.c.l.b16 %v1596
        %v2392 = vunpack.c.h.b16 %v1596
        %v2393 = vunpack.c.l.b16 %v1597
        %v2394 = vunpack.c.h.b16 %v1597
        %v2395 = vunpack.c.l.b16 %v1598
        %v2396 = vunpack.c.h.b16 %v1598
        %v2397 = vunpack.c.l.b16 %v1599
        %v2398 = vunpack.c.h.b16 %v1599
        %v2399 = vunpack.c.l.b16 %v1600
        %v2400 = vunpack.c.h.b16 %v1600
        %v2401 = vunpack.c.l.b16 %v1601
        %v2402 = vunpack.c.h.b16 %v1601
        %v2403 = vunpack.c.l.b16 %v1602
        %v2404 = vunpack.c.h.b16 %v1602
        %v2405 = vunpack.c.l.b16 %v1603
        %v2406 = vunpack.c.h.b16 %v1603
        %v2407 = vunpack.c.l.b16 %v1604
        %v2408 = vunpack.c.h.b16 %v1604
        %v2409 = vunpack.c.l.b16 %v1605
        %v2410 = vunpack.c.h.b16 %v1605
        %v2411 = vunpack.c.l.b16 %v1606
        %v2412 = vunpack.c.h.b16 %v1606
        %v2413 = vunpack.c.l.b16 %v1607
        %v2414 = vunpack.c.h.b16 %v1607
        %v2415 = vunpack.c.l.b16 %v1608
        %v2416 = vunpack.c.h.b16 %v1608
        %v2417 = vunpack.c.l.b16 %v1609
        %v2418 = vunpack.c.h.b16 %v1609
        %v2419 = vunpack.c.l.b16 %v1610
        %v2420 = vunpack.c.h.b16 %v1610
        %v2421 = vunpack.c.l.b16 %v1611
        %v2422 = vunpack.c.h.b16 %v1611
        %v2423 = vunpack.c.l.b16 %v1612
        %v2424 = vunpack.c.h.b16 %v1612
        %v2425 = vunpack.c.l.b16 %v1613
        %v2426 = vunpack.c.h.b16 %v1613
        %v2427 = vunpack.c.l.b16 %v1614
        %v2428 = vunpack.c.h.b16 %v1614
        %v2429 = vunpack.c.l.b16 %v1615
        %v2430 = vunpack.c.h.b16 %v1615
        %v2431 = vunpack.c.l.b16 %v1616
        %v2432 = vunpack.c.h.b16 %v1616
        %v2433 = vunpack.c.l.b16 %v1617
        %v2434 = vunpack.c.h.b16 %v1617
        %v2435 = vpack.c.b16 %v1927, %v1923
        %v2436 = vpack.c.b16 %v1928, %v1924
        %v2437 = vpack.c.b16 %v1929, %v1925
        %v2438 = vpack.c.b16 %v1930, %v1926
        %v2439 = vpack.c.b16 %v1935, %v1931
        %v2440 = vpack.c.b16 %v1936, %v1932
        %v2441 = vpack.c.b16 %v1937, %v1933
        %v2442 = vpack.c.b16 %v1938, %v1934
        %v2443 = vpack.c.b16 %v1943, %v1939
        %v2444 = vpack.c.b16 %v1944, %v1940
        %v2445 = vpack.c.b16 %v1945, %v1941
        %v2446 = vpack.c.b16 %v1946, %v1942
        %v2447 = vpack.c.b16 %v1951, %v1947
        %v2448 = vpack.c.b16 %v1952, %v1948
        %v2449 = vpack.c.b16 %v1953, %v1949
        %v2450 = vpack.c.b16 %v1954, %v1950
        %v2451 = vpack.c.b16 %v1959, %v1955
        %v2452 = vpack.c.b16 %v1960, %v1956
        %v2453 = vpack.c.b16 %v1961, %v1957
        %v2454 = vpack.c.b16 %v1962, %v1958
        %v2455 = vpack.c.b16 %v1967, %v1963
        %v2456 = vpack.c.b16 %v1968, %v1964
        %v2457 = vpack.c.b16 %v1969, %v1965
        %v2458 = vpack.c.b16 %v1970, %v1966
        %v2459 = vpack.c.b16 %v1975, %v1971
        %v2460 = vpack.c.b16 %v1976, %v1972
        %v2461 = vpack.c.b16 %v1977, %v1973
        %v2462 = vpack.c.b16 %v1978, %v1974
        %v2463 = vpack.c.b16 %v1983, %v1979
        %v2464 = vpack.c.b16 %v1984, %v1980
        %v2465 = vpack.c.b16 %v1985, %v1981
        %v2466 = vpack.c.b16 %v1986, %v1982
        %v2467 = vpack.c.b16 %v1991, %v1987
        %v2468 = vpack.c.b16 %v1992, %v1988
        %v2469 = vpack.c.b16 %v1993, %v1989
        %v2470 = vpack.c.b16 %v1994, %v1990
        %v2471 = vpack.c.b16 %v1999, %v1995
        %v2472 = vpack.c.b16 %v2000, %v1996
        %v2473 = vpack.c.b16 %v2001, %v1997
        %v2474 = vpack.c.b16 %v2002, %v1998
        %v2475 = vpack.c.b16 %v2007, %v2003
        %v2476 = vpack.c.b16 %v2008, %v2004
        %v2477 = vpack.c.b16 %v2009, %v2005
        %v2478 = vpack.c.b16 %v2010, %v2006
        %v2479 = vpack.c.b16 %v2015, %v2011
        %v2480 = vpack.c.b16 %v2016, %v2012
        %v2481 = vpack.c.b16 %v2017, %v2013
        %v2482 = vpack.c.b16 %v2018, %v2014
        %v2483 = vpack.c.b16 %v2023, %v2019
        %v2484 = vpack.c.b16 %v2024, %v2020
        %v2485 = vpack.c.b16 %v2025, %v2021
        %v2486 = vpack.c.b16 %v2026, %v2022
        %v2487 = vpack.c.b16 %v2031, %v2027
        %v2488 = vpack.c.b16 %v2032, %v2028
        %v2489 = vpack.c.b16 %v2033, %v2029
        %v2490 = vpack.c.b16 %v2034, %v2030
        %v2491 = vpack.c.b16 %v2039, %v2035
        %v2492 = vpack.c.b16 %v2040, %v2036
        %v2493 = vpack.c.b16 %v2041, %v2037
        %v2494 = vpack.c.b16 %v2042, %v2038
        %v2495 = vpack.c.b16 %v2047, %v2043
        %v2496 = vpack.c.b16 %v2048, %v2044
        %v2497 = vpack.c.b16 %v2049, %v2045
        %v2498 = vpack.c.b16 %v2050, %v2046
        %v2499 = vpack.c.b16 %v2055, %v2051
        %v2500 = vpack.c.b16 %v2056, %v2052
        %v2501 = vpack.c.b16 %v2057, %v2053
        %v2502 = vpack.c.b16 %v2058, %v2054
        %v2503 = vpack.c.b16 %v2063, %v2059
        %v2504 = vpack.c.b16 %v2064, %v2060
        %v2505 = vpack.c.b16 %v2065, %v2061
        %v2506 = vpack.c.b16 %v2066, %v2062
        %v2507 = vpack.c.b16 %v2071, %v2067
        %v2508 = vpack.c.b16 %v2072, %v2068
        %v2509 = vpack.c.b16 %v2073, %v2069
        %v2510 = vpack.c.b16 %v2074, %v2070
        %v2511 = vpack.c.b16 %v2079, %v2075
        %v2512 = vpack.c.b16 %v2080, %v2076
        %v2513 = vpack.c.b16 %v2081, %v2077
        %v2514 = vpack.c.b16 %v2082, %v2078
        %v2515 = vpack.c.b16 %v2087, %v2083
        %v2516 = vpack.c.b16 %v2088, %v2084
        %v2517 = vpack.c.b16 %v2089, %v2085
        %v2518 = vpack.c.b16 %v2090, %v2086
        %v2519 = vpack.c.b16 %v2095, %v2091
        %v2520 = vpack.c.b16 %v2096, %v2092
        %v2521 = vpack.c.b16 %v2097, %v2093
        %v2522 = vpack.c.b16 %v2098, %v2094
        %v2523 = vpack.c.b16 %v2103, %v2099
        %v2524 = vpack.c.b16 %v2104, %v2100
        %v2525 = vpack.c.b16 %v2105, %v2101
        %v2526 = vpack.c.b16 %v2106, %v2102
        %v2527 = vpack.c.b16 %v2111, %v2107
        %v2528 = vpack.c.b16 %v2112, %v2108
        %v2529 = vpack.c.b16 %v2113, %v2109
        %v2530 = vpack.c.b16 %v2114, %v2110
        %v2531 = vpack.c.b16 %v2119, %v2115
        %v2532 = vpack.c.b16 %v2120, %v2116
        %v2533 = vpack.c.b16 %v2121, %v2117
        %v2534 = vpack.c.b16 %v2122, %v2118
        %v2535 = vpack.c.b16 %v2127, %v2123
        %v2536 = vpack.c.b16 %v2128, %v2124
        %v2537 = vpack.c.b16 %v2129, %v2125
        %v2538 = vpack.c.b16 %v2130, %v2126
        %v2539 = vpack.c.b16 %v2135, %v2131
        %v2540 = vpack.c.b16 %v2136, %v2132
        %v2541 = vpack.c.b16 %v2137, %v2133
        %v2542 = vpack.c.b16 %v2138, %v2134
        %v2543 = vpack.c.b16 %v2143, %v2139
        %v2544 = vpack.c.b16 %v2144, %v2140
        %v2545 = vpack.c.b16 %v2145, %v2141
        %v2546 = vpack.c.b16 %v2146, %v2142
        %v2547 = vpack.c.b16 %v2151, %v2147
        %v2548 = vpack.c.b16 %v2152, %v2148
        %v2549 = vpack.c.b16 %v2153, %v2149
        %v2550 = vpack.c.b16 %v2154, %v2150
        %v2551 = vpack.c.b16 %v2159, %v2155
        %v2552 = vpack.c.b16 %v2160, %v2156
        %v2553 = vpack.c.b16 %v2161, %v2157
        %v2554 = vpack.c.b16 %v2162, %v2158
        %v2555 = vpack.c.b16 %v2167, %v2163
        %v2556 = vpack.c.b16 %v2168, %v2164
        %v2557 = vpack.c.b16 %v2169, %v2165
        %v2558 = vpack.c.b16 %v2170, %v2166
        %v2559 = vpack.c.b16 %v2175, %v2171
        %v2560 = vpack.c.b16 %v2176, %v2172
        %v2561 = vpack.c.b16 %v2177, %v2173
        %v2562 = vpack.c.b16 %v2178, %v2174
        %v2563 = vpack.c.b16 %v2183, %v2179
        %v2564 = vpack.c.b16 %v2184, %v2180
        %v2565 = vpack.c.b16 %v2185, %v2181
        %v2566 = vpack.c.b16 %v2186, %v2182
        %v2567 = vpack.c.b16 %v2191, %v2187
        %v2568 = vpack.c.b16 %v2192, %v2188
        %v2569 = vpack.c.b16 %v2193, %v2189
        %v2570 = vpack.c.b16 %v2194, %v2190
        %v2571 = vpack.c.b16 %v2199, %v2195
        %v2572 = vpack.c.b16 %v2200, %v2196
        %v2573 = vpack.c.b16 %v2201, %v2197
        %v2574 = vpack.c.b16 %v2202, %v2198
        %v2575 = vpack.c.b16 %v2207, %v2203
        %v2576 = vpack.c.b16 %v2208, %v2204
        %v2577 = vpack.c.b16 %v2209, %v2205
        %v2578 = vpack.c.b16 %v2210, %v2206
        %v2579 = vpack.c.b16 %v2215, %v2211
        %v2580 = vpack.c.b16 %v2216, %v2212
        %v2581 = vpack.c.b16 %v2217, %v2213
        %v2582 = vpack.c.b16 %v2218, %v2214
        %v2583 = vpack.c.b16 %v2223, %v2219
        %v2584 = vpack.c.b16 %v2224, %v2220
        %v2585 = vpack.c.b16 %v2225, %v2221
        %v2586 = vpack.c.b16 %v2226, %v2222
        %v2587 = vpack.c.b16 %v2231, %v2227
        %v2588 = vpack.c.b16 %v2232, %v2228
        %v2589 = vpack.c.b16 %v2233, %v2229
        %v2590 = vpack.c.b16 %v2234, %v2230
        %v2591 = vpack.c.b16 %v2239, %v2235
        %v2592 = vpack.c.b16 %v2240, %v2236
        %v2593 = vpack.c.b16 %v2241, %v2237
        %v2594 = vpack.c.b16 %v2242, %v2238
        %v2595 = vpack.c.b16 %v2247, %v2243
        %v2596 = vpack.c.b16 %v2248, %v2244
        %v2597 = vpack.c.b16 %v2249, %v2245
        %v2598 = vpack.c.b16 %v2250, %v2246
        %v2599 = vpack.c.b16 %v2255, %v2251
        %v2600 = vpack.c.b16 %v2256, %v2252
        %v2601 = vpack.c.b16 %v2257, %v2253
        %v2602 = vpack.c.b16 %v2258, %v2254
        %v2603 = vpack.c.b16 %v2263, %v2259
        %v2604 = vpack.c.b16 %v2264, %v2260
        %v2605 = vpack.c.b16 %v2265, %v2261
        %v2606 = vpack.c.b16 %v2266, %v2262
        %v2607 = vpack.c.b16 %v2271, %v2267
        %v2608 = vpack.c.b16 %v2272, %v2268
        %v2609 = vpack.c.b16 %v2273, %v2269
        %v2610 = vpack.c.b16 %v2274, %v2270
        %v2611 = vpack.c.b16 %v2279, %v2275
        %v2612 = vpack.c.b16 %v2280, %v2276
        %v2613 = vpack.c.b16 %v2281, %v2277
        %v2614 = vpack.c.b16 %v2282, %v2278
        %v2615 = vpack.c.b16 %v2287, %v2283
        %v2616 = vpack.c.b16 %v2288, %v2284
        %v2617 = vpack.c.b16 %v2289, %v2285
        %v2618 = vpack.c.b16 %v2290, %v2286
        %v2619 = vpack.c.b16 %v2295, %v2291
        %v2620 = vpack.c.b16 %v2296, %v2292
        %v2621 = vpack.c.b16 %v2297, %v2293
        %v2622 = vpack.c.b16 %v2298, %v2294
        %v2623 = vpack.c.b16 %v2303, %v2299
        %v2624 = vpack.c.b16 %v2304, %v2300
        %v2625 = vpack.c.b16 %v2305, %v2301
        %v2626 = vpack.c.b16 %v2306, %v2302
        %v2627 = vpack.c.b16 %v2311, %v2307
        %v2628 = vpack.c.b16 %v2312, %v2308
        %v2629 = vpack.c.b16 %v2313, %v2309
        %v2630 = vpack.c.b16 %v2314, %v2310
        %v2631 = vpack.c.b16 %v2319, %v2315
        %v2632 = vpack.c.b16 %v2320, %v2316
        %v2633 = vpack.c.b16 %v2321, %v2317
        %v2634 = vpack.c.b16 %v2322, %v2318
        %v2635 = vpack.c.b16 %v2327, %v2323
        %v2636 = vpack.c.b16 %v2328, %v2324
        %v2637 = vpack.c.b16 %v2329, %v2325
        %v2638 = vpack.c.b16 %v2330, %v2326
        %v2639 = vpack.c.b16 %v2335, %v2331
        %v2640 = vpack.c.b16 %v2336, %v2332
        %v2641 = vpack.c.b16 %v2337, %v2333
        %v2642 = vpack.c.b16 %v2338, %v2334
        %v2643 = vpack.c.b16 %v2343, %v2339
        %v2644 = vpack.c.b16 %v2344, %v2340
        %v2645 = vpack.c.b16 %v2345, %v2341
        %v2646 = vpack.c.b16 %v2346, %v2342
        %v2647 = vpack.c.b16 %v2351, %v2347
        %v2648 = vpack.c.b16 %v2352, %v2348
        %v2649 = vpack.c.b16 %v2353, %v2349
        %v2650 = vpack.c.b16 %v2354, %v2350
        %v2651 = vpack.c.b16 %v2359, %v2355
        %v2652 = vpack.c.b16 %v2360, %v2356
        %v2653 = vpack.c.b16 %v2361, %v2357
        %v2654 = vpack.c.b16 %v2362, %v2358
        %v2655 = vpack.c.b16 %v2367, %v2363
        %v2656 = vpack.c.b16 %v2368, %v2364
        %v2657 = vpack.c.b16 %v2369, %v2365
        %v2658 = vpack.c.b16 %v2370, %v2366
        %v2659 = vpack.c.b16 %v2375, %v2371
        %v2660 = vpack.c.b16 %v2376, %v2372
        %v2661 = vpack.c.b16 %v2377, %v2373
        %v2662 = vpack.c.b16 %v2378, %v2374
        %v2663 = vpack.c.b16 %v2383, %v2379
        %v2664 = vpack.c.b16 %v2384, %v2380
        %v2665 = vpack.c.b16 %v2385, %v2381
        %v2666 = vpack.c.b16 %v2386, %v2382
        %v2667 = vpack.c.b16 %v2391, %v2387
        %v2668 = vpack.c.b16 %v2392, %v2388
        %v2669 = vpack.c.b16 %v2393, %v2389
        %v2670 = vpack.c.b16 %v2394, %v2390
        %v2671 = vpack.c.b16 %v2399, %v2395
        %v2672 = vpack.c.b16 %v2400, %v2396
        %v2673 = vpack.c.b16 %v2401, %v2397
        %v2674 = vpack.c.b16 %v2402, %v2398
        %v2675 = vpack.c.b16 %v2407, %v2403
        %v2676 = vpack.c.b16 %v2408, %v2404
        %v2677 = vpack.c.b16 %v2409, %v2405
        %v2678 = vpack.c.b16 %v2410, %v2406
        %v2679 = vpack.c.b16 %v2415, %v2411
        %v2680 = vpack.c.b16 %v2416, %v2412
        %v2681 = vpack.c.b16 %v2417, %v2413
        %v2682 = vpack.c.b16 %v2418, %v2414
        %v2683 = vpack.c.b16 %v2423, %v2419
        %v2684 = vpack.c.b16 %v2424, %v2420
        %v2685 = vpack.c.b16 %v2425, %v2421
        %v2686 = vpack.c.b16 %v2426, %v2422
        %v2687 = vpack.c.b16 %v2431, %v2427
        %v2688 = vpack.c.b16 %v2432, %v2428
        %v2689 = vpack.c.b16 %v2433, %v2429
        %v2690 = vpack.c.b16 %v2434, %v2430
        %2947 = vmatpush.bf16.msra.mxu0 %v2463
        %2948 = vmatpush.bf16.msra.mxu0 %v2459
        %2949 = vmatpush.bf16.msra.mxu0 %v2455
        %2950 = vmatpush.bf16.msra.mxu0 %v2451
        %2951 = vmatpush.bf16.msra.mxu0 %v2447
        %2952 = vmatpush.bf16.msra.mxu0 %v2443
        %2953 = vmatpush.bf16.msra.mxu0 %v2439
        %2954 = vmatpush.bf16.msra.mxu0 %v2435
        %2955 = vmatmul.bf16.gmra.mxu0 %v1651
        %v2956 = vpop.f32.mrf.mxu0
        %v2957 = vadd.f32 %v1619, %v2956
        %v2958 = vpop.f32.mrf.mxu0
        %v2959 = vadd.f32 %v1619, %v2958
        %2960 = vdwg.mxu0
        %2961 = vmatpush.bf16.msra.mxu0 %v2495
        %2962 = vmatpush.bf16.msra.mxu0 %v2491
        %2963 = vmatpush.bf16.msra.mxu0 %v2487
        %2964 = vmatpush.bf16.msra.mxu0 %v2483
        %2965 = vmatpush.bf16.msra.mxu0 %v2479
        %2966 = vmatpush.bf16.msra.mxu0 %v2475
        %2967 = vmatpush.bf16.msra.mxu0 %v2471
        %2968 = vmatpush.bf16.msra.mxu0 %v2467
        %2969 = vmatmul.bf16.gmra.mxu0 %v1652
        %v2970 = vpop.f32.mrf.mxu0
        %v2971 = vadd.f32 %v2957, %v2970
        %v2972 = vpop.f32.mrf.mxu0
        %v2973 = vadd.f32 %v2959, %v2972
        %2974 = vdwg.mxu0
        %2975 = vmatpush.bf16.msra.mxu0 %v2527
        %2976 = vmatpush.bf16.msra.mxu0 %v2523
        %2977 = vmatpush.bf16.msra.mxu0 %v2519
        %2978 = vmatpush.bf16.msra.mxu0 %v2515
        %2979 = vmatpush.bf16.msra.mxu0 %v2511
        %2980 = vmatpush.bf16.msra.mxu0 %v2507
        %2981 = vmatpush.bf16.msra.mxu0 %v2503
        %2982 = vmatpush.bf16.msra.mxu0 %v2499
        %2983 = vmatmul.bf16.gmra.mxu0 %v1653
        %v2984 = vpop.f32.mrf.mxu0
        %v2985 = vadd.f32 %v2971, %v2984
        %v2986 = vpop.f32.mrf.mxu0
        %v2987 = vadd.f32 %v2973, %v2986
        %2988 = vdwg.mxu0
        %2989 = vmatpush.bf16.msra.mxu0 %v2559
        %2990 = vmatpush.bf16.msra.mxu0 %v2555
        %2991 = vmatpush.bf16.msra.mxu0 %v2551
        %2992 = vmatpush.bf16.msra.mxu0 %v2547
        %2993 = vmatpush.bf16.msra.mxu0 %v2543
        %2994 = vmatpush.bf16.msra.mxu0 %v2539
        %2995 = vmatpush.bf16.msra.mxu0 %v2535
        %2996 = vmatpush.bf16.msra.mxu0 %v2531
        %2997 = vmatmul.bf16.gmra.mxu0 %v1654
        %v2998 = vpop.f32.mrf.mxu0
        %v2999 = vadd.f32 %v2985, %v2998
        %v3000 = vpop.f32.mrf.mxu0
        %v3001 = vadd.f32 %v2987, %v3000
        %3002 = vdwg.mxu0
        %3003 = vmatpush.bf16.msra.mxu0 %v2591
        %3004 = vmatpush.bf16.msra.mxu0 %v2587
        %3005 = vmatpush.bf16.msra.mxu0 %v2583
        %3006 = vmatpush.bf16.msra.mxu0 %v2579
        %3007 = vmatpush.bf16.msra.mxu0 %v2575
        %3008 = vmatpush.bf16.msra.mxu0 %v2571
        %3009 = vmatpush.bf16.msra.mxu0 %v2567
        %3010 = vmatpush.bf16.msra.mxu0 %v2563
        %3011 = vmatmul.bf16.gmra.mxu0 %v1655
        %v3012 = vpop.f32.mrf.mxu0
        %v3013 = vadd.f32 %v2999, %v3012
        %v3014 = vpop.f32.mrf.mxu0
        %v3015 = vadd.f32 %v3001, %v3014
        %3016 = vdwg.mxu0
        %3017 = vmatpush.bf16.msra.mxu0 %v2623
        %3018 = vmatpush.bf16.msra.mxu0 %v2619
        %3019 = vmatpush.bf16.msra.mxu0 %v2615
        %3020 = vmatpush.bf16.msra.mxu0 %v2611
        %3021 = vmatpush.bf16.msra.mxu0 %v2607
        %3022 = vmatpush.bf16.msra.mxu0 %v2603
        %3023 = vmatpush.bf16.msra.mxu0 %v2599
        %3024 = vmatpush.bf16.msra.mxu0 %v2595
        %3025 = vmatmul.bf16.gmra.mxu0 %v1656
        %v3026 = vpop.f32.mrf.mxu0
        %v3027 = vadd.f32 %v3013, %v3026
        %v3028 = vpop.f32.mrf.mxu0
        %v3029 = vadd.f32 %v3015, %v3028
        %3030 = vdwg.mxu0
        %3031 = vmatpush.bf16.msra.mxu0 %v2655
        %3032 = vmatpush.bf16.msra.mxu0 %v2651
        %3033 = vmatpush.bf16.msra.mxu0 %v2647
        %3034 = vmatpush.bf16.msra.mxu0 %v2643
        %3035 = vmatpush.bf16.msra.mxu0 %v2639
        %3036 = vmatpush.bf16.msra.mxu0 %v2635
        %3037 = vmatpush.bf16.msra.mxu0 %v2631
        %3038 = vmatpush.bf16.msra.mxu0 %v2627
        %3039 = vmatmul.bf16.gmra.mxu0 %v1657
        %v3040 = vpop.f32.mrf.mxu0
        %v3041 = vadd.f32 %v3027, %v3040
        %v3042 = vpop.f32.mrf.mxu0
        %v3043 = vadd.f32 %v3029, %v3042
        %3044 = vdwg.mxu0
        %3045 = vmatpush.bf16.msra.mxu0 %v2687
        %3046 = vmatpush.bf16.msra.mxu0 %v2683
        %3047 = vmatpush.bf16.msra.mxu0 %v2679
        %3048 = vmatpush.bf16.msra.mxu0 %v2675
        %3049 = vmatpush.bf16.msra.mxu0 %v2671
        %3050 = vmatpush.bf16.msra.mxu0 %v2667
        %3051 = vmatpush.bf16.msra.mxu0 %v2663
        %3052 = vmatpush.bf16.msra.mxu0 %v2659
        %3053 = vmatmul.bf16.gmra.mxu0 %v1658
        %v3054 = vpop.f32.mrf.mxu0
        %v3055 = vadd.f32 %v3041, %v3054
        %v3056 = vpop.f32.mrf.mxu0
        %v3057 = vadd.f32 %v3043, %v3056
        %3058 = vdwg.mxu0
        %3059 = vmatpush.bf16.msra.mxu0 %v2464
        %3060 = vmatpush.bf16.msra.mxu0 %v2460
        %3061 = vmatpush.bf16.msra.mxu0 %v2456
        %3062 = vmatpush.bf16.msra.mxu0 %v2452
        %3063 = vmatpush.bf16.msra.mxu0 %v2448
        %3064 = vmatpush.bf16.msra.mxu0 %v2444
        %3065 = vmatpush.bf16.msra.mxu0 %v2440
        %3066 = vmatpush.bf16.msra.mxu0 %v2436
        %3067 = vmatmul.bf16.gmra.mxu0 %v1651
        %v3068 = vpop.f32.mrf.mxu0
        %v3069 = vadd.f32 %v1620, %v3068
        %v3070 = vpop.f32.mrf.mxu0
        %v3071 = vadd.f32 %v1620, %v3070
        %3072 = vdwg.mxu0
        %3073 = vmatpush.bf16.msra.mxu0 %v2496
        %3074 = vmatpush.bf16.msra.mxu0 %v2492
        %3075 = vmatpush.bf16.msra.mxu0 %v2488
        %3076 = vmatpush.bf16.msra.mxu0 %v2484
        %3077 = vmatpush.bf16.msra.mxu0 %v2480
        %3078 = vmatpush.bf16.msra.mxu0 %v2476
        %3079 = vmatpush.bf16.msra.mxu0 %v2472
        %3080 = vmatpush.bf16.msra.mxu0 %v2468
        %3081 = vmatmul.bf16.gmra.mxu0 %v1652
        %v3082 = vpop.f32.mrf.mxu0
        %v3083 = vadd.f32 %v3069, %v3082
        %v3084 = vpop.f32.mrf.mxu0
        %v3085 = vadd.f32 %v3071, %v3084
        %3086 = vdwg.mxu0
        %3087 = vmatpush.bf16.msra.mxu0 %v2528
        %3088 = vmatpush.bf16.msra.mxu0 %v2524
        %3089 = vmatpush.bf16.msra.mxu0 %v2520
        %3090 = vmatpush.bf16.msra.mxu0 %v2516
        %3091 = vmatpush.bf16.msra.mxu0 %v2512
        %3092 = vmatpush.bf16.msra.mxu0 %v2508
        %3093 = vmatpush.bf16.msra.mxu0 %v2504
        %3094 = vmatpush.bf16.msra.mxu0 %v2500
        %3095 = vmatmul.bf16.gmra.mxu0 %v1653
        %v3096 = vpop.f32.mrf.mxu0
        %v3097 = vadd.f32 %v3083, %v3096
        %v3098 = vpop.f32.mrf.mxu0
        %v3099 = vadd.f32 %v3085, %v3098
        %3100 = vdwg.mxu0
        %3101 = vmatpush.bf16.msra.mxu0 %v2560
        %3102 = vmatpush.bf16.msra.mxu0 %v2556
        %3103 = vmatpush.bf16.msra.mxu0 %v2552
        %3104 = vmatpush.bf16.msra.mxu0 %v2548
        %3105 = vmatpush.bf16.msra.mxu0 %v2544
        %3106 = vmatpush.bf16.msra.mxu0 %v2540
        %3107 = vmatpush.bf16.msra.mxu0 %v2536
        %3108 = vmatpush.bf16.msra.mxu0 %v2532
        %3109 = vmatmul.bf16.gmra.mxu0 %v1654
        %v3110 = vpop.f32.mrf.mxu0
        %v3111 = vadd.f32 %v3097, %v3110
        %v3112 = vpop.f32.mrf.mxu0
        %v3113 = vadd.f32 %v3099, %v3112
        %3114 = vdwg.mxu0
        %3115 = vmatpush.bf16.msra.mxu0 %v2592
        %3116 = vmatpush.bf16.msra.mxu0 %v2588
        %3117 = vmatpush.bf16.msra.mxu0 %v2584
        %3118 = vmatpush.bf16.msra.mxu0 %v2580
        %3119 = vmatpush.bf16.msra.mxu0 %v2576
        %3120 = vmatpush.bf16.msra.mxu0 %v2572
        %3121 = vmatpush.bf16.msra.mxu0 %v2568
        %3122 = vmatpush.bf16.msra.mxu0 %v2564
        %3123 = vmatmul.bf16.gmra.mxu0 %v1655
        %v3124 = vpop.f32.mrf.mxu0
        %v3125 = vadd.f32 %v3111, %v3124
        %v3126 = vpop.f32.mrf.mxu0
        %v3127 = vadd.f32 %v3113, %v3126
        %3128 = vdwg.mxu0
        %3129 = vmatpush.bf16.msra.mxu0 %v2624
        %3130 = vmatpush.bf16.msra.mxu0 %v2620
        %3131 = vmatpush.bf16.msra.mxu0 %v2616
        %3132 = vmatpush.bf16.msra.mxu0 %v2612
        %3133 = vmatpush.bf16.msra.mxu0 %v2608
        %3134 = vmatpush.bf16.msra.mxu0 %v2604
        %3135 = vmatpush.bf16.msra.mxu0 %v2600
        %3136 = vmatpush.bf16.msra.mxu0 %v2596
        %3137 = vmatmul.bf16.gmra.mxu0 %v1656
        %v3138 = vpop.f32.mrf.mxu0
        %v3139 = vadd.f32 %v3125, %v3138
        %v3140 = vpop.f32.mrf.mxu0
        %v3141 = vadd.f32 %v3127, %v3140
        %3142 = vdwg.mxu0
        %3143 = vmatpush.bf16.msra.mxu0 %v2656
        %3144 = vmatpush.bf16.msra.mxu0 %v2652
        %3145 = vmatpush.bf16.msra.mxu0 %v2648
        %3146 = vmatpush.bf16.msra.mxu0 %v2644
        %3147 = vmatpush.bf16.msra.mxu0 %v2640
        %3148 = vmatpush.bf16.msra.mxu0 %v2636
        %3149 = vmatpush.bf16.msra.mxu0 %v2632
        %3150 = vmatpush.bf16.msra.mxu0 %v2628
        %3151 = vmatmul.bf16.gmra.mxu0 %v1657
        %v3152 = vpop.f32.mrf.mxu0
        %v3153 = vadd.f32 %v3139, %v3152
        %v3154 = vpop.f32.mrf.mxu0
        %v3155 = vadd.f32 %v3141, %v3154
        %3156 = vdwg.mxu0
        %3157 = vmatpush.bf16.msra.mxu0 %v2688
        %3158 = vmatpush.bf16.msra.mxu0 %v2684
        %3159 = vmatpush.bf16.msra.mxu0 %v2680
        %3160 = vmatpush.bf16.msra.mxu0 %v2676
        %3161 = vmatpush.bf16.msra.mxu0 %v2672
        %3162 = vmatpush.bf16.msra.mxu0 %v2668
        %3163 = vmatpush.bf16.msra.mxu0 %v2664
        %3164 = vmatpush.bf16.msra.mxu0 %v2660
        %3165 = vmatmul.bf16.gmra.mxu0 %v1658
        %v3166 = vpop.f32.mrf.mxu0
        %v3167 = vadd.f32 %v3153, %v3166
        %v3168 = vpop.f32.mrf.mxu0
        %v3169 = vadd.f32 %v3155, %v3168
        %3170 = vdwg.mxu0
        %3171 = vmatpush.bf16.msra.mxu0 %v2465
        %3172 = vmatpush.bf16.msra.mxu0 %v2461
        %3173 = vmatpush.bf16.msra.mxu0 %v2457
        %3174 = vmatpush.bf16.msra.mxu0 %v2453
        %3175 = vmatpush.bf16.msra.mxu0 %v2449
        %3176 = vmatpush.bf16.msra.mxu0 %v2445
        %3177 = vmatpush.bf16.msra.mxu0 %v2441
        %3178 = vmatpush.bf16.msra.mxu0 %v2437
        %3179 = vmatmul.bf16.gmra.mxu0 %v1651
        %v3180 = vpop.f32.mrf.mxu0
        %v3181 = vadd.f32 %v1621, %v3180
        %v3182 = vpop.f32.mrf.mxu0
        %v3183 = vadd.f32 %v1621, %v3182
        %3184 = vdwg.mxu0
        %3185 = vmatpush.bf16.msra.mxu0 %v2497
        %3186 = vmatpush.bf16.msra.mxu0 %v2493
        %3187 = vmatpush.bf16.msra.mxu0 %v2489
        %3188 = vmatpush.bf16.msra.mxu0 %v2485
        %3189 = vmatpush.bf16.msra.mxu0 %v2481
        %3190 = vmatpush.bf16.msra.mxu0 %v2477
        %3191 = vmatpush.bf16.msra.mxu0 %v2473
        %3192 = vmatpush.bf16.msra.mxu0 %v2469
        %3193 = vmatmul.bf16.gmra.mxu0 %v1652
        %v3194 = vpop.f32.mrf.mxu0
        %v3195 = vadd.f32 %v3181, %v3194
        %v3196 = vpop.f32.mrf.mxu0
        %v3197 = vadd.f32 %v3183, %v3196
        %3198 = vdwg.mxu0
        %3199 = vmatpush.bf16.msra.mxu0 %v2529
        %3200 = vmatpush.bf16.msra.mxu0 %v2525
        %3201 = vmatpush.bf16.msra.mxu0 %v2521
        %3202 = vmatpush.bf16.msra.mxu0 %v2517
        %3203 = vmatpush.bf16.msra.mxu0 %v2513
        %3204 = vmatpush.bf16.msra.mxu0 %v2509
        %3205 = vmatpush.bf16.msra.mxu0 %v2505
        %3206 = vmatpush.bf16.msra.mxu0 %v2501
        %3207 = vmatmul.bf16.gmra.mxu0 %v1653
        %v3208 = vpop.f32.mrf.mxu0
        %v3209 = vadd.f32 %v3195, %v3208
        %v3210 = vpop.f32.mrf.mxu0
        %v3211 = vadd.f32 %v3197, %v3210
        %3212 = vdwg.mxu0
        %3213 = vmatpush.bf16.msra.mxu0 %v2561
        %3214 = vmatpush.bf16.msra.mxu0 %v2557
        %3215 = vmatpush.bf16.msra.mxu0 %v2553
        %3216 = vmatpush.bf16.msra.mxu0 %v2549
        %3217 = vmatpush.bf16.msra.mxu0 %v2545
        %3218 = vmatpush.bf16.msra.mxu0 %v2541
        %3219 = vmatpush.bf16.msra.mxu0 %v2537
        %3220 = vmatpush.bf16.msra.mxu0 %v2533
        %3221 = vmatmul.bf16.gmra.mxu0 %v1654
        %v3222 = vpop.f32.mrf.mxu0
        %v3223 = vadd.f32 %v3209, %v3222
        %v3224 = vpop.f32.mrf.mxu0
        %v3225 = vadd.f32 %v3211, %v3224
        %3226 = vdwg.mxu0
        %3227 = vmatpush.bf16.msra.mxu0 %v2593
        %3228 = vmatpush.bf16.msra.mxu0 %v2589
        %3229 = vmatpush.bf16.msra.mxu0 %v2585
        %3230 = vmatpush.bf16.msra.mxu0 %v2581
        %3231 = vmatpush.bf16.msra.mxu0 %v2577
        %3232 = vmatpush.bf16.msra.mxu0 %v2573
        %3233 = vmatpush.bf16.msra.mxu0 %v2569
        %3234 = vmatpush.bf16.msra.mxu0 %v2565
        %3235 = vmatmul.bf16.gmra.mxu0 %v1655
        %v3236 = vpop.f32.mrf.mxu0
        %v3237 = vadd.f32 %v3223, %v3236
        %v3238 = vpop.f32.mrf.mxu0
        %v3239 = vadd.f32 %v3225, %v3238
        %3240 = vdwg.mxu0
        %3241 = vmatpush.bf16.msra.mxu0 %v2625
        %3242 = vmatpush.bf16.msra.mxu0 %v2621
        %3243 = vmatpush.bf16.msra.mxu0 %v2617
        %3244 = vmatpush.bf16.msra.mxu0 %v2613
        %3245 = vmatpush.bf16.msra.mxu0 %v2609
        %3246 = vmatpush.bf16.msra.mxu0 %v2605
        %3247 = vmatpush.bf16.msra.mxu0 %v2601
        %3248 = vmatpush.bf16.msra.mxu0 %v2597
        %3249 = vmatmul.bf16.gmra.mxu0 %v1656
        %v3250 = vpop.f32.mrf.mxu0
        %v3251 = vadd.f32 %v3237, %v3250
        %v3252 = vpop.f32.mrf.mxu0
        %v3253 = vadd.f32 %v3239, %v3252
        %3254 = vdwg.mxu0
        %3255 = vmatpush.bf16.msra.mxu0 %v2657
        %3256 = vmatpush.bf16.msra.mxu0 %v2653
        %3257 = vmatpush.bf16.msra.mxu0 %v2649
        %3258 = vmatpush.bf16.msra.mxu0 %v2645
        %3259 = vmatpush.bf16.msra.mxu0 %v2641
        %3260 = vmatpush.bf16.msra.mxu0 %v2637
        %3261 = vmatpush.bf16.msra.mxu0 %v2633
        %3262 = vmatpush.bf16.msra.mxu0 %v2629
        %3263 = vmatmul.bf16.gmra.mxu0 %v1657
        %v3264 = vpop.f32.mrf.mxu0
        %v3265 = vadd.f32 %v3251, %v3264
        %v3266 = vpop.f32.mrf.mxu0
        %v3267 = vadd.f32 %v3253, %v3266
        %3268 = vdwg.mxu0
        %3269 = vmatpush.bf16.msra.mxu0 %v2689
        %3270 = vmatpush.bf16.msra.mxu0 %v2685
        %3271 = vmatpush.bf16.msra.mxu0 %v2681
        %3272 = vmatpush.bf16.msra.mxu0 %v2677
        %3273 = vmatpush.bf16.msra.mxu0 %v2673
        %3274 = vmatpush.bf16.msra.mxu0 %v2669
        %3275 = vmatpush.bf16.msra.mxu0 %v2665
        %3276 = vmatpush.bf16.msra.mxu0 %v2661
        %3277 = vmatmul.bf16.gmra.mxu0 %v1658
        %v3278 = vpop.f32.mrf.mxu0
        %v3279 = vadd.f32 %v3265, %v3278
        %v3280 = vpop.f32.mrf.mxu0
        %v3281 = vadd.f32 %v3267, %v3280
        %3282 = vdwg.mxu0
        %3283 = vmatpush.bf16.msra.mxu0 %v2466
        %3284 = vmatpush.bf16.msra.mxu0 %v2462
        %3285 = vmatpush.bf16.msra.mxu0 %v2458
        %3286 = vmatpush.bf16.msra.mxu0 %v2454
        %3287 = vmatpush.bf16.msra.mxu0 %v2450
        %3288 = vmatpush.bf16.msra.mxu0 %v2446
        %3289 = vmatpush.bf16.msra.mxu0 %v2442
        %3290 = vmatpush.bf16.msra.mxu0 %v2438
        %3291 = vmatmul.bf16.gmra.mxu0 %v1651
        %v3292 = vpop.f32.mrf.mxu0
        %v3293 = vadd.f32 %v1622, %v3292
        %v3294 = vpop.f32.mrf.mxu0
        %v3295 = vadd.f32 %v1622, %v3294
        %3296 = vdwg.mxu0
        %3297 = vmatpush.bf16.msra.mxu0 %v2498
        %3298 = vmatpush.bf16.msra.mxu0 %v2494
        %3299 = vmatpush.bf16.msra.mxu0 %v2490
        %3300 = vmatpush.bf16.msra.mxu0 %v2486
        %3301 = vmatpush.bf16.msra.mxu0 %v2482
        %3302 = vmatpush.bf16.msra.mxu0 %v2478
        %3303 = vmatpush.bf16.msra.mxu0 %v2474
        %3304 = vmatpush.bf16.msra.mxu0 %v2470
        %3305 = vmatmul.bf16.gmra.mxu0 %v1652
        %v3306 = vpop.f32.mrf.mxu0
        %v3307 = vadd.f32 %v3293, %v3306
        %v3308 = vpop.f32.mrf.mxu0
        %v3309 = vadd.f32 %v3295, %v3308
        %3310 = vdwg.mxu0
        %3311 = vmatpush.bf16.msra.mxu0 %v2530
        %3312 = vmatpush.bf16.msra.mxu0 %v2526
        %3313 = vmatpush.bf16.msra.mxu0 %v2522
        %3314 = vmatpush.bf16.msra.mxu0 %v2518
        %3315 = vmatpush.bf16.msra.mxu0 %v2514
        %3316 = vmatpush.bf16.msra.mxu0 %v2510
        %3317 = vmatpush.bf16.msra.mxu0 %v2506
        %3318 = vmatpush.bf16.msra.mxu0 %v2502
        %3319 = vmatmul.bf16.gmra.mxu0 %v1653
        %v3320 = vpop.f32.mrf.mxu0
        %v3321 = vadd.f32 %v3307, %v3320
        %v3322 = vpop.f32.mrf.mxu0
        %v3323 = vadd.f32 %v3309, %v3322
        %3324 = vdwg.mxu0
        %3325 = vmatpush.bf16.msra.mxu0 %v2562
        %3326 = vmatpush.bf16.msra.mxu0 %v2558
        %3327 = vmatpush.bf16.msra.mxu0 %v2554
        %3328 = vmatpush.bf16.msra.mxu0 %v2550
        %3329 = vmatpush.bf16.msra.mxu0 %v2546
        %3330 = vmatpush.bf16.msra.mxu0 %v2542
        %3331 = vmatpush.bf16.msra.mxu0 %v2538
        %3332 = vmatpush.bf16.msra.mxu0 %v2534
        %3333 = vmatmul.bf16.gmra.mxu0 %v1654
        %v3334 = vpop.f32.mrf.mxu0
        %v3335 = vadd.f32 %v3321, %v3334
        %v3336 = vpop.f32.mrf.mxu0
        %v3337 = vadd.f32 %v3323, %v3336
        %3338 = vdwg.mxu0
        %3339 = vmatpush.bf16.msra.mxu0 %v2594
        %3340 = vmatpush.bf16.msra.mxu0 %v2590
        %3341 = vmatpush.bf16.msra.mxu0 %v2586
        %3342 = vmatpush.bf16.msra.mxu0 %v2582
        %3343 = vmatpush.bf16.msra.mxu0 %v2578
        %3344 = vmatpush.bf16.msra.mxu0 %v2574
        %3345 = vmatpush.bf16.msra.mxu0 %v2570
        %3346 = vmatpush.bf16.msra.mxu0 %v2566
        %3347 = vmatmul.bf16.gmra.mxu0 %v1655
        %v3348 = vpop.f32.mrf.mxu0
        %v3349 = vadd.f32 %v3335, %v3348
        %v3350 = vpop.f32.mrf.mxu0
        %v3351 = vadd.f32 %v3337, %v3350
        %3352 = vdwg.mxu0
        %3353 = vmatpush.bf16.msra.mxu0 %v2626
        %3354 = vmatpush.bf16.msra.mxu0 %v2622
        %3355 = vmatpush.bf16.msra.mxu0 %v2618
        %3356 = vmatpush.bf16.msra.mxu0 %v2614
        %3357 = vmatpush.bf16.msra.mxu0 %v2610
        %3358 = vmatpush.bf16.msra.mxu0 %v2606
        %3359 = vmatpush.bf16.msra.mxu0 %v2602
        %3360 = vmatpush.bf16.msra.mxu0 %v2598
        %3361 = vmatmul.bf16.gmra.mxu0 %v1656
        %v3362 = vpop.f32.mrf.mxu0
        %v3363 = vadd.f32 %v3349, %v3362
        %v3364 = vpop.f32.mrf.mxu0
        %v3365 = vadd.f32 %v3351, %v3364
        %3366 = vdwg.mxu0
        %3367 = vmatpush.bf16.msra.mxu0 %v2658
        %3368 = vmatpush.bf16.msra.mxu0 %v2654
        %3369 = vmatpush.bf16.msra.mxu0 %v2650
        %3370 = vmatpush.bf16.msra.mxu0 %v2646
        %3371 = vmatpush.bf16.msra.mxu0 %v2642
        %3372 = vmatpush.bf16.msra.mxu0 %v2638
        %3373 = vmatpush.bf16.msra.mxu0 %v2634
        %3374 = vmatpush.bf16.msra.mxu0 %v2630
        %3375 = vmatmul.bf16.gmra.mxu0 %v1657
        %v3376 = vpop.f32.mrf.mxu0
        %v3377 = vadd.f32 %v3363, %v3376
        %v3378 = vpop.f32.mrf.mxu0
        %v3379 = vadd.f32 %v3365, %v3378
        %3380 = vdwg.mxu0
        %3381 = vmatpush.bf16.msra.mxu0 %v2690
        %3382 = vmatpush.bf16.msra.mxu0 %v2686
        %3383 = vmatpush.bf16.msra.mxu0 %v2682
        %3384 = vmatpush.bf16.msra.mxu0 %v2678
        %3385 = vmatpush.bf16.msra.mxu0 %v2674
        %3386 = vmatpush.bf16.msra.mxu0 %v2670
        %3387 = vmatpush.bf16.msra.mxu0 %v2666
        %3388 = vmatpush.bf16.msra.mxu0 %v2662
        %3389 = vmatmul.bf16.gmra.mxu0 %v1658
        %v3390 = vpop.f32.mrf.mxu0
        %v3391 = vadd.f32 %v3377, %v3390
        %v3392 = vpop.f32.mrf.mxu0
        %v3393 = vadd.f32 %v3379, %v3392
        %3394 = vdwg.mxu0
        %v3395 = vmax.f32 %v3055, 0.0
        %v3396 = vmax.f32 %v3167, 0.0
        %v3397 = vmax.f32 %v3279, 0.0
        %v3398 = vmax.f32 %v3391, 0.0
        %v3399 = vmax.f32 %v3057, 0.0
        %v3400 = vmax.f32 %v3169, 0.0
        %v3401 = vmax.f32 %v3281, 0.0
        %v3402 = vmax.f32 %v3393, 0.0
        %v3403 = vpack.c.bf16 %v1347, %v1346
        %v3404 = vpack.c.bf16 %v1349, %v1348
        %v3405 = vpack.c.bf16 %v1351, %v1350
        %v3406 = vpack.c.bf16 %v1353, %v1352
        %3407 = vst [vmem:[#allocation2] sm:$0xff] %v3403
        %3408 = vst [vmem:[#allocation2 + $0x8] sm:$0xff] %v3404
        %3409 = vst [vmem:[#allocation2 + $0x20] sm:$0xff] %v3405
        %3410 = vst [vmem:[#allocation2 + $0x28] sm:$0xff] %v3406
        %v3411 = vpack.c.bf16 %v3396, %v3395
        %v3412 = vpack.c.bf16 %v3398, %v3397
        %v3413 = vpack.c.bf16 %v3400, %v3399
        %v3414 = vpack.c.bf16 %v3402, %v3401
        %3415 = vst [vmem:[#allocation2 + $0x10] sm:$0xff] %v3411
        %3416 = vst [vmem:[#allocation2 + $0x18] sm:$0xff] %v3412
        %3417 = vst [vmem:[#allocation2 + $0x30] sm:$0xff] %v3413
        %3418 = vst [vmem:[#allocation2 + $0x38] sm:$0xff] %v3414
        %v3419 = vld [vmem:[#allocation2] sm:$0xff]
        %v3420 = vld [vmem:[#allocation2 + $0x8] sm:$0xff]
        %v3421 = vld [vmem:[#allocation2 + $0x10] sm:$0xff]
        %v3422 = vld [vmem:[#allocation2 + $0x18] sm:$0xff]
        %v3423 = vld [vmem:[#allocation2 + $0x20] sm:$0xff]
        %v3424 = vld [vmem:[#allocation2 + $0x28] sm:$0xff]
        %v3425 = vld [vmem:[#allocation2 + $0x30] sm:$0xff]
        %v3426 = vld [vmem:[#allocation2 + $0x38] sm:$0xff]
        %v3427 = vld [vmem:[#allocation5] sm:$0xf]
        %v3428 = vld [vmem:[#allocation5 + $0x4] sm:$0xf]
        %v3429 = vld [vmem:[#allocation5 + $0x8] sm:$0xf]
        %v3430 = vld [vmem:[#allocation5 + $0xc] sm:$0xf]
        %v3431 = vld [vmem:[#allocation5 + $0x10] sm:$0xf]
        %v3432 = vld [vmem:[#allocation5 + $0x14] sm:$0xf]
        %v3433 = vld [vmem:[#allocation5 + $0x18] sm:$0xf]
        %v3434 = vld [vmem:[#allocation5 + $0x1c] sm:$0xf]
        %v3435 = vld [vmem:[#allocation5 + $0x20] sm:$0xf]
        %v3436 = vld [vmem:[#allocation5 + $0x24] sm:$0xf]
        %v3437 = vld [vmem:[#allocation5 + $0x28] sm:$0xf]
        %v3438 = vld [vmem:[#allocation5 + $0x2c] sm:$0xf]
        %v3439 = vld [vmem:[#allocation5 + $0x30] sm:$0xf]
        %v3440 = vld [vmem:[#allocation5 + $0x34] sm:$0xf]
        %v3441 = vld [vmem:[#allocation5 + $0x38] sm:$0xf]
        %v3442 = vld [vmem:[#allocation5 + $0x3c] sm:$0xf]
        %v3443 = vld [vmem:[#allocation5 + $0x40] sm:$0xf]
        %v3444 = vld [vmem:[#allocation5 + $0x44] sm:$0xf]
        %v3445 = vld [vmem:[#allocation5 + $0x48] sm:$0xf]
        %v3446 = vld [vmem:[#allocation5 + $0x4c] sm:$0xf]
        %v3447 = vld [vmem:[#allocation5 + $0x50] sm:$0xf]
        %v3448 = vld [vmem:[#allocation5 + $0x54] sm:$0xf]
        %v3449 = vld [vmem:[#allocation5 + $0x58] sm:$0xf]
        %v3450 = vld [vmem:[#allocation5 + $0x5c] sm:$0xf]
        %v3451 = vld [vmem:[#allocation5 + $0x60] sm:$0xf]
        %v3452 = vld [vmem:[#allocation5 + $0x64] sm:$0xf]
        %v3453 = vld [vmem:[#allocation5 + $0x68] sm:$0xf]
        %v3454 = vld [vmem:[#allocation5 + $0x6c] sm:$0xf]
        %v3455 = vld [vmem:[#allocation5 + $0x70] sm:$0xf]
        %v3456 = vld [vmem:[#allocation5 + $0x74] sm:$0xf]
        %v3457 = vld [vmem:[#allocation5 + $0x78] sm:$0xf]
        %v3458 = vld [vmem:[#allocation5 + $0x7c] sm:$0xf]
        %v3459 = vld [vmem:[#allocation5 + $0x80] sm:$0xf]
        %v3460 = vld [vmem:[#allocation5 + $0x84] sm:$0xf]
        %v3461 = vld [vmem:[#allocation5 + $0x88] sm:$0xf]
        %v3462 = vld [vmem:[#allocation5 + $0x8c] sm:$0xf]
        %v3463 = vld [vmem:[#allocation5 + $0x90] sm:$0xf]
        %v3464 = vld [vmem:[#allocation5 + $0x94] sm:$0xf]
        %v3465 = vld [vmem:[#allocation5 + $0x98] sm:$0xf]
        %v3466 = vld [vmem:[#allocation5 + $0x9c] sm:$0xf]
        %v3467 = vld [vmem:[#allocation5 + $0xa0] sm:$0xf]
        %v3468 = vld [vmem:[#allocation5 + $0xa4] sm:$0xf]
        %v3469 = vld [vmem:[#allocation5 + $0xa8] sm:$0xf]
        %v3470 = vld [vmem:[#allocation5 + $0xac] sm:$0xf]
        %v3471 = vld [vmem:[#allocation5 + $0xb0] sm:$0xf]
        %v3472 = vld [vmem:[#allocation5 + $0xb4] sm:$0xf]
        %v3473 = vld [vmem:[#allocation5 + $0xb8] sm:$0xf]
        %v3474 = vld [vmem:[#allocation5 + $0xbc] sm:$0xf]
        %v3475 = vld [vmem:[#allocation5 + $0xc0] sm:$0xf]
        %v3476 = vld [vmem:[#allocation5 + $0xc4] sm:$0xf]
        %v3477 = vld [vmem:[#allocation5 + $0xc8] sm:$0xf]
        %v3478 = vld [vmem:[#allocation5 + $0xcc] sm:$0xf]
        %v3479 = vld [vmem:[#allocation5 + $0xd0] sm:$0xf]
        %v3480 = vld [vmem:[#allocation5 + $0xd4] sm:$0xf]
        %v3481 = vld [vmem:[#allocation5 + $0xd8] sm:$0xf]
        %v3482 = vld [vmem:[#allocation5 + $0xdc] sm:$0xf]
        %v3483 = vld [vmem:[#allocation5 + $0xe0] sm:$0xf]
        %v3484 = vld [vmem:[#allocation5 + $0xe4] sm:$0xf]
        %v3485 = vld [vmem:[#allocation5 + $0xe8] sm:$0xf]
        %v3486 = vld [vmem:[#allocation5 + $0xec] sm:$0xf]
        %v3487 = vld [vmem:[#allocation5 + $0xf0] sm:$0xf]
        %v3488 = vld [vmem:[#allocation5 + $0xf4] sm:$0xf]
        %v3489 = vld [vmem:[#allocation5 + $0xf8] sm:$0xf]
        %v3490 = vld [vmem:[#allocation5 + $0xfc] sm:$0xf]
        %v3491 = vld [vmem:[#allocation5 + $0x100] sm:$0xf]
        %v3492 = vld [vmem:[#allocation5 + $0x104] sm:$0xf]
        %v3493 = vld [vmem:[#allocation5 + $0x108] sm:$0xf]
        %v3494 = vld [vmem:[#allocation5 + $0x10c] sm:$0xf]
        %v3495 = vld [vmem:[#allocation5 + $0x110] sm:$0xf]
        %v3496 = vld [vmem:[#allocation5 + $0x114] sm:$0xf]
        %v3497 = vld [vmem:[#allocation5 + $0x118] sm:$0xf]
        %v3498 = vld [vmem:[#allocation5 + $0x11c] sm:$0xf]
        %v3499 = vld [vmem:[#allocation5 + $0x120] sm:$0xf]
        %v3500 = vld [vmem:[#allocation5 + $0x124] sm:$0xf]
        %v3501 = vld [vmem:[#allocation5 + $0x128] sm:$0xf]
        %v3502 = vld [vmem:[#allocation5 + $0x12c] sm:$0xf]
        %v3503 = vld [vmem:[#allocation5 + $0x130] sm:$0xf]
        %v3504 = vld [vmem:[#allocation5 + $0x134] sm:$0xf]
        %v3505 = vld [vmem:[#allocation5 + $0x138] sm:$0xf]
        %v3506 = vld [vmem:[#allocation5 + $0x13c] sm:$0xf]
        %v3507 = vld [vmem:[#allocation5 + $0x140] sm:$0xf]
        %v3508 = vld [vmem:[#allocation5 + $0x144] sm:$0xf]
        %v3509 = vld [vmem:[#allocation5 + $0x148] sm:$0xf]
        %v3510 = vld [vmem:[#allocation5 + $0x14c] sm:$0xf]
        %v3511 = vld [vmem:[#allocation5 + $0x150] sm:$0xf]
        %v3512 = vld [vmem:[#allocation5 + $0x154] sm:$0xf]
        %v3513 = vld [vmem:[#allocation5 + $0x158] sm:$0xf]
        %v3514 = vld [vmem:[#allocation5 + $0x15c] sm:$0xf]
        %v3515 = vld [vmem:[#allocation5 + $0x160] sm:$0xf]
        %v3516 = vld [vmem:[#allocation5 + $0x164] sm:$0xf]
        %v3517 = vld [vmem:[#allocation5 + $0x168] sm:$0xf]
        %v3518 = vld [vmem:[#allocation5 + $0x16c] sm:$0xf]
        %v3519 = vld [vmem:[#allocation5 + $0x170] sm:$0xf]
        %v3520 = vld [vmem:[#allocation5 + $0x174] sm:$0xf]
        %v3521 = vld [vmem:[#allocation5 + $0x178] sm:$0xf]
        %v3522 = vld [vmem:[#allocation5 + $0x17c] sm:$0xf]
        %v3523 = vld [vmem:[#allocation5 + $0x180] sm:$0xf]
        %v3524 = vld [vmem:[#allocation5 + $0x184] sm:$0xf]
        %v3525 = vld [vmem:[#allocation5 + $0x188] sm:$0xf]
        %v3526 = vld [vmem:[#allocation5 + $0x18c] sm:$0xf]
        %v3527 = vld [vmem:[#allocation5 + $0x190] sm:$0xf]
        %v3528 = vld [vmem:[#allocation5 + $0x194] sm:$0xf]
        %v3529 = vld [vmem:[#allocation5 + $0x198] sm:$0xf]
        %v3530 = vld [vmem:[#allocation5 + $0x19c] sm:$0xf]
        %v3531 = vld [vmem:[#allocation5 + $0x1a0] sm:$0xf]
        %v3532 = vld [vmem:[#allocation5 + $0x1a4] sm:$0xf]
        %v3533 = vld [vmem:[#allocation5 + $0x1a8] sm:$0xf]
        %v3534 = vld [vmem:[#allocation5 + $0x1ac] sm:$0xf]
        %v3535 = vld [vmem:[#allocation5 + $0x1b0] sm:$0xf]
        %v3536 = vld [vmem:[#allocation5 + $0x1b4] sm:$0xf]
        %v3537 = vld [vmem:[#allocation5 + $0x1b8] sm:$0xf]
        %v3538 = vld [vmem:[#allocation5 + $0x1bc] sm:$0xf]
        %v3539 = vld [vmem:[#allocation5 + $0x1c0] sm:$0xf]
        %v3540 = vld [vmem:[#allocation5 + $0x1c4] sm:$0xf]
        %v3541 = vld [vmem:[#allocation5 + $0x1c8] sm:$0xf]
        %v3542 = vld [vmem:[#allocation5 + $0x1cc] sm:$0xf]
        %v3543 = vld [vmem:[#allocation5 + $0x1d0] sm:$0xf]
        %v3544 = vld [vmem:[#allocation5 + $0x1d4] sm:$0xf]
        %v3545 = vld [vmem:[#allocation5 + $0x1d8] sm:$0xf]
        %v3546 = vld [vmem:[#allocation5 + $0x1dc] sm:$0xf]
        %v3547 = vld [vmem:[#allocation5 + $0x1e0] sm:$0xf]
        %v3548 = vld [vmem:[#allocation5 + $0x1e4] sm:$0xf]
        %v3549 = vld [vmem:[#allocation5 + $0x1e8] sm:$0xf]
        %v3550 = vld [vmem:[#allocation5 + $0x1ec] sm:$0xf]
        %v3551 = vld [vmem:[#allocation5 + $0x1f0] sm:$0xf]
        %v3552 = vld [vmem:[#allocation5 + $0x1f4] sm:$0xf]
        %v3553 = vld [vmem:[#allocation5 + $0x1f8] sm:$0xf]
        %v3554 = vld [vmem:[#allocation5 + $0x1fc] sm:$0xf]
        %v3563 = vunpack.c.l.b16 %v3419
        %v3564 = vunpack.c.h.b16 %v3419
        %v3565 = vunpack.c.l.b16 %v3420
        %v3566 = vunpack.c.h.b16 %v3420
        %v3567 = vunpack.c.l.b16 %v3421
        %v3568 = vunpack.c.h.b16 %v3421
        %v3569 = vunpack.c.l.b16 %v3422
        %v3570 = vunpack.c.h.b16 %v3422
        %v3571 = vunpack.c.l.b16 %v3423
        %v3572 = vunpack.c.h.b16 %v3423
        %v3573 = vunpack.c.l.b16 %v3424
        %v3574 = vunpack.c.h.b16 %v3424
        %v3575 = vunpack.c.l.b16 %v3425
        %v3576 = vunpack.c.h.b16 %v3425
        %v3577 = vunpack.c.l.b16 %v3426
        %v3578 = vunpack.c.h.b16 %v3426
        %v3579 = vpack.c.b16 %v3571, %v3563
        %v3580 = vpack.c.b16 %v3572, %v3564
        %v3581 = vpack.c.b16 %v3573, %v3565
        %v3582 = vpack.c.b16 %v3574, %v3566
        %v3583 = vpack.c.b16 %v3575, %v3567
        %v3584 = vpack.c.b16 %v3576, %v3568
        %v3585 = vpack.c.b16 %v3577, %v3569
        %v3586 = vpack.c.b16 %v3578, %v3570
        %v3723 = vunpack.c.l.b16 %v3427
        %v3724 = vunpack.c.l.b16 %v3428
        %v3725 = vunpack.c.l.b16 %v3429
        %v3726 = vunpack.c.l.b16 %v3430
        %v3727 = vunpack.c.l.b16 %v3431
        %v3728 = vunpack.c.l.b16 %v3432
        %v3729 = vunpack.c.l.b16 %v3433
        %v3730 = vunpack.c.l.b16 %v3434
        %v3731 = vunpack.c.l.b16 %v3435
        %v3732 = vunpack.c.l.b16 %v3436
        %v3733 = vunpack.c.l.b16 %v3437
        %v3734 = vunpack.c.l.b16 %v3438
        %v3735 = vunpack.c.l.b16 %v3439
        %v3736 = vunpack.c.l.b16 %v3440
        %v3737 = vunpack.c.l.b16 %v3441
        %v3738 = vunpack.c.l.b16 %v3442
        %v3739 = vunpack.c.l.b16 %v3443
        %v3740 = vunpack.c.l.b16 %v3444
        %v3741 = vunpack.c.l.b16 %v3445
        %v3742 = vunpack.c.l.b16 %v3446
        %v3743 = vunpack.c.l.b16 %v3447
        %v3744 = vunpack.c.l.b16 %v3448
        %v3745 = vunpack.c.l.b16 %v3449
        %v3746 = vunpack.c.l.b16 %v3450
        %v3747 = vunpack.c.l.b16 %v3451
        %v3748 = vunpack.c.l.b16 %v3452
        %v3749 = vunpack.c.l.b16 %v3453
        %v3750 = vunpack.c.l.b16 %v3454
        %v3751 = vunpack.c.l.b16 %v3455
        %v3752 = vunpack.c.l.b16 %v3456
        %v3753 = vunpack.c.l.b16 %v3457
        %v3754 = vunpack.c.l.b16 %v3458
        %v3755 = vunpack.c.l.b16 %v3459
        %v3756 = vunpack.c.l.b16 %v3460
        %v3757 = vunpack.c.l.b16 %v3461
        %v3758 = vunpack.c.l.b16 %v3462
        %v3759 = vunpack.c.l.b16 %v3463
        %v3760 = vunpack.c.l.b16 %v3464
        %v3761 = vunpack.c.l.b16 %v3465
        %v3762 = vunpack.c.l.b16 %v3466
        %v3763 = vunpack.c.l.b16 %v3467
        %v3764 = vunpack.c.l.b16 %v3468
        %v3765 = vunpack.c.l.b16 %v3469
        %v3766 = vunpack.c.l.b16 %v3470
        %v3767 = vunpack.c.l.b16 %v3471
        %v3768 = vunpack.c.l.b16 %v3472
        %v3769 = vunpack.c.l.b16 %v3473
        %v3770 = vunpack.c.l.b16 %v3474
        %v3771 = vunpack.c.l.b16 %v3475
        %v3772 = vunpack.c.l.b16 %v3476
        %v3773 = vunpack.c.l.b16 %v3477
        %v3774 = vunpack.c.l.b16 %v3478
        %v3775 = vunpack.c.l.b16 %v3479
        %v3776 = vunpack.c.l.b16 %v3480
        %v3777 = vunpack.c.l.b16 %v3481
        %v3778 = vunpack.c.l.b16 %v3482
        %v3779 = vunpack.c.l.b16 %v3483
        %v3780 = vunpack.c.l.b16 %v3484
        %v3781 = vunpack.c.l.b16 %v3485
        %v3782 = vunpack.c.l.b16 %v3486
        %v3783 = vunpack.c.l.b16 %v3487
        %v3784 = vunpack.c.l.b16 %v3488
        %v3785 = vunpack.c.l.b16 %v3489
        %v3786 = vunpack.c.l.b16 %v3490
        %v3787 = vunpack.c.l.b16 %v3491
        %v3788 = vunpack.c.l.b16 %v3492
        %v3789 = vunpack.c.l.b16 %v3493
        %v3790 = vunpack.c.l.b16 %v3494
        %v3791 = vunpack.c.l.b16 %v3495
        %v3792 = vunpack.c.l.b16 %v3496
        %v3793 = vunpack.c.l.b16 %v3497
        %v3794 = vunpack.c.l.b16 %v3498
        %v3795 = vunpack.c.l.b16 %v3499
        %v3796 = vunpack.c.l.b16 %v3500
        %v3797 = vunpack.c.l.b16 %v3501
        %v3798 = vunpack.c.l.b16 %v3502
        %v3799 = vunpack.c.l.b16 %v3503
        %v3800 = vunpack.c.l.b16 %v3504
        %v3801 = vunpack.c.l.b16 %v3505
        %v3802 = vunpack.c.l.b16 %v3506
        %v3803 = vunpack.c.l.b16 %v3507
        %v3804 = vunpack.c.l.b16 %v3508
        %v3805 = vunpack.c.l.b16 %v3509
        %v3806 = vunpack.c.l.b16 %v3510
        %v3807 = vunpack.c.l.b16 %v3511
        %v3808 = vunpack.c.l.b16 %v3512
        %v3809 = vunpack.c.l.b16 %v3513
        %v3810 = vunpack.c.l.b16 %v3514
        %v3811 = vunpack.c.l.b16 %v3515
        %v3812 = vunpack.c.l.b16 %v3516
        %v3813 = vunpack.c.l.b16 %v3517
        %v3814 = vunpack.c.l.b16 %v3518
        %v3815 = vunpack.c.l.b16 %v3519
        %v3816 = vunpack.c.l.b16 %v3520
        %v3817 = vunpack.c.l.b16 %v3521
        %v3818 = vunpack.c.l.b16 %v3522
        %v3819 = vunpack.c.l.b16 %v3523
        %v3820 = vunpack.c.l.b16 %v3524
        %v3821 = vunpack.c.l.b16 %v3525
        %v3822 = vunpack.c.l.b16 %v3526
        %v3823 = vunpack.c.l.b16 %v3527
        %v3824 = vunpack.c.l.b16 %v3528
        %v3825 = vunpack.c.l.b16 %v3529
        %v3826 = vunpack.c.l.b16 %v3530
        %v3827 = vunpack.c.l.b16 %v3531
        %v3828 = vunpack.c.l.b16 %v3532
        %v3829 = vunpack.c.l.b16 %v3533
        %v3830 = vunpack.c.l.b16 %v3534
        %v3831 = vunpack.c.l.b16 %v3535
        %v3832 = vunpack.c.l.b16 %v3536
        %v3833 = vunpack.c.l.b16 %v3537
        %v3834 = vunpack.c.l.b16 %v3538
        %v3835 = vunpack.c.l.b16 %v3539
        %v3836 = vunpack.c.l.b16 %v3540
        %v3837 = vunpack.c.l.b16 %v3541
        %v3838 = vunpack.c.l.b16 %v3542
        %v3839 = vunpack.c.l.b16 %v3543
        %v3840 = vunpack.c.l.b16 %v3544
        %v3841 = vunpack.c.l.b16 %v3545
        %v3842 = vunpack.c.l.b16 %v3546
        %v3843 = vunpack.c.l.b16 %v3547
        %v3844 = vunpack.c.l.b16 %v3548
        %v3845 = vunpack.c.l.b16 %v3549
        %v3846 = vunpack.c.l.b16 %v3550
        %v3847 = vunpack.c.l.b16 %v3551
        %v3848 = vunpack.c.l.b16 %v3552
        %v3849 = vunpack.c.l.b16 %v3553
        %v3850 = vunpack.c.l.b16 %v3554
        %v3851 = vpack.c.b16 %v3724, %v3723
        %v3852 = vpack.c.b16 %v3726, %v3725
        %v3853 = vpack.c.b16 %v3728, %v3727
        %v3854 = vpack.c.b16 %v3730, %v3729
        %v3855 = vpack.c.b16 %v3732, %v3731
        %v3856 = vpack.c.b16 %v3734, %v3733
        %v3857 = vpack.c.b16 %v3736, %v3735
        %v3858 = vpack.c.b16 %v3738, %v3737
        %v3859 = vpack.c.b16 %v3740, %v3739
        %v3860 = vpack.c.b16 %v3742, %v3741
        %v3861 = vpack.c.b16 %v3744, %v3743
        %v3862 = vpack.c.b16 %v3746, %v3745
        %v3863 = vpack.c.b16 %v3748, %v3747
        %v3864 = vpack.c.b16 %v3750, %v3749
        %v3865 = vpack.c.b16 %v3752, %v3751
        %v3866 = vpack.c.b16 %v3754, %v3753
        %v3867 = vpack.c.b16 %v3756, %v3755
        %v3868 = vpack.c.b16 %v3758, %v3757
        %v3869 = vpack.c.b16 %v3760, %v3759
        %v3870 = vpack.c.b16 %v3762, %v3761
        %v3871 = vpack.c.b16 %v3764, %v3763
        %v3872 = vpack.c.b16 %v3766, %v3765
        %v3873 = vpack.c.b16 %v3768, %v3767
        %v3874 = vpack.c.b16 %v3770, %v3769
        %v3875 = vpack.c.b16 %v3772, %v3771
        %v3876 = vpack.c.b16 %v3774, %v3773
        %v3877 = vpack.c.b16 %v3776, %v3775
        %v3878 = vpack.c.b16 %v3778, %v3777
        %v3879 = vpack.c.b16 %v3780, %v3779
        %v3880 = vpack.c.b16 %v3782, %v3781
        %v3881 = vpack.c.b16 %v3784, %v3783
        %v3882 = vpack.c.b16 %v3786, %v3785
        %v3883 = vpack.c.b16 %v3788, %v3787
        %v3884 = vpack.c.b16 %v3790, %v3789
        %v3885 = vpack.c.b16 %v3792, %v3791
        %v3886 = vpack.c.b16 %v3794, %v3793
        %v3887 = vpack.c.b16 %v3796, %v3795
        %v3888 = vpack.c.b16 %v3798, %v3797
        %v3889 = vpack.c.b16 %v3800, %v3799
        %v3890 = vpack.c.b16 %v3802, %v3801
        %v3891 = vpack.c.b16 %v3804, %v3803
        %v3892 = vpack.c.b16 %v3806, %v3805
        %v3893 = vpack.c.b16 %v3808, %v3807
        %v3894 = vpack.c.b16 %v3810, %v3809
        %v3895 = vpack.c.b16 %v3812, %v3811
        %v3896 = vpack.c.b16 %v3814, %v3813
        %v3897 = vpack.c.b16 %v3816, %v3815
        %v3898 = vpack.c.b16 %v3818, %v3817
        %v3899 = vpack.c.b16 %v3820, %v3819
        %v3900 = vpack.c.b16 %v3822, %v3821
        %v3901 = vpack.c.b16 %v3824, %v3823
        %v3902 = vpack.c.b16 %v3826, %v3825
        %v3903 = vpack.c.b16 %v3828, %v3827
        %v3904 = vpack.c.b16 %v3830, %v3829
        %v3905 = vpack.c.b16 %v3832, %v3831
        %v3906 = vpack.c.b16 %v3834, %v3833
        %v3907 = vpack.c.b16 %v3836, %v3835
        %v3908 = vpack.c.b16 %v3838, %v3837
        %v3909 = vpack.c.b16 %v3840, %v3839
        %v3910 = vpack.c.b16 %v3842, %v3841
        %v3911 = vpack.c.b16 %v3844, %v3843
        %v3912 = vpack.c.b16 %v3846, %v3845
        %v3913 = vpack.c.b16 %v3848, %v3847
        %v3914 = vpack.c.b16 %v3850, %v3849
        %3979 = vmatpush.bf16.msra.mxu0 %v3858
        %3980 = vmatpush.bf16.msra.mxu0 %v3857
        %3981 = vmatpush.bf16.msra.mxu0 %v3856
        %3982 = vmatpush.bf16.msra.mxu0 %v3855
        %3983 = vmatpush.bf16.msra.mxu0 %v3854
        %3984 = vmatpush.bf16.msra.mxu0 %v3853
        %3985 = vmatpush.bf16.msra.mxu0 %v3852
        %3986 = vmatpush.bf16.msra.mxu0 %v3851
        %3987 = vmatmul.bf16.gmra.mxu0 %v3579
        %v3988 = vpop.f32.mrf.mxu0
        %v3989 = vadd.f32 %v320, %v3988
        %v3990 = vpop.f32.mrf.mxu0
        %v3991 = vadd.f32 %v320, %v3990
        %3992 = vdwg.mxu0
        %3993 = vmatpush.bf16.msra.mxu0 %v3866
        %3994 = vmatpush.bf16.msra.mxu0 %v3865
        %3995 = vmatpush.bf16.msra.mxu0 %v3864
        %3996 = vmatpush.bf16.msra.mxu0 %v3863
        %3997 = vmatpush.bf16.msra.mxu0 %v3862
        %3998 = vmatpush.bf16.msra.mxu0 %v3861
        %3999 = vmatpush.bf16.msra.mxu0 %v3860
        %4000 = vmatpush.bf16.msra.mxu0 %v3859
        %4001 = vmatmul.bf16.gmra.mxu0 %v3580
        %v4002 = vpop.f32.mrf.mxu0
        %v4003 = vadd.f32 %v3989, %v4002
        %v4004 = vpop.f32.mrf.mxu0
        %v4005 = vadd.f32 %v3991, %v4004
        %4006 = vdwg.mxu0
        %4007 = vmatpush.bf16.msra.mxu0 %v3874
        %4008 = vmatpush.bf16.msra.mxu0 %v3873
        %4009 = vmatpush.bf16.msra.mxu0 %v3872
        %4010 = vmatpush.bf16.msra.mxu0 %v3871
        %4011 = vmatpush.bf16.msra.mxu0 %v3870
        %4012 = vmatpush.bf16.msra.mxu0 %v3869
        %4013 = vmatpush.bf16.msra.mxu0 %v3868
        %4014 = vmatpush.bf16.msra.mxu0 %v3867
        %4015 = vmatmul.bf16.gmra.mxu0 %v3581
        %v4016 = vpop.f32.mrf.mxu0
        %v4017 = vadd.f32 %v4003, %v4016
        %v4018 = vpop.f32.mrf.mxu0
        %v4019 = vadd.f32 %v4005, %v4018
        %4020 = vdwg.mxu0
        %4021 = vmatpush.bf16.msra.mxu0 %v3882
        %4022 = vmatpush.bf16.msra.mxu0 %v3881
        %4023 = vmatpush.bf16.msra.mxu0 %v3880
        %4024 = vmatpush.bf16.msra.mxu0 %v3879
        %4025 = vmatpush.bf16.msra.mxu0 %v3878
        %4026 = vmatpush.bf16.msra.mxu0 %v3877
        %4027 = vmatpush.bf16.msra.mxu0 %v3876
        %4028 = vmatpush.bf16.msra.mxu0 %v3875
        %4029 = vmatmul.bf16.gmra.mxu0 %v3582
        %v4030 = vpop.f32.mrf.mxu0
        %v4031 = vadd.f32 %v4017, %v4030
        %v4032 = vpop.f32.mrf.mxu0
        %v4033 = vadd.f32 %v4019, %v4032
        %4034 = vdwg.mxu0
        %4035 = vmatpush.bf16.msra.mxu0 %v3890
        %4036 = vmatpush.bf16.msra.mxu0 %v3889
        %4037 = vmatpush.bf16.msra.mxu0 %v3888
        %4038 = vmatpush.bf16.msra.mxu0 %v3887
        %4039 = vmatpush.bf16.msra.mxu0 %v3886
        %4040 = vmatpush.bf16.msra.mxu0 %v3885
        %4041 = vmatpush.bf16.msra.mxu0 %v3884
        %4042 = vmatpush.bf16.msra.mxu0 %v3883
        %4043 = vmatmul.bf16.gmra.mxu0 %v3583
        %v4044 = vpop.f32.mrf.mxu0
        %v4045 = vadd.f32 %v4031, %v4044
        %v4046 = vpop.f32.mrf.mxu0
        %v4047 = vadd.f32 %v4033, %v4046
        %4048 = vdwg.mxu0
        %4049 = vmatpush.bf16.msra.mxu0 %v3898
        %4050 = vmatpush.bf16.msra.mxu0 %v3897
        %4051 = vmatpush.bf16.msra.mxu0 %v3896
        %4052 = vmatpush.bf16.msra.mxu0 %v3895
        %4053 = vmatpush.bf16.msra.mxu0 %v3894
        %4054 = vmatpush.bf16.msra.mxu0 %v3893
        %4055 = vmatpush.bf16.msra.mxu0 %v3892
        %4056 = vmatpush.bf16.msra.mxu0 %v3891
        %4057 = vmatmul.bf16.gmra.mxu0 %v3584
        %v4058 = vpop.f32.mrf.mxu0
        %v4059 = vadd.f32 %v4045, %v4058
        %v4060 = vpop.f32.mrf.mxu0
        %v4061 = vadd.f32 %v4047, %v4060
        %4062 = vdwg.mxu0
        %4063 = vmatpush.bf16.msra.mxu0 %v3906
        %4064 = vmatpush.bf16.msra.mxu0 %v3905
        %4065 = vmatpush.bf16.msra.mxu0 %v3904
        %4066 = vmatpush.bf16.msra.mxu0 %v3903
        %4067 = vmatpush.bf16.msra.mxu0 %v3902
        %4068 = vmatpush.bf16.msra.mxu0 %v3901
        %4069 = vmatpush.bf16.msra.mxu0 %v3900
        %4070 = vmatpush.bf16.msra.mxu0 %v3899
        %4071 = vmatmul.bf16.gmra.mxu0 %v3585
        %v4072 = vpop.f32.mrf.mxu0
        %v4073 = vadd.f32 %v4059, %v4072
        %v4074 = vpop.f32.mrf.mxu0
        %v4075 = vadd.f32 %v4061, %v4074
        %4076 = vdwg.mxu0
        %4077 = vmatpush.bf16.msra.mxu0 %v3914
        %4078 = vmatpush.bf16.msra.mxu0 %v3913
        %4079 = vmatpush.bf16.msra.mxu0 %v3912
        %4080 = vmatpush.bf16.msra.mxu0 %v3911
        %4081 = vmatpush.bf16.msra.mxu0 %v3910
        %4082 = vmatpush.bf16.msra.mxu0 %v3909
        %4083 = vmatpush.bf16.msra.mxu0 %v3908
        %4084 = vmatpush.bf16.msra.mxu0 %v3907
        %4085 = vmatmul.bf16.gmra.mxu0 %v3586
        %v4086 = vpop.f32.mrf.mxu0
        %v4087 = vadd.f32 %v4073, %v4086
        %v4088 = vpop.f32.mrf.mxu0
        %v4089 = vadd.f32 %v4075, %v4088
        %4090 = vdwg.mxu0
        %4091 = vst [vmem:[%s315] sm:$0xff] %v4087
        %4092 = vst [vmem:[%s315 + $0x8] sm:$0xff] %v4089
        %s4093 = smul.u32 2, %s19
        %p4094 = scmp.lt.s32.totalorder %s4093, 3
        %s4095 = scalar_select %p4094, %s4093, 3
        %s4096 = smul.addr %s4095, 8
        %s4097 = scalar_lea.vmem %s6, %s4096
        // Predicated region
        $region53: #{_lambda_.1} parent=43 // pred_check
          %p4098 = pneg %p173
        $region54: #{_lambda_.1} parent=43 // pred_check_branch
          %4100 = sbr.rel (%p4098) target = $region56
        $region55: #{_lambda_.1} parent=43 // pred_region
          %s4101 = smul.u32 2, %s19
        $region56: #{_lambda_.1} parent=43 // pred_fallthru
          _
      $region44: #{_lambda_.1} parent=5 // pred_fallthru
        _
      %p4102 = scmp.le.s32.totalorder 2, %s14
      // Predicated region
      $region57: #{_lambda_.1} parent=5 // pred_check
        %p4103 = pneg %p4102
      $region58: #{_lambda_.1} parent=5 // pred_check_branch
        %4105 = sbr.rel (%p4103) target = $region60
      $region59: #{_lambda_.1} parent=5 // pred_region
        %s4106 = ssub.s32 %s14, 2
        // Predicated region
        $region61: #{_lambda_.1} parent=59 // pred_check
          %p4107 = pneg %p179
        $region62: #{_lambda_.1} parent=59 // pred_check_branch
          %4109 = sbr.rel (%p4107) target = $region64
        $region63: #{_lambda_.1} parent=59 // pred_region
          %s4110 = smul.u32 2, %s20
          %p4111 = scmp.lt.s32.totalorder %s4110, 3
          %s4112 = scalar_select %p4111, %s4110, 3
          %s4113 = smul.addr %s4112, 8
          %s4114 = scalar_lea.vmem %s6, %s4113
        $region64: #{_lambda_.1} parent=59 // pred_fallthru
          _
      $region60: #{_lambda_.1} parent=5 // pred_fallthru
        _
    $region6: #{_lambda_.1} parent=1 // loop_footer
      %s18 = sadd.s32 1, %s14
    $region7: #{_lambda_.1} parent=1 // loop_footer_branch
      %13 = sbr.rel target = $region3
    $region8: #{_lambda_.1} parent=1 // loop_exit
      _
    %4115 = vsyncpa [#allocation4], 1
    %s4116 = scalar_lea.sflag [#allocation4], 1
    %4117 = vsyncpa %s4116, 1
    %4118 = vsyncpa [#allocation6], 1

</llo_original>
